<compile_context>
chip_gen: v7x
topology: tpu7x:2x2x1
jax: 0.10.0
libtpu: 0.0.40
codegen_flags: <defaults>
</compile_context>

<pallas_src>
import functools

import jax
import jax.numpy as jnp
from jax.experimental import pallas as pl
from jax.experimental.pallas import tpu as pltpu

# ----------------------------- model hyper-parameters ------------------------------
IN_CH = 4          # in_channels
M_CLS = 3          # M (number of classes)
L_SEQ = 13         # L (sequence length); (L-1) % mp == 0 (clean pool/unpool)
K_SZ = 12          # conv kernel size K
P_PAD = 5          # conv padding P
MP = 3             # maxpool kernel/stride mp
HID = 2            # hidden_lsz
CH = 10            # channels
LSTM_SZ = 10       # lstm_sz
CLF_SZ = 50        # clf_sz
B = 2              # batch

L_OUT = L_SEQ + 2 * P_PAD - K_SZ + 1                  # conv1 output length = 12
LP = (L_SEQ + 1 - (K_SZ - 2 * P_PAD)) // MP           # pooled length = 4
CONV_SZ = CH * LP                                     # flattened encoder feature size = 40
R = HID + M_CLS                                       # semi-supervised latent size = 5
GBLK = 128                                            # lane-aligned per-step stride for LSTM
                                                      # input-projection blocks (>= 8*LSTM_SZ)


# =================================== fused kernel ===================================
def _ssvae_fused_kernel(
        cols_ref, w_conv_ref, b_conv_ref,
        w_ec_ref, b_ec_ref, w_cf_ref, b_cf_ref,
        eps_ref, tile_ref,
        w3z_ref, w3y_ref, b3_ref, w3b_ref, b3b_ref,
        w_dec_ref, b_dec_ref,
        w_step_ref, b_step_ref, w_hh_ref, w4_step_ref, b4_ref,
        recon_ref, mu_ref, logvar_ref, ypred_ref,
        *, batch, n_samples):
    f32 = jnp.float32
    H = LSTM_SZ

    def lrelu(v):
        return jnp.where(v >= 0.0, v, 0.01 * v)

    # ---- encoder + classifier: Conv1d -> leaky_relu -> MaxPool1d, whole batch, one dot
    # cols rows are ordered m*(Lp*B) + p*B + b (pool position p, tap m, batch b), so the
    # mp-way max is three contiguous row blocks.  Encoder conv1 and clf_conv1 share the
    # same im2col input, so their weights are concatenated along the output channels.
    y = jnp.dot(cols_ref[...], w_conv_ref[...], preferred_element_type=f32) + b_conv_ref[...]
    y = lrelu(y)                                                         # (mp*Lp*B, 2*CH)
    nb = LP * batch
    pooled = jnp.maximum(jnp.maximum(y[0:nb], y[nb:2 * nb]), y[2 * nb:3 * nb])  # (Lp*B, 2CH)

    # fc21 | fc22 | clf_linear fused into one accumulated matmul; torch's channel-major
    # flatten permutation is folded into w_ec in the wrapper.
    acc = b_ec_ref[...]                                                  # (1, 2*HID+CLF_SZ)
    for p in range(LP):
        acc = acc + jnp.dot(pooled[p * batch:(p + 1) * batch, :], w_ec_ref[p],
                            preferred_element_type=f32)
    mu = acc[:, 0:HID]
    logvar = acc[:, HID:2 * HID]
    h2 = lrelu(acc[:, 2 * HID:])                                         # (B, clf_sz)

    logits = jnp.dot(h2, w_cf_ref[...], preferred_element_type=f32) + b_cf_ref[...]
    mx = jnp.max(logits, axis=-1, keepdims=True)
    lse = jnp.log(jnp.sum(jnp.exp(logits - mx), axis=-1, keepdims=True))
    y_pred = (logits - mx) - lse                                         # log_softmax

    mu_ref[...] = mu
    logvar_ref[...] = logvar
    ypred_ref[...] = y_pred

    # ---- reparameterize: std = exp(0.5*logvar) + 0.1 ; samples batched into rows -----
    std = jnp.exp(0.5 * logvar) + 0.1
    if n_samples > 1:
        tile = tile_ref[...]                                             # (S*B, B) 0/1 matrix
        mu_t = jnp.dot(tile, mu, preferred_element_type=f32)
        std_t = jnp.dot(tile, std, preferred_element_type=f32)
        y_t = jnp.dot(tile, y_pred, preferred_element_type=f32)
    else:
        mu_t, std_t, y_t = mu, std, y_pred
    z = eps_ref[...] * std_t + mu_t                                      # (S*B, HID)

    # ---- decoder: fc3 -> fc3b -> (MaxUnpool1d + ConvTranspose1d as one matmul) --------
    # fc3 is split into z / y halves so no in-kernel concatenate is needed.
    zyb = lrelu(jnp.dot(z, w3z_ref[...], preferred_element_type=f32)
                + jnp.dot(y_t, w3y_ref[...], preferred_element_type=f32) + b3_ref[...])
    hmid = lrelu(jnp.dot(zyb, w3b_ref[...], preferred_element_type=f32) + b3b_ref[...])
    dec = lrelu(jnp.dot(hmid, w_dec_ref[...], preferred_element_type=f32) + b_dec_ref[...])
    # dec[n, t*IN_CH + o] == leaky_relu(deconv4(unpool(fc3b(...).view(B,CH,Lp))))[n, o, t]

    # ---- bidirectional LSTM ------------------------------------------------------------
    # Input projections for every step and both directions in ONE matmul; w_step is a
    # block matrix whose step-s block (128 lanes, vreg aligned) holds the forward weights
    # for time s and the backward weights for time L-1-s, already in the interleaved gate
    # layout [i_f i_b | f_f f_b | g_f g_b | o_f o_b].
    sb = n_samples * batch
    gih = jnp.dot(dec, w_step_ref[...], preferred_element_type=f32) + b_step_ref[...]  # (S*B, L*GBLK)
    w_hh = w_hh_ref[...]                                                 # (2H, 8H) block-diag (fwd|bwd)

    h = jnp.zeros((sb, 2 * H), f32)                                      # [h_fwd | h_bwd]
    c = jnp.zeros((sb, 2 * H), f32)
    recon = jnp.zeros((sb, L_SEQ * IN_CH), f32)

    for s in range(L_SEQ):
        # one fused recurrence matmul for both directions
        g = gih[:, GBLK * s:GBLK * s + 8 * H] + jnp.dot(h, w_hh, preferred_element_type=f32)
        i = jax.nn.sigmoid(g[:, 0:2 * H])
        f = jax.nn.sigmoid(g[:, 2 * H:4 * H])
        gg = jnp.tanh(g[:, 4 * H:6 * H])
        o = jax.nn.sigmoid(g[:, 6 * H:8 * H])
        c = f * c + i * gg
        h = o * jnp.tanh(c)
        # fc4 folded per step: w4_step[s] routes the forward half to time-s output columns
        # and the backward half to time-(L-1-s) output columns of the flat reconstruction.
        recon = recon + jnp.dot(lrelu(h), w4_step_ref[s], preferred_element_type=f32)

    recon = recon + b4_ref[...]                                          # (S*B, L*IN_CH)

    # ---- average over variational samples, single lane-contiguous store ---------------
    if n_samples > 1:
        r = recon[0:batch]
        for si in range(1, n_samples):
            r = r + recon[si * batch:(si + 1) * batch]
        recon = r * (1.0 / n_samples)
    recon_ref[...] = recon                                               # (B, L*IN_CH)


# =============================== wrapper-side packing ================================
def _im2col_rows(x_ncl):
    """(B, C, L) -> (mp*Lp*B, C*K) rows ordered m*(Lp*B) + p*B + b ; column = c*K + k."""
    bsz, c, _ = x_ncl.shape
    xp = jnp.pad(x_ncl, ((0, 0), (0, 0), (P_PAD, P_PAD)))
    idx = jnp.arange(L_OUT)[:, None] + jnp.arange(K_SZ)[None, :]
    cols = xp[:, :, idx]                                                 # (B, C, L_out, K)
    cols = cols.transpose(0, 2, 1, 3).reshape(bsz, L_OUT, c * K_SZ)      # col = c*K + k
    cols = cols[:, :LP * MP, :].reshape(bsz, LP, MP, c * K_SZ)           # t = p*mp + m
    return cols.transpose(2, 1, 0, 3).reshape(MP * LP * bsz, c * K_SZ)


def _interleave_gates(wf, wb):
    """(rows, 4H) torch gate order [i|f|g|o] for fwd/bwd -> (rows, 8H) per-gate [fwd|bwd]."""
    rows = wf.shape[0]
    f4 = wf.reshape(rows, 4, 1, LSTM_SZ)
    b4 = wb.reshape(rows, 4, 1, LSTM_SZ)
    return jnp.concatenate([f4, b4], axis=2).reshape(rows, 8 * LSTM_SZ)


def _pack_weights(p):
    f32 = jnp.float32
    H = LSTM_SZ

    # fused conv weights (encoder conv1 + classifier clf_conv1 share the im2col input)
    w_conv = jnp.concatenate([p["conv1_w"].reshape(CH, IN_CH * K_SZ).T,
                              p["clf_conv1_w"].reshape(CH, IN_CH * K_SZ).T], axis=1)  # (48, 20)
    b_conv = jnp.concatenate([p["conv1_b"], p["clf_conv1_b"]]).reshape(1, 2 * CH)

    # fc21 | fc22 | clf_linear fused; fold torch's (B, C, Lp).view(B,-1) channel-major
    # flatten into the weight: row index of w_ec block p is the pooled channel.
    w21 = p["fc21_w"].reshape(HID, CH, LP)
    w22 = p["fc22_w"].reshape(HID, CH, LP)
    wcl = p["clf_linear_w"].reshape(CLF_SZ, CH, LP)
    enc_blk = jnp.transpose(jnp.concatenate([w21, w22], axis=0), (2, 1, 0))   # (Lp, CH, 4)
    clf_blk = jnp.transpose(wcl, (2, 1, 0))                                   # (Lp, CH, 50)
    top = jnp.concatenate([enc_blk, jnp.zeros((LP, CH, CLF_SZ), f32)], axis=2)
    bot = jnp.concatenate([jnp.zeros((LP, CH, 2 * HID), f32), clf_blk], axis=2)
    w_ec = jnp.concatenate([top, bot], axis=1)                                # (Lp, 2CH, 54)
    b_ec = jnp.concatenate([p["fc21_b"], p["fc22_b"], p["clf_linear_b"]]).reshape(1, -1)

    w_cf = p["clf_final_w"].T                                                 # (50, 3)
    b_cf = p["clf_final_b"].reshape(1, M_CLS)

    # decoder fc3 split into z / y halves (avoids in-kernel concat), fc3b
    w3z = p["fc3_w"][:, :HID].T                                               # (2, 50)
    w3y = p["fc3_w"][:, HID:].T                                               # (3, 50)
    b3 = p["fc3_b"].reshape(1, -1)
    w3b = p["fc3b_w"].T                                                       # (50, 40)
    b3b = p["fc3b_b"].reshape(1, -1)

    # MaxUnpool1d with the reference's fixed indices (mp//2 + mp*i) fused with
    # ConvTranspose1d(stride=1, padding=P) into one (conv_sz, L*IN_CH) matrix:
    #   out[n, o, t] = b[o] + sum_{c,i} hmid[n, c*Lp+i] * Wd[c, o, k],  k = t + (P - mp//2) - mp*i
    wd = p["deconv4_w"]                                                       # (CH, IN_CH, K)
    t_idx = jnp.arange(L_SEQ)
    i_idx = jnp.arange(LP)
    kk = t_idx[None, :] + (P_PAD - MP // 2) - MP * i_idx[:, None]             # (Lp, L)
    valid = ((kk >= 0) & (kk < K_SZ)).astype(f32)
    wg = wd[:, :, jnp.clip(kk, 0, K_SZ - 1)] * valid[None, None, :, :]        # (CH, IN_CH, Lp, L)
    w_dec = jnp.transpose(wg, (0, 2, 3, 1)).reshape(CH * LP, L_SEQ * IN_CH)   # (40, 52)
    b_dec = jnp.tile(p["deconv4_b"], L_SEQ).reshape(1, L_SEQ * IN_CH)

    # ---- BiLSTM packing ---------------------------------------------------------------
    eyeL = jnp.eye(L_SEQ, dtype=f32)
    revL = eyeL[::-1]                                                         # symmetric

    # input projections for all steps / both directions as one block matrix (lane-aligned
    # 128-wide blocks); step-s block holds fwd weights of time s and bwd weights of time L-1-s.
    zero_ih = jnp.zeros((IN_CH, 4 * H), f32)
    w_ih_f_int = jnp.pad(_interleave_gates(p["lstm_w_ih_f"].T, zero_ih),
                         ((0, 0), (0, GBLK - 8 * H)))                          # (IN_CH, GBLK)
    w_ih_b_int = jnp.pad(_interleave_gates(zero_ih, p["lstm_w_ih_b"].T),
                         ((0, 0), (0, GBLK - 8 * H)))
    w_step = (eyeL[:, None, :, None] * w_ih_f_int[None, :, None, :]
              + revL[:, None, :, None] * w_ih_b_int[None, :, None, :]
              ).reshape(L_SEQ * IN_CH, L_SEQ * GBLK)                          # (52, 1664)

    bg_f = (p["lstm_b_ih_f"] + p["lstm_b_hh_f"]).reshape(1, 4 * H)
    bg_b = (p["lstm_b_ih_b"] + p["lstm_b_hh_b"]).reshape(1, 4 * H)
    bg_int = jnp.pad(_interleave_gates(bg_f, bg_b), ((0, 0), (0, GBLK - 8 * H)))
    b_step = jnp.tile(bg_int, (1, L_SEQ))                                     # (1, L*GBLK)

    # combined recurrent weights: rows [h_fwd | h_bwd] -> interleaved gate columns
    zero_hh = jnp.zeros((H, 4 * H), f32)
    w_hh = jnp.concatenate([_interleave_gates(p["lstm_w_hh_f"].T, zero_hh),
                            _interleave_gates(zero_hh, p["lstm_w_hh_b"].T)], axis=0)  # (2H, 8H)

    # fc4 folded per step: forward half -> time-s output columns, backward half -> time L-1-s
    w4f = p["fc4_w"][:, :H].T                                                 # (H, IN_CH)
    w4b = p["fc4_w"][:, H:].T                                                 # (H, IN_CH)
    w4_step = jnp.concatenate(
        [eyeL[:, None, :, None] * w4f[None, :, None, :],
         revL[:, None, :, None] * w4b[None, :, None, :]],
        axis=1).reshape(L_SEQ, 2 * H, L_SEQ * IN_CH)                          # (L, 2H, L*IN_CH)
    b4 = jnp.tile(p["fc4_b"].reshape(1, IN_CH), (1, L_SEQ))                   # (1, L*IN_CH)

    return (w_conv, b_conv, w_ec, b_ec, w_cf, b_cf, w3z, w3y, b3, w3b, b3b,
            w_dec, b_dec, w_step, b_step, w_hh, w4_step, b4)


# ================================ SSVAE forward (wrapper) ===========================
def ssvae_forward(params, x, key, variational_sample=1):
    """x: (B, L, C_in) — same layout the PyTorch forward expects (it transposes to NCW)."""
    bsz = x.shape[0]
    x_ncl = jnp.transpose(x, (0, 2, 1))                                   # (B, C_in, L)
    cols = _im2col_rows(x_ncl)                                            # (mp*Lp*B, C_in*K)

    (w_conv, b_conv, w_ec, b_ec, w_cf, b_cf, w3z, w3y, b3, w3b, b3b,
     w_dec, b_dec, w_step, b_step, w_hh, w4_step, b4) = _pack_weights(params)

    # torch.randn_like equivalent (glue); one eps row per (sample, batch) pair.
    eps = jax.random.normal(key, (variational_sample * bsz, HID), dtype=jnp.float32)
    # 0/1 matrix that replicates (mu, std, y_pred) rows across variational samples.
    tile = jnp.tile(jnp.eye(bsz, dtype=jnp.float32), (variational_sample, 1))

    vmem = pl.BlockSpec(memory_space=pltpu.MemorySpace.VMEM)
    out_shape = (jax.ShapeDtypeStruct((bsz, L_SEQ * IN_CH), jnp.float32),  # recon (flat, lane-dense)
                 jax.ShapeDtypeStruct((bsz, HID), jnp.float32),            # mu
                 jax.ShapeDtypeStruct((bsz, HID), jnp.float32),            # logvar
                 jax.ShapeDtypeStruct((bsz, M_CLS), jnp.float32))          # y_pred (log-softmax)

    recon_flat, mu, logvar, y_pred = pl.pallas_call(
        functools.partial(_ssvae_fused_kernel, batch=bsz, n_samples=variational_sample),
        out_shape=out_shape,
        in_specs=[vmem] * 21,
        out_specs=(vmem, vmem, vmem, vmem),
    )(cols, w_conv, b_conv, w_ec, b_ec, w_cf, b_cf, eps, tile,
      w3z, w3y, b3, w3b, b3b, w_dec, b_dec,
      w_step, b_step, w_hh, w4_step, b4)

    # flat columns are t*IN_CH + c -> (B, L, C); torch's trailing .squeeze() is a no-op here.
    reconstruction = recon_flat.reshape(bsz, L_SEQ, IN_CH)
    return reconstruction, mu, logvar, y_pred


# ================================ deterministic init ================================
def init_params(key):
    def nrm(k, shape, scale=0.1):
        return scale * jax.random.normal(k, shape, dtype=jnp.float32)

    ki = iter(jax.random.split(key, 32))
    p = {}
    p["conv1_w"] = nrm(next(ki), (CH, IN_CH, K_SZ)); p["conv1_b"] = nrm(next(ki), (CH,))
    p["fc21_w"] = nrm(next(ki), (HID, CONV_SZ));     p["fc21_b"] = nrm(next(ki), (HID,))
    p["fc22_w"] = nrm(next(ki), (HID, CONV_SZ));     p["fc22_b"] = nrm(next(ki), (HID,))
    p["fc3_w"] = nrm(next(ki), (CH * R, R));         p["fc3_b"] = nrm(next(ki), (CH * R,))
    p["fc3b_w"] = nrm(next(ki), (CONV_SZ, CH * R));  p["fc3b_b"] = nrm(next(ki), (CONV_SZ,))
    p["deconv4_w"] = nrm(next(ki), (CH, IN_CH, K_SZ)); p["deconv4_b"] = nrm(next(ki), (IN_CH,))
    p["lstm_w_ih_f"] = nrm(next(ki), (4 * LSTM_SZ, IN_CH))
    p["lstm_w_hh_f"] = nrm(next(ki), (4 * LSTM_SZ, LSTM_SZ))
    p["lstm_b_ih_f"] = nrm(next(ki), (4 * LSTM_SZ,))
    p["lstm_b_hh_f"] = nrm(next(ki), (4 * LSTM_SZ,))
    p["lstm_w_ih_b"] = nrm(next(ki), (4 * LSTM_SZ, IN_CH))
    p["lstm_w_hh_b"] = nrm(next(ki), (4 * LSTM_SZ, LSTM_SZ))
    p["lstm_b_ih_b"] = nrm(next(ki), (4 * LSTM_SZ,))
    p["lstm_b_hh_b"] = nrm(next(ki), (4 * LSTM_SZ,))
    p["fc4_w"] = nrm(next(ki), (IN_CH, 2 * LSTM_SZ)); p["fc4_b"] = nrm(next(ki), (IN_CH,))
    p["clf_conv1_w"] = nrm(next(ki), (CH, IN_CH, K_SZ)); p["clf_conv1_b"] = nrm(next(ki), (CH,))
    p["clf_linear_w"] = nrm(next(ki), (CLF_SZ, CONV_SZ)); p["clf_linear_b"] = nrm(next(ki), (CLF_SZ,))
    p["clf_final_w"] = nrm(next(ki), (M_CLS, CLF_SZ));    p["clf_final_b"] = nrm(next(ki), (M_CLS,))
    return p


# ======================================= main =======================================
if __name__ == "__main__":
    root = jax.random.PRNGKey(0)
    pkey, xkey, ekey = jax.random.split(root, 3)
    params = init_params(pkey)
    x = jax.random.normal(xkey, (B, L_SEQ, IN_CH), dtype=jnp.float32)

    recon, mu, logvar, y_pred = jax.jit(ssvae_forward)(params, x, ekey)
    jax.block_until_ready((recon, mu, logvar, y_pred))

    assert recon.shape == (B, L_SEQ, IN_CH), recon.shape
    assert mu.shape == (B, HID) and logvar.shape == (B, HID)
    assert y_pred.shape == (B, M_CLS)
    print("KERNEL_OK")
</pallas_src>

<mosaic_0001>
module attributes {stable_mosaic.version = 11 : i64} {
  func.func @_ssvae_fused_kernel(%arg0: memref<24x48xf32, #tpu.memory_space<vmem>>, %arg1: memref<48x20xf32, #tpu.memory_space<vmem>>, %arg2: memref<1x20xf32, #tpu.memory_space<vmem>>, %arg3: memref<4x20x54xf32, #tpu.memory_space<vmem>>, %arg4: memref<1x54xf32, #tpu.memory_space<vmem>>, %arg5: memref<50x3xf32, #tpu.memory_space<vmem>>, %arg6: memref<1x3xf32, #tpu.memory_space<vmem>>, %arg7: memref<2x2xf32, #tpu.memory_space<vmem>>, %arg8: memref<2x2xf32, #tpu.memory_space<vmem>>, %arg9: memref<2x50xf32, #tpu.memory_space<vmem>>, %arg10: memref<3x50xf32, #tpu.memory_space<vmem>>, %arg11: memref<1x50xf32, #tpu.memory_space<vmem>>, %arg12: memref<50x40xf32, #tpu.memory_space<vmem>>, %arg13: memref<1x40xf32, #tpu.memory_space<vmem>>, %arg14: memref<40x52xf32, #tpu.memory_space<vmem>>, %arg15: memref<1x52xf32, #tpu.memory_space<vmem>>, %arg16: memref<52x1664xf32, #tpu.memory_space<vmem>>, %arg17: memref<1x1664xf32, #tpu.memory_space<vmem>>, %arg18: memref<20x80xf32, #tpu.memory_space<vmem>>, %arg19: memref<13x20x52xf32, #tpu.memory_space<vmem>>, %arg20: memref<1x52xf32, #tpu.memory_space<vmem>>, %arg21: memref<2x52xf32, #tpu.memory_space<vmem>>, %arg22: memref<2x2xf32, #tpu.memory_space<vmem>>, %arg23: memref<2x2xf32, #tpu.memory_space<vmem>>, %arg24: memref<2x3xf32, #tpu.memory_space<vmem>>) attributes {dimension_semantics = [], scalar_prefetch = 0 : i64, scratch_operands = 0 : i64, tpu.core_type = #tpu.core_type<tc>} {
    %c0 = arith.constant 0 : index
    %c0_0 = arith.constant 0 : index
    %0 = vector.load %arg0[%c0, %c0_0] : memref<24x48xf32, #tpu.memory_space<vmem>>, vector<24x48xf32>
    %c0_1 = arith.constant 0 : index
    %c0_2 = arith.constant 0 : index
    %1 = vector.load %arg1[%c0_1, %c0_2] : memref<48x20xf32, #tpu.memory_space<vmem>>, vector<48x20xf32>
    %cst = arith.constant dense<0.000000e+00> : vector<24x20xf32>
    %2 = tpu.matmul %0, %1, %cst {dimension_numbers = #tpu.dot_dimension_numbers<[1], [0], [0], [1], [0, 0, 1, 1], [], []>} : vector<24x48xf32>, vector<48x20xf32>, vector<24x20xf32> -> vector<24x20xf32>
    %c0_3 = arith.constant 0 : index
    %c0_4 = arith.constant 0 : index
    %3 = vector.load %arg2[%c0_3, %c0_4] : memref<1x20xf32, #tpu.memory_space<vmem>>, vector<1x20xf32>
    %4 = vector.broadcast %3 : vector<1x20xf32> to vector<24x20xf32>
    %5 = arith.addf %2, %4 : vector<24x20xf32>
    %cst_5 = arith.constant 0.000000e+00 : f32
    %6 = vector.broadcast %cst_5 : f32 to vector<24x20xf32>
    %7 = arith.cmpf oge, %5, %6 : vector<24x20xf32>
    %cst_6 = arith.constant 0.00999999977 : f32
    %8 = vector.broadcast %cst_6 : f32 to vector<24x20xf32>
    %9 = arith.mulf %8, %5 : vector<24x20xf32>
    %10 = arith.select %7, %5, %9 : vector<24x20xi1>, vector<24x20xf32>
    %11 = vector.extract_strided_slice %10 {offsets = [0, 0], sizes = [8, 20], strides = [1, 1]} : vector<24x20xf32> to vector<8x20xf32>
    %12 = vector.extract_strided_slice %10 {offsets = [8, 0], sizes = [8, 20], strides = [1, 1]} : vector<24x20xf32> to vector<8x20xf32>
    %13 = arith.maximumf %11, %12 : vector<8x20xf32>
    %14 = vector.extract_strided_slice %10 {offsets = [16, 0], sizes = [8, 20], strides = [1, 1]} : vector<24x20xf32> to vector<8x20xf32>
    %15 = arith.maximumf %13, %14 : vector<8x20xf32>
    %c0_7 = arith.constant 0 : index
    %c0_8 = arith.constant 0 : index
    %16 = vector.load %arg4[%c0_7, %c0_8] : memref<1x54xf32, #tpu.memory_space<vmem>>, vector<1x54xf32>
    %17 = vector.extract_strided_slice %15 {offsets = [0, 0], sizes = [2, 20], strides = [1, 1]} : vector<8x20xf32> to vector<2x20xf32>
    %c0_9 = arith.constant 0 : index
    %c0_10 = arith.constant 0 : index
    %c0_11 = arith.constant 0 : index
    %18 = vector.load %arg3[%c0_9, %c0_10, %c0_11] : memref<4x20x54xf32, #tpu.memory_space<vmem>>, vector<1x20x54xf32>
    %19 = vector.shape_cast %18 : vector<1x20x54xf32> to vector<20x54xf32>
    %cst_12 = arith.constant dense<0.000000e+00> : vector<2x54xf32>
    %20 = tpu.matmul %17, %19, %cst_12 {dimension_numbers = #tpu.dot_dimension_numbers<[1], [0], [0], [1], [0, 0, 1, 1], [], []>} : vector<2x20xf32>, vector<20x54xf32>, vector<2x54xf32> -> vector<2x54xf32>
    %21 = vector.broadcast %16 : vector<1x54xf32> to vector<2x54xf32>
    %22 = arith.addf %21, %20 : vector<2x54xf32>
    %23 = vector.extract_strided_slice %15 {offsets = [2, 0], sizes = [2, 20], strides = [1, 1]} : vector<8x20xf32> to vector<2x20xf32>
    %c1 = arith.constant 1 : index
    %c0_13 = arith.constant 0 : index
    %c0_14 = arith.constant 0 : index
    %24 = vector.load %arg3[%c1, %c0_13, %c0_14] : memref<4x20x54xf32, #tpu.memory_space<vmem>>, vector<1x20x54xf32>
    %25 = vector.shape_cast %24 : vector<1x20x54xf32> to vector<20x54xf32>
    %cst_15 = arith.constant dense<0.000000e+00> : vector<2x54xf32>
    %26 = tpu.matmul %23, %25, %cst_15 {dimension_numbers = #tpu.dot_dimension_numbers<[1], [0], [0], [1], [0, 0, 1, 1], [], []>} : vector<2x20xf32>, vector<20x54xf32>, vector<2x54xf32> -> vector<2x54xf32>
    %27 = arith.addf %22, %26 : vector<2x54xf32>
    %28 = vector.extract_strided_slice %15 {offsets = [4, 0], sizes = [2, 20], strides = [1, 1]} : vector<8x20xf32> to vector<2x20xf32>
    %c2 = arith.constant 2 : index
    %c0_16 = arith.constant 0 : index
    %c0_17 = arith.constant 0 : index
    %29 = vector.load %arg3[%c2, %c0_16, %c0_17] : memref<4x20x54xf32, #tpu.memory_space<vmem>>, vector<1x20x54xf32>
    %30 = vector.shape_cast %29 : vector<1x20x54xf32> to vector<20x54xf32>
    %cst_18 = arith.constant dense<0.000000e+00> : vector<2x54xf32>
    %31 = tpu.matmul %28, %30, %cst_18 {dimension_numbers = #tpu.dot_dimension_numbers<[1], [0], [0], [1], [0, 0, 1, 1], [], []>} : vector<2x20xf32>, vector<20x54xf32>, vector<2x54xf32> -> vector<2x54xf32>
    %32 = arith.addf %27, %31 : vector<2x54xf32>
    %33 = vector.extract_strided_slice %15 {offsets = [6, 0], sizes = [2, 20], strides = [1, 1]} : vector<8x20xf32> to vector<2x20xf32>
    %c3 = arith.constant 3 : index
    %c0_19 = arith.constant 0 : index
    %c0_20 = arith.constant 0 : index
    %34 = vector.load %arg3[%c3, %c0_19, %c0_20] : memref<4x20x54xf32, #tpu.memory_space<vmem>>, vector<1x20x54xf32>
    %35 = vector.shape_cast %34 : vector<1x20x54xf32> to vector<20x54xf32>
    %cst_21 = arith.constant dense<0.000000e+00> : vector<2x54xf32>
    %36 = tpu.matmul %33, %35, %cst_21 {dimension_numbers = #tpu.dot_dimension_numbers<[1], [0], [0], [1], [0, 0, 1, 1], [], []>} : vector<2x20xf32>, vector<20x54xf32>, vector<2x54xf32> -> vector<2x54xf32>
    %37 = arith.addf %32, %36 : vector<2x54xf32>
    %38 = vector.extract_strided_slice %37 {offsets = [0, 0], sizes = [2, 2], strides = [1, 1]} : vector<2x54xf32> to vector<2x2xf32>
    %39 = vector.extract_strided_slice %37 {offsets = [0, 2], sizes = [2, 2], strides = [1, 1]} : vector<2x54xf32> to vector<2x2xf32>
    %40 = vector.extract_strided_slice %37 {offsets = [0, 4], sizes = [2, 50], strides = [1, 1]} : vector<2x54xf32> to vector<2x50xf32>
    %cst_22 = arith.constant 0.000000e+00 : f32
    %41 = vector.broadcast %cst_22 : f32 to vector<2x50xf32>
    %42 = arith.cmpf oge, %40, %41 : vector<2x50xf32>
    %cst_23 = arith.constant 0.00999999977 : f32
    %43 = vector.broadcast %cst_23 : f32 to vector<2x50xf32>
    %44 = arith.mulf %43, %40 : vector<2x50xf32>
    %45 = arith.select %42, %40, %44 : vector<2x50xi1>, vector<2x50xf32>
    %c0_24 = arith.constant 0 : index
    %c0_25 = arith.constant 0 : index
    %46 = vector.load %arg5[%c0_24, %c0_25] : memref<50x3xf32, #tpu.memory_space<vmem>>, vector<50x3xf32>
    %cst_26 = arith.constant dense<0.000000e+00> : vector<2x3xf32>
    %47 = tpu.matmul %45, %46, %cst_26 {dimension_numbers = #tpu.dot_dimension_numbers<[1], [0], [0], [1], [0, 0, 1, 1], [], []>} : vector<2x50xf32>, vector<50x3xf32>, vector<2x3xf32> -> vector<2x3xf32>
    %c0_27 = arith.constant 0 : index
    %c0_28 = arith.constant 0 : index
    %48 = vector.load %arg6[%c0_27, %c0_28] : memref<1x3xf32, #tpu.memory_space<vmem>>, vector<1x3xf32>
    %49 = vector.broadcast %48 : vector<1x3xf32> to vector<2x3xf32>
    %50 = arith.addf %47, %49 : vector<2x3xf32>
    %cst_29 = arith.constant dense<0xFF800000> : vector<2xf32>
    %51 = vector.multi_reduction <maximumf>, %50, %cst_29 [1] : vector<2x3xf32> to vector<2xf32>
    %52 = vector.shape_cast %51 : vector<2xf32> to vector<2x1xf32>
    %53 = vector.broadcast %52 : vector<2x1xf32> to vector<2x3xf32>
    %54 = arith.subf %50, %53 : vector<2x3xf32>
    %55 = math.exp %54 : vector<2x3xf32>
    %cst_30 = arith.constant dense<0.000000e+00> : vector<2xf32>
    %56 = vector.multi_reduction <add>, %55, %cst_30 [1] : vector<2x3xf32> to vector<2xf32>
    %57 = vector.shape_cast %56 : vector<2xf32> to vector<2x1xf32>
    %58 = math.log %57 : vector<2x1xf32>
    %59 = vector.broadcast %52 : vector<2x1xf32> to vector<2x3xf32>
    %60 = arith.subf %50, %59 : vector<2x3xf32>
    %61 = vector.broadcast %58 : vector<2x1xf32> to vector<2x3xf32>
    %62 = arith.subf %60, %61 : vector<2x3xf32>
    %c0_31 = arith.constant 0 : index
    %c0_32 = arith.constant 0 : index
    %63 = vector.load %arg22[%c0_31, %c0_32] : memref<2x2xf32, #tpu.memory_space<vmem>>, vector<2x2xf32>
    tpu.vector_store %arg22[%c0_31, %c0_32], %38 {strides = array<i32>} : memref<2x2xf32, #tpu.memory_space<vmem>>, vector<2x2xf32>,
    %c0_33 = arith.constant 0 : index
    %c0_34 = arith.constant 0 : index
    %64 = vector.load %arg23[%c0_33, %c0_34] : memref<2x2xf32, #tpu.memory_space<vmem>>, vector<2x2xf32>
    tpu.vector_store %arg23[%c0_33, %c0_34], %39 {strides = array<i32>} : memref<2x2xf32, #tpu.memory_space<vmem>>, vector<2x2xf32>,
    %c0_35 = arith.constant 0 : index
    %c0_36 = arith.constant 0 : index
    %65 = vector.load %arg24[%c0_35, %c0_36] : memref<2x3xf32, #tpu.memory_space<vmem>>, vector<2x3xf32>
    tpu.vector_store %arg24[%c0_35, %c0_36], %62 {strides = array<i32>} : memref<2x3xf32, #tpu.memory_space<vmem>>, vector<2x3xf32>,
    %cst_37 = arith.constant 5.000000e-01 : f32
    %66 = vector.broadcast %cst_37 : f32 to vector<2x2xf32>
    %67 = arith.mulf %66, %39 : vector<2x2xf32>
    %68 = math.exp %67 : vector<2x2xf32>
    %cst_38 = arith.constant 1.000000e-01 : f32
    %69 = vector.broadcast %cst_38 : f32 to vector<2x2xf32>
    %70 = arith.addf %68, %69 : vector<2x2xf32>
    %c0_39 = arith.constant 0 : index
    %c0_40 = arith.constant 0 : index
    %71 = vector.load %arg7[%c0_39, %c0_40] : memref<2x2xf32, #tpu.memory_space<vmem>>, vector<2x2xf32>
    %72 = arith.mulf %71, %70 : vector<2x2xf32>
    %73 = arith.addf %72, %38 : vector<2x2xf32>
    %c0_41 = arith.constant 0 : index
    %c0_42 = arith.constant 0 : index
    %74 = vector.load %arg9[%c0_41, %c0_42] : memref<2x50xf32, #tpu.memory_space<vmem>>, vector<2x50xf32>
    %cst_43 = arith.constant dense<0.000000e+00> : vector<2x50xf32>
    %75 = tpu.matmul %73, %74, %cst_43 {dimension_numbers = #tpu.dot_dimension_numbers<[1], [0], [0], [1], [0, 0, 1, 1], [], []>} : vector<2x2xf32>, vector<2x50xf32>, vector<2x50xf32> -> vector<2x50xf32>
    %c0_44 = arith.constant 0 : index
    %c0_45 = arith.constant 0 : index
    %76 = vector.load %arg10[%c0_44, %c0_45] : memref<3x50xf32, #tpu.memory_space<vmem>>, vector<3x50xf32>
    %cst_46 = arith.constant dense<0.000000e+00> : vector<2x50xf32>
    %77 = tpu.matmul %62, %76, %cst_46 {dimension_numbers = #tpu.dot_dimension_numbers<[1], [0], [0], [1], [0, 0, 1, 1], [], []>} : vector<2x3xf32>, vector<3x50xf32>, vector<2x50xf32> -> vector<2x50xf32>
    %78 = arith.addf %75, %77 : vector<2x50xf32>
    %c0_47 = arith.constant 0 : index
    %c0_48 = arith.constant 0 : index
    %79 = vector.load %arg11[%c0_47, %c0_48] : memref<1x50xf32, #tpu.memory_space<vmem>>, vector<1x50xf32>
    %80 = vector.broadcast %79 : vector<1x50xf32> to vector<2x50xf32>
    %81 = arith.addf %78, %80 : vector<2x50xf32>
    %cst_49 = arith.constant 0.000000e+00 : f32
    %82 = vector.broadcast %cst_49 : f32 to vector<2x50xf32>
    %83 = arith.cmpf oge, %81, %82 : vector<2x50xf32>
    %cst_50 = arith.constant 0.00999999977 : f32
    %84 = vector.broadcast %cst_50 : f32 to vector<2x50xf32>
    %85 = arith.mulf %84, %81 : vector<2x50xf32>
    %86 = arith.select %83, %81, %85 : vector<2x50xi1>, vector<2x50xf32>
    %c0_51 = arith.constant 0 : index
    %c0_52 = arith.constant 0 : index
    %87 = vector.load %arg12[%c0_51, %c0_52] : memref<50x40xf32, #tpu.memory_space<vmem>>, vector<50x40xf32>
    %cst_53 = arith.constant dense<0.000000e+00> : vector<2x40xf32>
    %88 = tpu.matmul %86, %87, %cst_53 {dimension_numbers = #tpu.dot_dimension_numbers<[1], [0], [0], [1], [0, 0, 1, 1], [], []>} : vector<2x50xf32>, vector<50x40xf32>, vector<2x40xf32> -> vector<2x40xf32>
    %c0_54 = arith.constant 0 : index
    %c0_55 = arith.constant 0 : index
    %89 = vector.load %arg13[%c0_54, %c0_55] : memref<1x40xf32, #tpu.memory_space<vmem>>, vector<1x40xf32>
    %90 = vector.broadcast %89 : vector<1x40xf32> to vector<2x40xf32>
    %91 = arith.addf %88, %90 : vector<2x40xf32>
    %cst_56 = arith.constant 0.000000e+00 : f32
    %92 = vector.broadcast %cst_56 : f32 to vector<2x40xf32>
    %93 = arith.cmpf oge, %91, %92 : vector<2x40xf32>
    %cst_57 = arith.constant 0.00999999977 : f32
    %94 = vector.broadcast %cst_57 : f32 to vector<2x40xf32>
    %95 = arith.mulf %94, %91 : vector<2x40xf32>
    %96 = arith.select %93, %91, %95 : vector<2x40xi1>, vector<2x40xf32>
    %c0_58 = arith.constant 0 : index
    %c0_59 = arith.constant 0 : index
    %97 = vector.load %arg14[%c0_58, %c0_59] : memref<40x52xf32, #tpu.memory_space<vmem>>, vector<40x52xf32>
    %cst_60 = arith.constant dense<0.000000e+00> : vector<2x52xf32>
    %98 = tpu.matmul %96, %97, %cst_60 {dimension_numbers = #tpu.dot_dimension_numbers<[1], [0], [0], [1], [0, 0, 1, 1], [], []>} : vector<2x40xf32>, vector<40x52xf32>, vector<2x52xf32> -> vector<2x52xf32>
    %c0_61 = arith.constant 0 : index
    %c0_62 = arith.constant 0 : index
    %99 = vector.load %arg15[%c0_61, %c0_62] : memref<1x52xf32, #tpu.memory_space<vmem>>, vector<1x52xf32>
    %100 = vector.broadcast %99 : vector<1x52xf32> to vector<2x52xf32>
    %101 = arith.addf %98, %100 : vector<2x52xf32>
    %cst_63 = arith.constant 0.000000e+00 : f32
    %102 = vector.broadcast %cst_63 : f32 to vector<2x52xf32>
    %103 = arith.cmpf oge, %101, %102 : vector<2x52xf32>
    %cst_64 = arith.constant 0.00999999977 : f32
    %104 = vector.broadcast %cst_64 : f32 to vector<2x52xf32>
    %105 = arith.mulf %104, %101 : vector<2x52xf32>
    %106 = arith.select %103, %101, %105 : vector<2x52xi1>, vector<2x52xf32>
    %c0_65 = arith.constant 0 : index
    %c0_66 = arith.constant 0 : index
    %107 = vector.load %arg16[%c0_65, %c0_66] : memref<52x1664xf32, #tpu.memory_space<vmem>>, vector<52x1664xf32>
    %cst_67 = arith.constant dense<0.000000e+00> : vector<2x1664xf32>
    %108 = tpu.matmul %106, %107, %cst_67 {dimension_numbers = #tpu.dot_dimension_numbers<[1], [0], [0], [1], [0, 0, 1, 1], [], []>} : vector<2x52xf32>, vector<52x1664xf32>, vector<2x1664xf32> -> vector<2x1664xf32>
    %c0_68 = arith.constant 0 : index
    %c0_69 = arith.constant 0 : index
    %109 = vector.load %arg17[%c0_68, %c0_69] : memref<1x1664xf32, #tpu.memory_space<vmem>>, vector<1x1664xf32>
    %110 = vector.broadcast %109 : vector<1x1664xf32> to vector<2x1664xf32>
    %111 = arith.addf %108, %110 : vector<2x1664xf32>
    %c0_70 = arith.constant 0 : index
    %c0_71 = arith.constant 0 : index
    %112 = vector.load %arg18[%c0_70, %c0_71] : memref<20x80xf32, #tpu.memory_space<vmem>>, vector<20x80xf32>
    %cst_72 = arith.constant 0.000000e+00 : f32
    %113 = vector.broadcast %cst_72 : f32 to vector<2x20xf32>
    %cst_73 = arith.constant 0.000000e+00 : f32
    %114 = vector.broadcast %cst_73 : f32 to vector<2x20xf32>
    %cst_74 = arith.constant 0.000000e+00 : f32
    %115 = vector.broadcast %cst_74 : f32 to vector<2x52xf32>
    %116 = vector.extract_strided_slice %111 {offsets = [0, 0], sizes = [2, 80], strides = [1, 1]} : vector<2x1664xf32> to vector<2x80xf32>
    %cst_75 = arith.constant dense<0.000000e+00> : vector<2x80xf32>
    %117 = tpu.matmul %113, %112, %cst_75 {dimension_numbers = #tpu.dot_dimension_numbers<[1], [0], [0], [1], [0, 0, 1, 1], [], []>} : vector<2x20xf32>, vector<20x80xf32>, vector<2x80xf32> -> vector<2x80xf32>
    %118 = arith.addf %116, %117 : vector<2x80xf32>
    %119 = vector.extract_strided_slice %118 {offsets = [0, 0], sizes = [2, 20], strides = [1, 1]} : vector<2x80xf32> to vector<2x20xf32>
    %120 = arith.negf %119 : vector<2x20xf32>
    %121 = math.exp %120 : vector<2x20xf32>
    %cst_76 = arith.constant 1.000000e+00 : f32
    %122 = vector.broadcast %cst_76 : f32 to vector<2x20xf32>
    %123 = arith.addf %122, %121 : vector<2x20xf32>
    %124 = arith.divf %122, %123 : vector<2x20xf32>
    %125 = vector.extract_strided_slice %118 {offsets = [0, 20], sizes = [2, 20], strides = [1, 1]} : vector<2x80xf32> to vector<2x20xf32>
    %126 = arith.negf %125 : vector<2x20xf32>
    %127 = math.exp %126 : vector<2x20xf32>
    %cst_77 = arith.constant 1.000000e+00 : f32
    %128 = vector.broadcast %cst_77 : f32 to vector<2x20xf32>
    %129 = arith.addf %128, %127 : vector<2x20xf32>
    %130 = arith.divf %128, %129 : vector<2x20xf32>
    %131 = vector.extract_strided_slice %118 {offsets = [0, 40], sizes = [2, 20], strides = [1, 1]} : vector<2x80xf32> to vector<2x20xf32>
    %132 = math.tanh %131 : vector<2x20xf32>
    %133 = vector.extract_strided_slice %118 {offsets = [0, 60], sizes = [2, 20], strides = [1, 1]} : vector<2x80xf32> to vector<2x20xf32>
    %134 = arith.negf %133 : vector<2x20xf32>
    %135 = math.exp %134 : vector<2x20xf32>
    %cst_78 = arith.constant 1.000000e+00 : f32
    %136 = vector.broadcast %cst_78 : f32 to vector<2x20xf32>
    %137 = arith.addf %136, %135 : vector<2x20xf32>
    %138 = arith.divf %136, %137 : vector<2x20xf32>
    %139 = arith.mulf %130, %114 : vector<2x20xf32>
    %140 = arith.mulf %124, %132 : vector<2x20xf32>
    %141 = arith.addf %139, %140 : vector<2x20xf32>
    %142 = math.tanh %141 : vector<2x20xf32>
    %143 = arith.mulf %138, %142 : vector<2x20xf32>
    %cst_79 = arith.constant 0.000000e+00 : f32
    %144 = vector.broadcast %cst_79 : f32 to vector<2x20xf32>
    %145 = arith.cmpf oge, %143, %144 : vector<2x20xf32>
    %cst_80 = arith.constant 0.00999999977 : f32
    %146 = vector.broadcast %cst_80 : f32 to vector<2x20xf32>
    %147 = arith.mulf %146, %143 : vector<2x20xf32>
    %148 = arith.select %145, %143, %147 : vector<2x20xi1>, vector<2x20xf32>
    %c0_81 = arith.constant 0 : index
    %c0_82 = arith.constant 0 : index
    %c0_83 = arith.constant 0 : index
    %149 = vector.load %arg19[%c0_81, %c0_82, %c0_83] : memref<13x20x52xf32, #tpu.memory_space<vmem>>, vector<1x20x52xf32>
    %150 = vector.shape_cast %149 : vector<1x20x52xf32> to vector<20x52xf32>
    %cst_84 = arith.constant dense<0.000000e+00> : vector<2x52xf32>
    %151 = tpu.matmul %148, %150, %cst_84 {dimension_numbers = #tpu.dot_dimension_numbers<[1], [0], [0], [1], [0, 0, 1, 1], [], []>} : vector<2x20xf32>, vector<20x52xf32>, vector<2x52xf32> -> vector<2x52xf32>
    %152 = arith.addf %115, %151 : vector<2x52xf32>
    %153 = vector.extract_strided_slice %111 {offsets = [0, 128], sizes = [2, 80], strides = [1, 1]} : vector<2x1664xf32> to vector<2x80xf32>
    %cst_85 = arith.constant dense<0.000000e+00> : vector<2x80xf32>
    %154 = tpu.matmul %143, %112, %cst_85 {dimension_numbers = #tpu.dot_dimension_numbers<[1], [0], [0], [1], [0, 0, 1, 1], [], []>} : vector<2x20xf32>, vector<20x80xf32>, vector<2x80xf32> -> vector<2x80xf32>
    %155 = arith.addf %153, %154 : vector<2x80xf32>
    %156 = vector.extract_strided_slice %155 {offsets = [0, 0], sizes = [2, 20], strides = [1, 1]} : vector<2x80xf32> to vector<2x20xf32>
    %157 = arith.negf %156 : vector<2x20xf32>
    %158 = math.exp %157 : vector<2x20xf32>
    %cst_86 = arith.constant 1.000000e+00 : f32
    %159 = vector.broadcast %cst_86 : f32 to vector<2x20xf32>
    %160 = arith.addf %159, %158 : vector<2x20xf32>
    %161 = arith.divf %159, %160 : vector<2x20xf32>
    %162 = vector.extract_strided_slice %155 {offsets = [0, 20], sizes = [2, 20], strides = [1, 1]} : vector<2x80xf32> to vector<2x20xf32>
    %163 = arith.negf %162 : vector<2x20xf32>
    %164 = math.exp %163 : vector<2x20xf32>
    %cst_87 = arith.constant 1.000000e+00 : f32
    %165 = vector.broadcast %cst_87 : f32 to vector<2x20xf32>
    %166 = arith.addf %165, %164 : vector<2x20xf32>
    %167 = arith.divf %165, %166 : vector<2x20xf32>
    %168 = vector.extract_strided_slice %155 {offsets = [0, 40], sizes = [2, 20], strides = [1, 1]} : vector<2x80xf32> to vector<2x20xf32>
    %169 = math.tanh %168 : vector<2x20xf32>
    %170 = vector.extract_strided_slice %155 {offsets = [0, 60], sizes = [2, 20], strides = [1, 1]} : vector<2x80xf32> to vector<2x20xf32>
    %171 = arith.negf %170 : vector<2x20xf32>
    %172 = math.exp %171 : vector<2x20xf32>
    %cst_88 = arith.constant 1.000000e+00 : f32
    %173 = vector.broadcast %cst_88 : f32 to vector<2x20xf32>
    %174 = arith.addf %173, %172 : vector<2x20xf32>
    %175 = arith.divf %173, %174 : vector<2x20xf32>
    %176 = arith.mulf %167, %141 : vector<2x20xf32>
    %177 = arith.mulf %161, %169 : vector<2x20xf32>
    %178 = arith.addf %176, %177 : vector<2x20xf32>
    %179 = math.tanh %178 : vector<2x20xf32>
    %180 = arith.mulf %175, %179 : vector<2x20xf32>
    %cst_89 = arith.constant 0.000000e+00 : f32
    %181 = vector.broadcast %cst_89 : f32 to vector<2x20xf32>
    %182 = arith.cmpf oge, %180, %181 : vector<2x20xf32>
    %cst_90 = arith.constant 0.00999999977 : f32
    %183 = vector.broadcast %cst_90 : f32 to vector<2x20xf32>
    %184 = arith.mulf %183, %180 : vector<2x20xf32>
    %185 = arith.select %182, %180, %184 : vector<2x20xi1>, vector<2x20xf32>
    %c1_91 = arith.constant 1 : index
    %c0_92 = arith.constant 0 : index
    %c0_93 = arith.constant 0 : index
    %186 = vector.load %arg19[%c1_91, %c0_92, %c0_93] : memref<13x20x52xf32, #tpu.memory_space<vmem>>, vector<1x20x52xf32>
    %187 = vector.shape_cast %186 : vector<1x20x52xf32> to vector<20x52xf32>
    %cst_94 = arith.constant dense<0.000000e+00> : vector<2x52xf32>
    %188 = tpu.matmul %185, %187, %cst_94 {dimension_numbers = #tpu.dot_dimension_numbers<[1], [0], [0], [1], [0, 0, 1, 1], [], []>} : vector<2x20xf32>, vector<20x52xf32>, vector<2x52xf32> -> vector<2x52xf32>
    %189 = arith.addf %152, %188 : vector<2x52xf32>
    %190 = vector.extract_strided_slice %111 {offsets = [0, 256], sizes = [2, 80], strides = [1, 1]} : vector<2x1664xf32> to vector<2x80xf32>
    %cst_95 = arith.constant dense<0.000000e+00> : vector<2x80xf32>
    %191 = tpu.matmul %180, %112, %cst_95 {dimension_numbers = #tpu.dot_dimension_numbers<[1], [0], [0], [1], [0, 0, 1, 1], [], []>} : vector<2x20xf32>, vector<20x80xf32>, vector<2x80xf32> -> vector<2x80xf32>
    %192 = arith.addf %190, %191 : vector<2x80xf32>
    %193 = vector.extract_strided_slice %192 {offsets = [0, 0], sizes = [2, 20], strides = [1, 1]} : vector<2x80xf32> to vector<2x20xf32>
    %194 = arith.negf %193 : vector<2x20xf32>
    %195 = math.exp %194 : vector<2x20xf32>
    %cst_96 = arith.constant 1.000000e+00 : f32
    %196 = vector.broadcast %cst_96 : f32 to vector<2x20xf32>
    %197 = arith.addf %196, %195 : vector<2x20xf32>
    %198 = arith.divf %196, %197 : vector<2x20xf32>
    %199 = vector.extract_strided_slice %192 {offsets = [0, 20], sizes = [2, 20], strides = [1, 1]} : vector<2x80xf32> to vector<2x20xf32>
    %200 = arith.negf %199 : vector<2x20xf32>
    %201 = math.exp %200 : vector<2x20xf32>
    %cst_97 = arith.constant 1.000000e+00 : f32
    %202 = vector.broadcast %cst_97 : f32 to vector<2x20xf32>
    %203 = arith.addf %202, %201 : vector<2x20xf32>
    %204 = arith.divf %202, %203 : vector<2x20xf32>
    %205 = vector.extract_strided_slice %192 {offsets = [0, 40], sizes = [2, 20], strides = [1, 1]} : vector<2x80xf32> to vector<2x20xf32>
    %206 = math.tanh %205 : vector<2x20xf32>
    %207 = vector.extract_strided_slice %192 {offsets = [0, 60], sizes = [2, 20], strides = [1, 1]} : vector<2x80xf32> to vector<2x20xf32>
    %208 = arith.negf %207 : vector<2x20xf32>
    %209 = math.exp %208 : vector<2x20xf32>
    %cst_98 = arith.constant 1.000000e+00 : f32
    %210 = vector.broadcast %cst_98 : f32 to vector<2x20xf32>
    %211 = arith.addf %210, %209 : vector<2x20xf32>
    %212 = arith.divf %210, %211 : vector<2x20xf32>
    %213 = arith.mulf %204, %178 : vector<2x20xf32>
    %214 = arith.mulf %198, %206 : vector<2x20xf32>
    %215 = arith.addf %213, %214 : vector<2x20xf32>
    %216 = math.tanh %215 : vector<2x20xf32>
    %217 = arith.mulf %212, %216 : vector<2x20xf32>
    %cst_99 = arith.constant 0.000000e+00 : f32
    %218 = vector.broadcast %cst_99 : f32 to vector<2x20xf32>
    %219 = arith.cmpf oge, %217, %218 : vector<2x20xf32>
    %cst_100 = arith.constant 0.00999999977 : f32
    %220 = vector.broadcast %cst_100 : f32 to vector<2x20xf32>
    %221 = arith.mulf %220, %217 : vector<2x20xf32>
    %222 = arith.select %219, %217, %221 : vector<2x20xi1>, vector<2x20xf32>
    %c2_101 = arith.constant 2 : index
    %c0_102 = arith.constant 0 : index
    %c0_103 = arith.constant 0 : index
    %223 = vector.load %arg19[%c2_101, %c0_102, %c0_103] : memref<13x20x52xf32, #tpu.memory_space<vmem>>, vector<1x20x52xf32>
    %224 = vector.shape_cast %223 : vector<1x20x52xf32> to vector<20x52xf32>
    %cst_104 = arith.constant dense<0.000000e+00> : vector<2x52xf32>
    %225 = tpu.matmul %222, %224, %cst_104 {dimension_numbers = #tpu.dot_dimension_numbers<[1], [0], [0], [1], [0, 0, 1, 1], [], []>} : vector<2x20xf32>, vector<20x52xf32>, vector<2x52xf32> -> vector<2x52xf32>
    %226 = arith.addf %189, %225 : vector<2x52xf32>
    %227 = vector.extract_strided_slice %111 {offsets = [0, 384], sizes = [2, 80], strides = [1, 1]} : vector<2x1664xf32> to vector<2x80xf32>
    %cst_105 = arith.constant dense<0.000000e+00> : vector<2x80xf32>
    %228 = tpu.matmul %217, %112, %cst_105 {dimension_numbers = #tpu.dot_dimension_numbers<[1], [0], [0], [1], [0, 0, 1, 1], [], []>} : vector<2x20xf32>, vector<20x80xf32>, vector<2x80xf32> -> vector<2x80xf32>
    %229 = arith.addf %227, %228 : vector<2x80xf32>
    %230 = vector.extract_strided_slice %229 {offsets = [0, 0], sizes = [2, 20], strides = [1, 1]} : vector<2x80xf32> to vector<2x20xf32>
    %231 = arith.negf %230 : vector<2x20xf32>
    %232 = math.exp %231 : vector<2x20xf32>
    %cst_106 = arith.constant 1.000000e+00 : f32
    %233 = vector.broadcast %cst_106 : f32 to vector<2x20xf32>
    %234 = arith.addf %233, %232 : vector<2x20xf32>
    %235 = arith.divf %233, %234 : vector<2x20xf32>
    %236 = vector.extract_strided_slice %229 {offsets = [0, 20], sizes = [2, 20], strides = [1, 1]} : vector<2x80xf32> to vector<2x20xf32>
    %237 = arith.negf %236 : vector<2x20xf32>
    %238 = math.exp %237 : vector<2x20xf32>
    %cst_107 = arith.constant 1.000000e+00 : f32
    %239 = vector.broadcast %cst_107 : f32 to vector<2x20xf32>
    %240 = arith.addf %239, %238 : vector<2x20xf32>
    %241 = arith.divf %239, %240 : vector<2x20xf32>
    %242 = vector.extract_strided_slice %229 {offsets = [0, 40], sizes = [2, 20], strides = [1, 1]} : vector<2x80xf32> to vector<2x20xf32>
    %243 = math.tanh %242 : vector<2x20xf32>
    %244 = vector.extract_strided_slice %229 {offsets = [0, 60], sizes = [2, 20], strides = [1, 1]} : vector<2x80xf32> to vector<2x20xf32>
    %245 = arith.negf %244 : vector<2x20xf32>
    %246 = math.exp %245 : vector<2x20xf32>
    %cst_108 = arith.constant 1.000000e+00 : f32
    %247 = vector.broadcast %cst_108 : f32 to vector<2x20xf32>
    %248 = arith.addf %247, %246 : vector<2x20xf32>
    %249 = arith.divf %247, %248 : vector<2x20xf32>
    %250 = arith.mulf %241, %215 : vector<2x20xf32>
    %251 = arith.mulf %235, %243 : vector<2x20xf32>
    %252 = arith.addf %250, %251 : vector<2x20xf32>
    %253 = math.tanh %252 : vector<2x20xf32>
    %254 = arith.mulf %249, %253 : vector<2x20xf32>
    %cst_109 = arith.constant 0.000000e+00 : f32
    %255 = vector.broadcast %cst_109 : f32 to vector<2x20xf32>
    %256 = arith.cmpf oge, %254, %255 : vector<2x20xf32>
    %cst_110 = arith.constant 0.00999999977 : f32
    %257 = vector.broadcast %cst_110 : f32 to vector<2x20xf32>
    %258 = arith.mulf %257, %254 : vector<2x20xf32>
    %259 = arith.select %256, %254, %258 : vector<2x20xi1>, vector<2x20xf32>
    %c3_111 = arith.constant 3 : index
    %c0_112 = arith.constant 0 : index
    %c0_113 = arith.constant 0 : index
    %260 = vector.load %arg19[%c3_111, %c0_112, %c0_113] : memref<13x20x52xf32, #tpu.memory_space<vmem>>, vector<1x20x52xf32>
    %261 = vector.shape_cast %260 : vector<1x20x52xf32> to vector<20x52xf32>
    %cst_114 = arith.constant dense<0.000000e+00> : vector<2x52xf32>
    %262 = tpu.matmul %259, %261, %cst_114 {dimension_numbers = #tpu.dot_dimension_numbers<[1], [0], [0], [1], [0, 0, 1, 1], [], []>} : vector<2x20xf32>, vector<20x52xf32>, vector<2x52xf32> -> vector<2x52xf32>
    %263 = arith.addf %226, %262 : vector<2x52xf32>
    %264 = vector.extract_strided_slice %111 {offsets = [0, 512], sizes = [2, 80], strides = [1, 1]} : vector<2x1664xf32> to vector<2x80xf32>
    %cst_115 = arith.constant dense<0.000000e+00> : vector<2x80xf32>
    %265 = tpu.matmul %254, %112, %cst_115 {dimension_numbers = #tpu.dot_dimension_numbers<[1], [0], [0], [1], [0, 0, 1, 1], [], []>} : vector<2x20xf32>, vector<20x80xf32>, vector<2x80xf32> -> vector<2x80xf32>
    %266 = arith.addf %264, %265 : vector<2x80xf32>
    %267 = vector.extract_strided_slice %266 {offsets = [0, 0], sizes = [2, 20], strides = [1, 1]} : vector<2x80xf32> to vector<2x20xf32>
    %268 = arith.negf %267 : vector<2x20xf32>
    %269 = math.exp %268 : vector<2x20xf32>
    %cst_116 = arith.constant 1.000000e+00 : f32
    %270 = vector.broadcast %cst_116 : f32 to vector<2x20xf32>
    %271 = arith.addf %270, %269 : vector<2x20xf32>
    %272 = arith.divf %270, %271 : vector<2x20xf32>
    %273 = vector.extract_strided_slice %266 {offsets = [0, 20], sizes = [2, 20], strides = [1, 1]} : vector<2x80xf32> to vector<2x20xf32>
    %274 = arith.negf %273 : vector<2x20xf32>
    %275 = math.exp %274 : vector<2x20xf32>
    %cst_117 = arith.constant 1.000000e+00 : f32
    %276 = vector.broadcast %cst_117 : f32 to vector<2x20xf32>
    %277 = arith.addf %276, %275 : vector<2x20xf32>
    %278 = arith.divf %276, %277 : vector<2x20xf32>
    %279 = vector.extract_strided_slice %266 {offsets = [0, 40], sizes = [2, 20], strides = [1, 1]} : vector<2x80xf32> to vector<2x20xf32>
    %280 = math.tanh %279 : vector<2x20xf32>
    %281 = vector.extract_strided_slice %266 {offsets = [0, 60], sizes = [2, 20], strides = [1, 1]} : vector<2x80xf32> to vector<2x20xf32>
    %282 = arith.negf %281 : vector<2x20xf32>
    %283 = math.exp %282 : vector<2x20xf32>
    %cst_118 = arith.constant 1.000000e+00 : f32
    %284 = vector.broadcast %cst_118 : f32 to vector<2x20xf32>
    %285 = arith.addf %284, %283 : vector<2x20xf32>
    %286 = arith.divf %284, %285 : vector<2x20xf32>
    %287 = arith.mulf %278, %252 : vector<2x20xf32>
    %288 = arith.mulf %272, %280 : vector<2x20xf32>
    %289 = arith.addf %287, %288 : vector<2x20xf32>
    %290 = math.tanh %289 : vector<2x20xf32>
    %291 = arith.mulf %286, %290 : vector<2x20xf32>
    %cst_119 = arith.constant 0.000000e+00 : f32
    %292 = vector.broadcast %cst_119 : f32 to vector<2x20xf32>
    %293 = arith.cmpf oge, %291, %292 : vector<2x20xf32>
    %cst_120 = arith.constant 0.00999999977 : f32
    %294 = vector.broadcast %cst_120 : f32 to vector<2x20xf32>
    %295 = arith.mulf %294, %291 : vector<2x20xf32>
    %296 = arith.select %293, %291, %295 : vector<2x20xi1>, vector<2x20xf32>
    %c4 = arith.constant 4 : index
    %c0_121 = arith.constant 0 : index
    %c0_122 = arith.constant 0 : index
    %297 = vector.load %arg19[%c4, %c0_121, %c0_122] : memref<13x20x52xf32, #tpu.memory_space<vmem>>, vector<1x20x52xf32>
    %298 = vector.shape_cast %297 : vector<1x20x52xf32> to vector<20x52xf32>
    %cst_123 = arith.constant dense<0.000000e+00> : vector<2x52xf32>
    %299 = tpu.matmul %296, %298, %cst_123 {dimension_numbers = #tpu.dot_dimension_numbers<[1], [0], [0], [1], [0, 0, 1, 1], [], []>} : vector<2x20xf32>, vector<20x52xf32>, vector<2x52xf32> -> vector<2x52xf32>
    %300 = arith.addf %263, %299 : vector<2x52xf32>
    %301 = vector.extract_strided_slice %111 {offsets = [0, 640], sizes = [2, 80], strides = [1, 1]} : vector<2x1664xf32> to vector<2x80xf32>
    %cst_124 = arith.constant dense<0.000000e+00> : vector<2x80xf32>
    %302 = tpu.matmul %291, %112, %cst_124 {dimension_numbers = #tpu.dot_dimension_numbers<[1], [0], [0], [1], [0, 0, 1, 1], [], []>} : vector<2x20xf32>, vector<20x80xf32>, vector<2x80xf32> -> vector<2x80xf32>
    %303 = arith.addf %301, %302 : vector<2x80xf32>
    %304 = vector.extract_strided_slice %303 {offsets = [0, 0], sizes = [2, 20], strides = [1, 1]} : vector<2x80xf32> to vector<2x20xf32>
    %305 = arith.negf %304 : vector<2x20xf32>
    %306 = math.exp %305 : vector<2x20xf32>
    %cst_125 = arith.constant 1.000000e+00 : f32
    %307 = vector.broadcast %cst_125 : f32 to vector<2x20xf32>
    %308 = arith.addf %307, %306 : vector<2x20xf32>
    %309 = arith.divf %307, %308 : vector<2x20xf32>
    %310 = vector.extract_strided_slice %303 {offsets = [0, 20], sizes = [2, 20], strides = [1, 1]} : vector<2x80xf32> to vector<2x20xf32>
    %311 = arith.negf %310 : vector<2x20xf32>
    %312 = math.exp %311 : vector<2x20xf32>
    %cst_126 = arith.constant 1.000000e+00 : f32
    %313 = vector.broadcast %cst_126 : f32 to vector<2x20xf32>
    %314 = arith.addf %313, %312 : vector<2x20xf32>
    %315 = arith.divf %313, %314 : vector<2x20xf32>
    %316 = vector.extract_strided_slice %303 {offsets = [0, 40], sizes = [2, 20], strides = [1, 1]} : vector<2x80xf32> to vector<2x20xf32>
    %317 = math.tanh %316 : vector<2x20xf32>
    %318 = vector.extract_strided_slice %303 {offsets = [0, 60], sizes = [2, 20], strides = [1, 1]} : vector<2x80xf32> to vector<2x20xf32>
    %319 = arith.negf %318 : vector<2x20xf32>
    %320 = math.exp %319 : vector<2x20xf32>
    %cst_127 = arith.constant 1.000000e+00 : f32
    %321 = vector.broadcast %cst_127 : f32 to vector<2x20xf32>
    %322 = arith.addf %321, %320 : vector<2x20xf32>
    %323 = arith.divf %321, %322 : vector<2x20xf32>
    %324 = arith.mulf %315, %289 : vector<2x20xf32>
    %325 = arith.mulf %309, %317 : vector<2x20xf32>
    %326 = arith.addf %324, %325 : vector<2x20xf32>
    %327 = math.tanh %326 : vector<2x20xf32>
    %328 = arith.mulf %323, %327 : vector<2x20xf32>
    %cst_128 = arith.constant 0.000000e+00 : f32
    %329 = vector.broadcast %cst_128 : f32 to vector<2x20xf32>
    %330 = arith.cmpf oge, %328, %329 : vector<2x20xf32>
    %cst_129 = arith.constant 0.00999999977 : f32
    %331 = vector.broadcast %cst_129 : f32 to vector<2x20xf32>
    %332 = arith.mulf %331, %328 : vector<2x20xf32>
    %333 = arith.select %330, %328, %332 : vector<2x20xi1>, vector<2x20xf32>
    %c5 = arith.constant 5 : index
    %c0_130 = arith.constant 0 : index
    %c0_131 = arith.constant 0 : index
    %334 = vector.load %arg19[%c5, %c0_130, %c0_131] : memref<13x20x52xf32, #tpu.memory_space<vmem>>, vector<1x20x52xf32>
    %335 = vector.shape_cast %334 : vector<1x20x52xf32> to vector<20x52xf32>
    %cst_132 = arith.constant dense<0.000000e+00> : vector<2x52xf32>
    %336 = tpu.matmul %333, %335, %cst_132 {dimension_numbers = #tpu.dot_dimension_numbers<[1], [0], [0], [1], [0, 0, 1, 1], [], []>} : vector<2x20xf32>, vector<20x52xf32>, vector<2x52xf32> -> vector<2x52xf32>
    %337 = arith.addf %300, %336 : vector<2x52xf32>
    %338 = vector.extract_strided_slice %111 {offsets = [0, 768], sizes = [2, 80], strides = [1, 1]} : vector<2x1664xf32> to vector<2x80xf32>
    %cst_133 = arith.constant dense<0.000000e+00> : vector<2x80xf32>
    %339 = tpu.matmul %328, %112, %cst_133 {dimension_numbers = #tpu.dot_dimension_numbers<[1], [0], [0], [1], [0, 0, 1, 1], [], []>} : vector<2x20xf32>, vector<20x80xf32>, vector<2x80xf32> -> vector<2x80xf32>
    %340 = arith.addf %338, %339 : vector<2x80xf32>
    %341 = vector.extract_strided_slice %340 {offsets = [0, 0], sizes = [2, 20], strides = [1, 1]} : vector<2x80xf32> to vector<2x20xf32>
    %342 = arith.negf %341 : vector<2x20xf32>
    %343 = math.exp %342 : vector<2x20xf32>
    %cst_134 = arith.constant 1.000000e+00 : f32
    %344 = vector.broadcast %cst_134 : f32 to vector<2x20xf32>
    %345 = arith.addf %344, %343 : vector<2x20xf32>
    %346 = arith.divf %344, %345 : vector<2x20xf32>
    %347 = vector.extract_strided_slice %340 {offsets = [0, 20], sizes = [2, 20], strides = [1, 1]} : vector<2x80xf32> to vector<2x20xf32>
    %348 = arith.negf %347 : vector<2x20xf32>
    %349 = math.exp %348 : vector<2x20xf32>
    %cst_135 = arith.constant 1.000000e+00 : f32
    %350 = vector.broadcast %cst_135 : f32 to vector<2x20xf32>
    %351 = arith.addf %350, %349 : vector<2x20xf32>
    %352 = arith.divf %350, %351 : vector<2x20xf32>
    %353 = vector.extract_strided_slice %340 {offsets = [0, 40], sizes = [2, 20], strides = [1, 1]} : vector<2x80xf32> to vector<2x20xf32>
    %354 = math.tanh %353 : vector<2x20xf32>
    %355 = vector.extract_strided_slice %340 {offsets = [0, 60], sizes = [2, 20], strides = [1, 1]} : vector<2x80xf32> to vector<2x20xf32>
    %356 = arith.negf %355 : vector<2x20xf32>
    %357 = math.exp %356 : vector<2x20xf32>
    %cst_136 = arith.constant 1.000000e+00 : f32
    %358 = vector.broadcast %cst_136 : f32 to vector<2x20xf32>
    %359 = arith.addf %358, %357 : vector<2x20xf32>
    %360 = arith.divf %358, %359 : vector<2x20xf32>
    %361 = arith.mulf %352, %326 : vector<2x20xf32>
    %362 = arith.mulf %346, %354 : vector<2x20xf32>
    %363 = arith.addf %361, %362 : vector<2x20xf32>
    %364 = math.tanh %363 : vector<2x20xf32>
    %365 = arith.mulf %360, %364 : vector<2x20xf32>
    %cst_137 = arith.constant 0.000000e+00 : f32
    %366 = vector.broadcast %cst_137 : f32 to vector<2x20xf32>
    %367 = arith.cmpf oge, %365, %366 : vector<2x20xf32>
    %cst_138 = arith.constant 0.00999999977 : f32
    %368 = vector.broadcast %cst_138 : f32 to vector<2x20xf32>
    %369 = arith.mulf %368, %365 : vector<2x20xf32>
    %370 = arith.select %367, %365, %369 : vector<2x20xi1>, vector<2x20xf32>
    %c6 = arith.constant 6 : index
    %c0_139 = arith.constant 0 : index
    %c0_140 = arith.constant 0 : index
    %371 = vector.load %arg19[%c6, %c0_139, %c0_140] : memref<13x20x52xf32, #tpu.memory_space<vmem>>, vector<1x20x52xf32>
    %372 = vector.shape_cast %371 : vector<1x20x52xf32> to vector<20x52xf32>
    %cst_141 = arith.constant dense<0.000000e+00> : vector<2x52xf32>
    %373 = tpu.matmul %370, %372, %cst_141 {dimension_numbers = #tpu.dot_dimension_numbers<[1], [0], [0], [1], [0, 0, 1, 1], [], []>} : vector<2x20xf32>, vector<20x52xf32>, vector<2x52xf32> -> vector<2x52xf32>
    %374 = arith.addf %337, %373 : vector<2x52xf32>
    %375 = vector.extract_strided_slice %111 {offsets = [0, 896], sizes = [2, 80], strides = [1, 1]} : vector<2x1664xf32> to vector<2x80xf32>
    %cst_142 = arith.constant dense<0.000000e+00> : vector<2x80xf32>
    %376 = tpu.matmul %365, %112, %cst_142 {dimension_numbers = #tpu.dot_dimension_numbers<[1], [0], [0], [1], [0, 0, 1, 1], [], []>} : vector<2x20xf32>, vector<20x80xf32>, vector<2x80xf32> -> vector<2x80xf32>
    %377 = arith.addf %375, %376 : vector<2x80xf32>
    %378 = vector.extract_strided_slice %377 {offsets = [0, 0], sizes = [2, 20], strides = [1, 1]} : vector<2x80xf32> to vector<2x20xf32>
    %379 = arith.negf %378 : vector<2x20xf32>
    %380 = math.exp %379 : vector<2x20xf32>
    %cst_143 = arith.constant 1.000000e+00 : f32
    %381 = vector.broadcast %cst_143 : f32 to vector<2x20xf32>
    %382 = arith.addf %381, %380 : vector<2x20xf32>
    %383 = arith.divf %381, %382 : vector<2x20xf32>
    %384 = vector.extract_strided_slice %377 {offsets = [0, 20], sizes = [2, 20], strides = [1, 1]} : vector<2x80xf32> to vector<2x20xf32>
    %385 = arith.negf %384 : vector<2x20xf32>
    %386 = math.exp %385 : vector<2x20xf32>
    %cst_144 = arith.constant 1.000000e+00 : f32
    %387 = vector.broadcast %cst_144 : f32 to vector<2x20xf32>
    %388 = arith.addf %387, %386 : vector<2x20xf32>
    %389 = arith.divf %387, %388 : vector<2x20xf32>
    %390 = vector.extract_strided_slice %377 {offsets = [0, 40], sizes = [2, 20], strides = [1, 1]} : vector<2x80xf32> to vector<2x20xf32>
    %391 = math.tanh %390 : vector<2x20xf32>
    %392 = vector.extract_strided_slice %377 {offsets = [0, 60], sizes = [2, 20], strides = [1, 1]} : vector<2x80xf32> to vector<2x20xf32>
    %393 = arith.negf %392 : vector<2x20xf32>
    %394 = math.exp %393 : vector<2x20xf32>
    %cst_145 = arith.constant 1.000000e+00 : f32
    %395 = vector.broadcast %cst_145 : f32 to vector<2x20xf32>
    %396 = arith.addf %395, %394 : vector<2x20xf32>
    %397 = arith.divf %395, %396 : vector<2x20xf32>
    %398 = arith.mulf %389, %363 : vector<2x20xf32>
    %399 = arith.mulf %383, %391 : vector<2x20xf32>
    %400 = arith.addf %398, %399 : vector<2x20xf32>
    %401 = math.tanh %400 : vector<2x20xf32>
    %402 = arith.mulf %397, %401 : vector<2x20xf32>
    %cst_146 = arith.constant 0.000000e+00 : f32
    %403 = vector.broadcast %cst_146 : f32 to vector<2x20xf32>
    %404 = arith.cmpf oge, %402, %403 : vector<2x20xf32>
    %cst_147 = arith.constant 0.00999999977 : f32
    %405 = vector.broadcast %cst_147 : f32 to vector<2x20xf32>
    %406 = arith.mulf %405, %402 : vector<2x20xf32>
    %407 = arith.select %404, %402, %406 : vector<2x20xi1>, vector<2x20xf32>
    %c7 = arith.constant 7 : index
    %c0_148 = arith.constant 0 : index
    %c0_149 = arith.constant 0 : index
    %408 = vector.load %arg19[%c7, %c0_148, %c0_149] : memref<13x20x52xf32, #tpu.memory_space<vmem>>, vector<1x20x52xf32>
    %409 = vector.shape_cast %408 : vector<1x20x52xf32> to vector<20x52xf32>
    %cst_150 = arith.constant dense<0.000000e+00> : vector<2x52xf32>
    %410 = tpu.matmul %407, %409, %cst_150 {dimension_numbers = #tpu.dot_dimension_numbers<[1], [0], [0], [1], [0, 0, 1, 1], [], []>} : vector<2x20xf32>, vector<20x52xf32>, vector<2x52xf32> -> vector<2x52xf32>
    %411 = arith.addf %374, %410 : vector<2x52xf32>
    %412 = vector.extract_strided_slice %111 {offsets = [0, 1024], sizes = [2, 80], strides = [1, 1]} : vector<2x1664xf32> to vector<2x80xf32>
    %cst_151 = arith.constant dense<0.000000e+00> : vector<2x80xf32>
    %413 = tpu.matmul %402, %112, %cst_151 {dimension_numbers = #tpu.dot_dimension_numbers<[1], [0], [0], [1], [0, 0, 1, 1], [], []>} : vector<2x20xf32>, vector<20x80xf32>, vector<2x80xf32> -> vector<2x80xf32>
    %414 = arith.addf %412, %413 : vector<2x80xf32>
    %415 = vector.extract_strided_slice %414 {offsets = [0, 0], sizes = [2, 20], strides = [1, 1]} : vector<2x80xf32> to vector<2x20xf32>
    %416 = arith.negf %415 : vector<2x20xf32>
    %417 = math.exp %416 : vector<2x20xf32>
    %cst_152 = arith.constant 1.000000e+00 : f32
    %418 = vector.broadcast %cst_152 : f32 to vector<2x20xf32>
    %419 = arith.addf %418, %417 : vector<2x20xf32>
    %420 = arith.divf %418, %419 : vector<2x20xf32>
    %421 = vector.extract_strided_slice %414 {offsets = [0, 20], sizes = [2, 20], strides = [1, 1]} : vector<2x80xf32> to vector<2x20xf32>
    %422 = arith.negf %421 : vector<2x20xf32>
    %423 = math.exp %422 : vector<2x20xf32>
    %cst_153 = arith.constant 1.000000e+00 : f32
    %424 = vector.broadcast %cst_153 : f32 to vector<2x20xf32>
    %425 = arith.addf %424, %423 : vector<2x20xf32>
    %426 = arith.divf %424, %425 : vector<2x20xf32>
    %427 = vector.extract_strided_slice %414 {offsets = [0, 40], sizes = [2, 20], strides = [1, 1]} : vector<2x80xf32> to vector<2x20xf32>
    %428 = math.tanh %427 : vector<2x20xf32>
    %429 = vector.extract_strided_slice %414 {offsets = [0, 60], sizes = [2, 20], strides = [1, 1]} : vector<2x80xf32> to vector<2x20xf32>
    %430 = arith.negf %429 : vector<2x20xf32>
    %431 = math.exp %430 : vector<2x20xf32>
    %cst_154 = arith.constant 1.000000e+00 : f32
    %432 = vector.broadcast %cst_154 : f32 to vector<2x20xf32>
    %433 = arith.addf %432, %431 : vector<2x20xf32>
    %434 = arith.divf %432, %433 : vector<2x20xf32>
    %435 = arith.mulf %426, %400 : vector<2x20xf32>
    %436 = arith.mulf %420, %428 : vector<2x20xf32>
    %437 = arith.addf %435, %436 : vector<2x20xf32>
    %438 = math.tanh %437 : vector<2x20xf32>
    %439 = arith.mulf %434, %438 : vector<2x20xf32>
    %cst_155 = arith.constant 0.000000e+00 : f32
    %440 = vector.broadcast %cst_155 : f32 to vector<2x20xf32>
    %441 = arith.cmpf oge, %439, %440 : vector<2x20xf32>
    %cst_156 = arith.constant 0.00999999977 : f32
    %442 = vector.broadcast %cst_156 : f32 to vector<2x20xf32>
    %443 = arith.mulf %442, %439 : vector<2x20xf32>
    %444 = arith.select %441, %439, %443 : vector<2x20xi1>, vector<2x20xf32>
    %c8 = arith.constant 8 : index
    %c0_157 = arith.constant 0 : index
    %c0_158 = arith.constant 0 : index
    %445 = vector.load %arg19[%c8, %c0_157, %c0_158] : memref<13x20x52xf32, #tpu.memory_space<vmem>>, vector<1x20x52xf32>
    %446 = vector.shape_cast %445 : vector<1x20x52xf32> to vector<20x52xf32>
    %cst_159 = arith.constant dense<0.000000e+00> : vector<2x52xf32>
    %447 = tpu.matmul %444, %446, %cst_159 {dimension_numbers = #tpu.dot_dimension_numbers<[1], [0], [0], [1], [0, 0, 1, 1], [], []>} : vector<2x20xf32>, vector<20x52xf32>, vector<2x52xf32> -> vector<2x52xf32>
    %448 = arith.addf %411, %447 : vector<2x52xf32>
    %449 = vector.extract_strided_slice %111 {offsets = [0, 1152], sizes = [2, 80], strides = [1, 1]} : vector<2x1664xf32> to vector<2x80xf32>
    %cst_160 = arith.constant dense<0.000000e+00> : vector<2x80xf32>
    %450 = tpu.matmul %439, %112, %cst_160 {dimension_numbers = #tpu.dot_dimension_numbers<[1], [0], [0], [1], [0, 0, 1, 1], [], []>} : vector<2x20xf32>, vector<20x80xf32>, vector<2x80xf32> -> vector<2x80xf32>
    %451 = arith.addf %449, %450 : vector<2x80xf32>
    %452 = vector.extract_strided_slice %451 {offsets = [0, 0], sizes = [2, 20], strides = [1, 1]} : vector<2x80xf32> to vector<2x20xf32>
    %453 = arith.negf %452 : vector<2x20xf32>
    %454 = math.exp %453 : vector<2x20xf32>
    %cst_161 = arith.constant 1.000000e+00 : f32
    %455 = vector.broadcast %cst_161 : f32 to vector<2x20xf32>
    %456 = arith.addf %455, %454 : vector<2x20xf32>
    %457 = arith.divf %455, %456 : vector<2x20xf32>
    %458 = vector.extract_strided_slice %451 {offsets = [0, 20], sizes = [2, 20], strides = [1, 1]} : vector<2x80xf32> to vector<2x20xf32>
    %459 = arith.negf %458 : vector<2x20xf32>
    %460 = math.exp %459 : vector<2x20xf32>
    %cst_162 = arith.constant 1.000000e+00 : f32
    %461 = vector.broadcast %cst_162 : f32 to vector<2x20xf32>
    %462 = arith.addf %461, %460 : vector<2x20xf32>
    %463 = arith.divf %461, %462 : vector<2x20xf32>
    %464 = vector.extract_strided_slice %451 {offsets = [0, 40], sizes = [2, 20], strides = [1, 1]} : vector<2x80xf32> to vector<2x20xf32>
    %465 = math.tanh %464 : vector<2x20xf32>
    %466 = vector.extract_strided_slice %451 {offsets = [0, 60], sizes = [2, 20], strides = [1, 1]} : vector<2x80xf32> to vector<2x20xf32>
    %467 = arith.negf %466 : vector<2x20xf32>
    %468 = math.exp %467 : vector<2x20xf32>
    %cst_163 = arith.constant 1.000000e+00 : f32
    %469 = vector.broadcast %cst_163 : f32 to vector<2x20xf32>
    %470 = arith.addf %469, %468 : vector<2x20xf32>
    %471 = arith.divf %469, %470 : vector<2x20xf32>
    %472 = arith.mulf %463, %437 : vector<2x20xf32>
    %473 = arith.mulf %457, %465 : vector<2x20xf32>
    %474 = arith.addf %472, %473 : vector<2x20xf32>
    %475 = math.tanh %474 : vector<2x20xf32>
    %476 = arith.mulf %471, %475 : vector<2x20xf32>
    %cst_164 = arith.constant 0.000000e+00 : f32
    %477 = vector.broadcast %cst_164 : f32 to vector<2x20xf32>
    %478 = arith.cmpf oge, %476, %477 : vector<2x20xf32>
    %cst_165 = arith.constant 0.00999999977 : f32
    %479 = vector.broadcast %cst_165 : f32 to vector<2x20xf32>
    %480 = arith.mulf %479, %476 : vector<2x20xf32>
    %481 = arith.select %478, %476, %480 : vector<2x20xi1>, vector<2x20xf32>
    %c9 = arith.constant 9 : index
    %c0_166 = arith.constant 0 : index
    %c0_167 = arith.constant 0 : index
    %482 = vector.load %arg19[%c9, %c0_166, %c0_167] : memref<13x20x52xf32, #tpu.memory_space<vmem>>, vector<1x20x52xf32>
    %483 = vector.shape_cast %482 : vector<1x20x52xf32> to vector<20x52xf32>
    %cst_168 = arith.constant dense<0.000000e+00> : vector<2x52xf32>
    %484 = tpu.matmul %481, %483, %cst_168 {dimension_numbers = #tpu.dot_dimension_numbers<[1], [0], [0], [1], [0, 0, 1, 1], [], []>} : vector<2x20xf32>, vector<20x52xf32>, vector<2x52xf32> -> vector<2x52xf32>
    %485 = arith.addf %448, %484 : vector<2x52xf32>
    %486 = vector.extract_strided_slice %111 {offsets = [0, 1280], sizes = [2, 80], strides = [1, 1]} : vector<2x1664xf32> to vector<2x80xf32>
    %cst_169 = arith.constant dense<0.000000e+00> : vector<2x80xf32>
    %487 = tpu.matmul %476, %112, %cst_169 {dimension_numbers = #tpu.dot_dimension_numbers<[1], [0], [0], [1], [0, 0, 1, 1], [], []>} : vector<2x20xf32>, vector<20x80xf32>, vector<2x80xf32> -> vector<2x80xf32>
    %488 = arith.addf %486, %487 : vector<2x80xf32>
    %489 = vector.extract_strided_slice %488 {offsets = [0, 0], sizes = [2, 20], strides = [1, 1]} : vector<2x80xf32> to vector<2x20xf32>
    %490 = arith.negf %489 : vector<2x20xf32>
    %491 = math.exp %490 : vector<2x20xf32>
    %cst_170 = arith.constant 1.000000e+00 : f32
    %492 = vector.broadcast %cst_170 : f32 to vector<2x20xf32>
    %493 = arith.addf %492, %491 : vector<2x20xf32>
    %494 = arith.divf %492, %493 : vector<2x20xf32>
    %495 = vector.extract_strided_slice %488 {offsets = [0, 20], sizes = [2, 20], strides = [1, 1]} : vector<2x80xf32> to vector<2x20xf32>
    %496 = arith.negf %495 : vector<2x20xf32>
    %497 = math.exp %496 : vector<2x20xf32>
    %cst_171 = arith.constant 1.000000e+00 : f32
    %498 = vector.broadcast %cst_171 : f32 to vector<2x20xf32>
    %499 = arith.addf %498, %497 : vector<2x20xf32>
    %500 = arith.divf %498, %499 : vector<2x20xf32>
    %501 = vector.extract_strided_slice %488 {offsets = [0, 40], sizes = [2, 20], strides = [1, 1]} : vector<2x80xf32> to vector<2x20xf32>
    %502 = math.tanh %501 : vector<2x20xf32>
    %503 = vector.extract_strided_slice %488 {offsets = [0, 60], sizes = [2, 20], strides = [1, 1]} : vector<2x80xf32> to vector<2x20xf32>
    %504 = arith.negf %503 : vector<2x20xf32>
    %505 = math.exp %504 : vector<2x20xf32>
    %cst_172 = arith.constant 1.000000e+00 : f32
    %506 = vector.broadcast %cst_172 : f32 to vector<2x20xf32>
    %507 = arith.addf %506, %505 : vector<2x20xf32>
    %508 = arith.divf %506, %507 : vector<2x20xf32>
    %509 = arith.mulf %500, %474 : vector<2x20xf32>
    %510 = arith.mulf %494, %502 : vector<2x20xf32>
    %511 = arith.addf %509, %510 : vector<2x20xf32>
    %512 = math.tanh %511 : vector<2x20xf32>
    %513 = arith.mulf %508, %512 : vector<2x20xf32>
    %cst_173 = arith.constant 0.000000e+00 : f32
    %514 = vector.broadcast %cst_173 : f32 to vector<2x20xf32>
    %515 = arith.cmpf oge, %513, %514 : vector<2x20xf32>
    %cst_174 = arith.constant 0.00999999977 : f32
    %516 = vector.broadcast %cst_174 : f32 to vector<2x20xf32>
    %517 = arith.mulf %516, %513 : vector<2x20xf32>
    %518 = arith.select %515, %513, %517 : vector<2x20xi1>, vector<2x20xf32>
    %c10 = arith.constant 10 : index
    %c0_175 = arith.constant 0 : index
    %c0_176 = arith.constant 0 : index
    %519 = vector.load %arg19[%c10, %c0_175, %c0_176] : memref<13x20x52xf32, #tpu.memory_space<vmem>>, vector<1x20x52xf32>
    %520 = vector.shape_cast %519 : vector<1x20x52xf32> to vector<20x52xf32>
    %cst_177 = arith.constant dense<0.000000e+00> : vector<2x52xf32>
    %521 = tpu.matmul %518, %520, %cst_177 {dimension_numbers = #tpu.dot_dimension_numbers<[1], [0], [0], [1], [0, 0, 1, 1], [], []>} : vector<2x20xf32>, vector<20x52xf32>, vector<2x52xf32> -> vector<2x52xf32>
    %522 = arith.addf %485, %521 : vector<2x52xf32>
    %523 = vector.extract_strided_slice %111 {offsets = [0, 1408], sizes = [2, 80], strides = [1, 1]} : vector<2x1664xf32> to vector<2x80xf32>
    %cst_178 = arith.constant dense<0.000000e+00> : vector<2x80xf32>
    %524 = tpu.matmul %513, %112, %cst_178 {dimension_numbers = #tpu.dot_dimension_numbers<[1], [0], [0], [1], [0, 0, 1, 1], [], []>} : vector<2x20xf32>, vector<20x80xf32>, vector<2x80xf32> -> vector<2x80xf32>
    %525 = arith.addf %523, %524 : vector<2x80xf32>
    %526 = vector.extract_strided_slice %525 {offsets = [0, 0], sizes = [2, 20], strides = [1, 1]} : vector<2x80xf32> to vector<2x20xf32>
    %527 = arith.negf %526 : vector<2x20xf32>
    %528 = math.exp %527 : vector<2x20xf32>
    %cst_179 = arith.constant 1.000000e+00 : f32
    %529 = vector.broadcast %cst_179 : f32 to vector<2x20xf32>
    %530 = arith.addf %529, %528 : vector<2x20xf32>
    %531 = arith.divf %529, %530 : vector<2x20xf32>
    %532 = vector.extract_strided_slice %525 {offsets = [0, 20], sizes = [2, 20], strides = [1, 1]} : vector<2x80xf32> to vector<2x20xf32>
    %533 = arith.negf %532 : vector<2x20xf32>
    %534 = math.exp %533 : vector<2x20xf32>
    %cst_180 = arith.constant 1.000000e+00 : f32
    %535 = vector.broadcast %cst_180 : f32 to vector<2x20xf32>
    %536 = arith.addf %535, %534 : vector<2x20xf32>
    %537 = arith.divf %535, %536 : vector<2x20xf32>
    %538 = vector.extract_strided_slice %525 {offsets = [0, 40], sizes = [2, 20], strides = [1, 1]} : vector<2x80xf32> to vector<2x20xf32>
    %539 = math.tanh %538 : vector<2x20xf32>
    %540 = vector.extract_strided_slice %525 {offsets = [0, 60], sizes = [2, 20], strides = [1, 1]} : vector<2x80xf32> to vector<2x20xf32>
    %541 = arith.negf %540 : vector<2x20xf32>
    %542 = math.exp %541 : vector<2x20xf32>
    %cst_181 = arith.constant 1.000000e+00 : f32
    %543 = vector.broadcast %cst_181 : f32 to vector<2x20xf32>
    %544 = arith.addf %543, %542 : vector<2x20xf32>
    %545 = arith.divf %543, %544 : vector<2x20xf32>
    %546 = arith.mulf %537, %511 : vector<2x20xf32>
    %547 = arith.mulf %531, %539 : vector<2x20xf32>
    %548 = arith.addf %546, %547 : vector<2x20xf32>
    %549 = math.tanh %548 : vector<2x20xf32>
    %550 = arith.mulf %545, %549 : vector<2x20xf32>
    %cst_182 = arith.constant 0.000000e+00 : f32
    %551 = vector.broadcast %cst_182 : f32 to vector<2x20xf32>
    %552 = arith.cmpf oge, %550, %551 : vector<2x20xf32>
    %cst_183 = arith.constant 0.00999999977 : f32
    %553 = vector.broadcast %cst_183 : f32 to vector<2x20xf32>
    %554 = arith.mulf %553, %550 : vector<2x20xf32>
    %555 = arith.select %552, %550, %554 : vector<2x20xi1>, vector<2x20xf32>
    %c11 = arith.constant 11 : index
    %c0_184 = arith.constant 0 : index
    %c0_185 = arith.constant 0 : index
    %556 = vector.load %arg19[%c11, %c0_184, %c0_185] : memref<13x20x52xf32, #tpu.memory_space<vmem>>, vector<1x20x52xf32>
    %557 = vector.shape_cast %556 : vector<1x20x52xf32> to vector<20x52xf32>
    %cst_186 = arith.constant dense<0.000000e+00> : vector<2x52xf32>
    %558 = tpu.matmul %555, %557, %cst_186 {dimension_numbers = #tpu.dot_dimension_numbers<[1], [0], [0], [1], [0, 0, 1, 1], [], []>} : vector<2x20xf32>, vector<20x52xf32>, vector<2x52xf32> -> vector<2x52xf32>
    %559 = arith.addf %522, %558 : vector<2x52xf32>
    %560 = vector.extract_strided_slice %111 {offsets = [0, 1536], sizes = [2, 80], strides = [1, 1]} : vector<2x1664xf32> to vector<2x80xf32>
    %cst_187 = arith.constant dense<0.000000e+00> : vector<2x80xf32>
    %561 = tpu.matmul %550, %112, %cst_187 {dimension_numbers = #tpu.dot_dimension_numbers<[1], [0], [0], [1], [0, 0, 1, 1], [], []>} : vector<2x20xf32>, vector<20x80xf32>, vector<2x80xf32> -> vector<2x80xf32>
    %562 = arith.addf %560, %561 : vector<2x80xf32>
    %563 = vector.extract_strided_slice %562 {offsets = [0, 0], sizes = [2, 20], strides = [1, 1]} : vector<2x80xf32> to vector<2x20xf32>
    %564 = arith.negf %563 : vector<2x20xf32>
    %565 = math.exp %564 : vector<2x20xf32>
    %cst_188 = arith.constant 1.000000e+00 : f32
    %566 = vector.broadcast %cst_188 : f32 to vector<2x20xf32>
    %567 = arith.addf %566, %565 : vector<2x20xf32>
    %568 = arith.divf %566, %567 : vector<2x20xf32>
    %569 = vector.extract_strided_slice %562 {offsets = [0, 20], sizes = [2, 20], strides = [1, 1]} : vector<2x80xf32> to vector<2x20xf32>
    %570 = arith.negf %569 : vector<2x20xf32>
    %571 = math.exp %570 : vector<2x20xf32>
    %cst_189 = arith.constant 1.000000e+00 : f32
    %572 = vector.broadcast %cst_189 : f32 to vector<2x20xf32>
    %573 = arith.addf %572, %571 : vector<2x20xf32>
    %574 = arith.divf %572, %573 : vector<2x20xf32>
    %575 = vector.extract_strided_slice %562 {offsets = [0, 40], sizes = [2, 20], strides = [1, 1]} : vector<2x80xf32> to vector<2x20xf32>
    %576 = math.tanh %575 : vector<2x20xf32>
    %577 = vector.extract_strided_slice %562 {offsets = [0, 60], sizes = [2, 20], strides = [1, 1]} : vector<2x80xf32> to vector<2x20xf32>
    %578 = arith.negf %577 : vector<2x20xf32>
    %579 = math.exp %578 : vector<2x20xf32>
    %cst_190 = arith.constant 1.000000e+00 : f32
    %580 = vector.broadcast %cst_190 : f32 to vector<2x20xf32>
    %581 = arith.addf %580, %579 : vector<2x20xf32>
    %582 = arith.divf %580, %581 : vector<2x20xf32>
    %583 = arith.mulf %574, %548 : vector<2x20xf32>
    %584 = arith.mulf %568, %576 : vector<2x20xf32>
    %585 = arith.addf %583, %584 : vector<2x20xf32>
    %586 = math.tanh %585 : vector<2x20xf32>
    %587 = arith.mulf %582, %586 : vector<2x20xf32>
    %cst_191 = arith.constant 0.000000e+00 : f32
    %588 = vector.broadcast %cst_191 : f32 to vector<2x20xf32>
    %589 = arith.cmpf oge, %587, %588 : vector<2x20xf32>
    %cst_192 = arith.constant 0.00999999977 : f32
    %590 = vector.broadcast %cst_192 : f32 to vector<2x20xf32>
    %591 = arith.mulf %590, %587 : vector<2x20xf32>
    %592 = arith.select %589, %587, %591 : vector<2x20xi1>, vector<2x20xf32>
    %c12 = arith.constant 12 : index
    %c0_193 = arith.constant 0 : index
    %c0_194 = arith.constant 0 : index
    %593 = vector.load %arg19[%c12, %c0_193, %c0_194] : memref<13x20x52xf32, #tpu.memory_space<vmem>>, vector<1x20x52xf32>
    %594 = vector.shape_cast %593 : vector<1x20x52xf32> to vector<20x52xf32>
    %cst_195 = arith.constant dense<0.000000e+00> : vector<2x52xf32>
    %595 = tpu.matmul %592, %594, %cst_195 {dimension_numbers = #tpu.dot_dimension_numbers<[1], [0], [0], [1], [0, 0, 1, 1], [], []>} : vector<2x20xf32>, vector<20x52xf32>, vector<2x52xf32> -> vector<2x52xf32>
    %596 = arith.addf %559, %595 : vector<2x52xf32>
    %c0_196 = arith.constant 0 : index
    %c0_197 = arith.constant 0 : index
    %597 = vector.load %arg20[%c0_196, %c0_197] : memref<1x52xf32, #tpu.memory_space<vmem>>, vector<1x52xf32>
    %598 = vector.broadcast %597 : vector<1x52xf32> to vector<2x52xf32>
    %599 = arith.addf %596, %598 : vector<2x52xf32>
    %c0_198 = arith.constant 0 : index
    %c0_199 = arith.constant 0 : index
    %600 = vector.load %arg21[%c0_198, %c0_199] : memref<2x52xf32, #tpu.memory_space<vmem>>, vector<2x52xf32>
    tpu.vector_store %arg21[%c0_198, %c0_199], %599 {strides = array<i32>} : memref<2x52xf32, #tpu.memory_space<vmem>>, vector<2x52xf32>,
    return
  }
}

</mosaic_0001>

<llo_original>
// kernel: ssvae_forward.1
$region0: #{ssvae_forward.1}
  #allocation0 [shape = 'u32[]', space=smem, size = 0x4, offset = 0x4, fixed_abs, tag = 'smem constant byte address 0x4 - core index']
  #allocation1 [shape = 'u32[144,128]{1,0:T(1,128)}', space=vmem, size = 0x12000, scoped, tag = 'internal scratch']
  %s0 = inlined_call_operand.vmem [shape: f32[24,48], index: 0, kind: input, shape index: {}]
  %s1 = inlined_call_operand.vmem [shape: f32[48,20], index: 1, kind: input, shape index: {}]
  %s2 = inlined_call_operand.vmem [shape: f32[1,20], index: 2, kind: input, shape index: {}]
  %s3 = inlined_call_operand.vmem [shape: f32[4,20,54], index: 3, kind: input, shape index: {}]
  %s4 = inlined_call_operand.vmem [shape: f32[1,54], index: 4, kind: input, shape index: {}]
  %s5 = inlined_call_operand.vmem [shape: f32[50,3], index: 5, kind: input, shape index: {}]
  %s6 = inlined_call_operand.vmem [shape: f32[1,3], index: 6, kind: input, shape index: {}]
  %s7 = inlined_call_operand.vmem [shape: f32[2,2], index: 7, kind: input, shape index: {}]
  %s8 = inlined_call_operand.vmem [shape: f32[2,2], index: 8, kind: input, shape index: {}]
  %s9 = inlined_call_operand.vmem [shape: f32[2,50], index: 9, kind: input, shape index: {}]
  %s10 = inlined_call_operand.vmem [shape: f32[3,50], index: 10, kind: input, shape index: {}]
  %s11 = inlined_call_operand.vmem [shape: f32[1,50], index: 11, kind: input, shape index: {}]
  %s12 = inlined_call_operand.vmem [shape: f32[50,40], index: 12, kind: input, shape index: {}]
  %s13 = inlined_call_operand.vmem [shape: f32[1,40], index: 13, kind: input, shape index: {}]
  %s14 = inlined_call_operand.vmem [shape: f32[40,52], index: 14, kind: input, shape index: {}]
  %s15 = inlined_call_operand.vmem [shape: f32[1,52], index: 15, kind: input, shape index: {}]
  %s16 = inlined_call_operand.vmem [shape: f32[52,1664], index: 16, kind: input, shape index: {}]
  %s17 = inlined_call_operand.vmem [shape: f32[1,1664], index: 17, kind: input, shape index: {}]
  %s18 = inlined_call_operand.vmem [shape: f32[20,80], index: 18, kind: input, shape index: {}]
  %s19 = inlined_call_operand.vmem [shape: f32[13,20,52], index: 19, kind: input, shape index: {}]
  %s20 = inlined_call_operand.vmem [shape: f32[1,52], index: 20, kind: input, shape index: {}]
  %s21 = inlined_call_operand.vmem [shape: f32[2,52], index: 21, kind: output, shape index: {0}]
  %s22 = inlined_call_operand.hbm [shape: f32[2,2], index: 22, kind: output, shape index: {1}]
  %s23 = inlined_call_operand.hbm [shape: f32[2,2], index: 23, kind: output, shape index: {2}]
  %s24 = inlined_call_operand.hbm [shape: f32[2,3], index: 24, kind: output, shape index: {3}]
  %25 = xla_tuple %s21, %s22, %s23, %s24
  %s26 = sld [smem:[#allocation0]]
  $region118: #{ssvae_forward.1} parent=0
    _
  %s28 = ssub.s32 1, %s26
  %s29 = scalar_select 0, %s28, %s26
  $region1: #{ssvae_forward.1} parent=0
    #allocation2 [shape = 'u8[1024]{0}', space=vmem, size = 0x400, scoped, tag = 'output window, operand 1, single buffered']
    #allocation3 [shape = 's32[1]{0}', space=sflag, size = 0x4, scoped, tag = 'scoped memory for ssvae_forward.1']
    #allocation4 [shape = 'u8[1024]{0}', space=vmem, size = 0x400, scoped, tag = 'output window, operand 2, single buffered']
    #allocation5 [shape = 's32[1]{0}', space=sflag, size = 0x4, scoped, tag = 'scoped memory for ssvae_forward.1']
    #allocation6 [shape = 'u8[1024]{0}', space=vmem, size = 0x400, scoped, tag = 'output window, operand 3, single buffered']
    %30 = vsyncpa [#allocation3], 0
    %31 = vsyncpa [#allocation5], 0
    // Predicated region
    $region2: #{ssvae_forward.1} parent=1 // pred_check
      _
    $region3: #{ssvae_forward.1} parent=1 // pred_check_branch
      %33 = sbr.rel (0) target = $region5
    $region4: #{ssvae_forward.1} parent=1 // pred_region
      _
    $region5: #{ssvae_forward.1} parent=1 // pred_fallthru
      _
    // Predicated region
    $region6: #{ssvae_forward.1} parent=1 // pred_check
      _
    $region7: #{ssvae_forward.1} parent=1 // pred_check_branch
      %35 = sbr.rel (0) target = $region9
    $region8: #{ssvae_forward.1} parent=1 // pred_region
      _
    $region9: #{ssvae_forward.1} parent=1 // pred_fallthru
      _
    // Predicated region
    $region10: #{ssvae_forward.1} parent=1 // pred_check
      _
    $region11: #{ssvae_forward.1} parent=1 // pred_check_branch
      %37 = sbr.rel (0) target = $region13
    $region12: #{ssvae_forward.1} parent=1 // pred_region
      _
    $region13: #{ssvae_forward.1} parent=1 // pred_fallthru
      _
    // Predicated region
    $region14: #{ssvae_forward.1} parent=1 // pred_check
      _
    $region15: #{ssvae_forward.1} parent=1 // pred_check_branch
      %39 = sbr.rel (0) target = $region17
    $region16: #{ssvae_forward.1} parent=1 // pred_region
      _
    $region17: #{ssvae_forward.1} parent=1 // pred_fallthru
      _
    // Predicated region
    $region18: #{ssvae_forward.1} parent=1 // pred_check
      _
    $region19: #{ssvae_forward.1} parent=1 // pred_check_branch
      %41 = sbr.rel (0) target = $region21
    $region20: #{ssvae_forward.1} parent=1 // pred_region
      _
    $region21: #{ssvae_forward.1} parent=1 // pred_fallthru
      _
    // Predicated region
    $region22: #{ssvae_forward.1} parent=1 // pred_check
      _
    $region23: #{ssvae_forward.1} parent=1 // pred_check_branch
      %43 = sbr.rel (0) target = $region25
    $region24: #{ssvae_forward.1} parent=1 // pred_region
      _
    $region25: #{ssvae_forward.1} parent=1 // pred_fallthru
      _
    // Predicated region
    $region26: #{ssvae_forward.1} parent=1 // pred_check
      _
    $region27: #{ssvae_forward.1} parent=1 // pred_check_branch
      %45 = sbr.rel (0) target = $region29
    $region28: #{ssvae_forward.1} parent=1 // pred_region
      _
    $region29: #{ssvae_forward.1} parent=1 // pred_fallthru
      _
    // Predicated region
    $region30: #{ssvae_forward.1} parent=1 // pred_check
      _
    $region31: #{ssvae_forward.1} parent=1 // pred_check_branch
      %47 = sbr.rel (0) target = $region33
    $region32: #{ssvae_forward.1} parent=1 // pred_region
      _
    $region33: #{ssvae_forward.1} parent=1 // pred_fallthru
      _
    // Predicated region
    $region34: #{ssvae_forward.1} parent=1 // pred_check
      _
    $region35: #{ssvae_forward.1} parent=1 // pred_check_branch
      %49 = sbr.rel (0) target = $region37
    $region36: #{ssvae_forward.1} parent=1 // pred_region
      _
    $region37: #{ssvae_forward.1} parent=1 // pred_fallthru
      _
    // Predicated region
    $region38: #{ssvae_forward.1} parent=1 // pred_check
      _
    $region39: #{ssvae_forward.1} parent=1 // pred_check_branch
      %51 = sbr.rel (0) target = $region41
    $region40: #{ssvae_forward.1} parent=1 // pred_region
      _
    $region41: #{ssvae_forward.1} parent=1 // pred_fallthru
      _
    // Predicated region
    $region42: #{ssvae_forward.1} parent=1 // pred_check
      _
    $region43: #{ssvae_forward.1} parent=1 // pred_check_branch
      %53 = sbr.rel (0) target = $region45
    $region44: #{ssvae_forward.1} parent=1 // pred_region
      _
    $region45: #{ssvae_forward.1} parent=1 // pred_fallthru
      _
    // Predicated region
    $region46: #{ssvae_forward.1} parent=1 // pred_check
      _
    $region47: #{ssvae_forward.1} parent=1 // pred_check_branch
      %55 = sbr.rel (0) target = $region49
    $region48: #{ssvae_forward.1} parent=1 // pred_region
      _
    $region49: #{ssvae_forward.1} parent=1 // pred_fallthru
      _
    // Predicated region
    $region50: #{ssvae_forward.1} parent=1 // pred_check
      _
    $region51: #{ssvae_forward.1} parent=1 // pred_check_branch
      %57 = sbr.rel (0) target = $region53
    $region52: #{ssvae_forward.1} parent=1 // pred_region
      _
    $region53: #{ssvae_forward.1} parent=1 // pred_fallthru
      _
    // Predicated region
    $region54: #{ssvae_forward.1} parent=1 // pred_check
      _
    $region55: #{ssvae_forward.1} parent=1 // pred_check_branch
      %59 = sbr.rel (0) target = $region57
    $region56: #{ssvae_forward.1} parent=1 // pred_region
      _
    $region57: #{ssvae_forward.1} parent=1 // pred_fallthru
      _
    // Predicated region
    $region58: #{ssvae_forward.1} parent=1 // pred_check
      _
    $region59: #{ssvae_forward.1} parent=1 // pred_check_branch
      %61 = sbr.rel (0) target = $region61
    $region60: #{ssvae_forward.1} parent=1 // pred_region
      _
    $region61: #{ssvae_forward.1} parent=1 // pred_fallthru
      _
    // Predicated region
    $region62: #{ssvae_forward.1} parent=1 // pred_check
      _
    $region63: #{ssvae_forward.1} parent=1 // pred_check_branch
      %63 = sbr.rel (0) target = $region65
    $region64: #{ssvae_forward.1} parent=1 // pred_region
      _
    $region65: #{ssvae_forward.1} parent=1 // pred_fallthru
      _
    // Predicated region
    $region66: #{ssvae_forward.1} parent=1 // pred_check
      _
    $region67: #{ssvae_forward.1} parent=1 // pred_check_branch
      %65 = sbr.rel (0) target = $region69
    $region68: #{ssvae_forward.1} parent=1 // pred_region
      _
    $region69: #{ssvae_forward.1} parent=1 // pred_fallthru
      _
    // Predicated region
    $region70: #{ssvae_forward.1} parent=1 // pred_check
      _
    $region71: #{ssvae_forward.1} parent=1 // pred_check_branch
      %67 = sbr.rel (0) target = $region73
    $region72: #{ssvae_forward.1} parent=1 // pred_region
      _
    $region73: #{ssvae_forward.1} parent=1 // pred_fallthru
      _
    // Predicated region
    $region74: #{ssvae_forward.1} parent=1 // pred_check
      _
    $region75: #{ssvae_forward.1} parent=1 // pred_check_branch
      %69 = sbr.rel (0) target = $region77
    $region76: #{ssvae_forward.1} parent=1 // pred_region
      _
    $region77: #{ssvae_forward.1} parent=1 // pred_fallthru
      _
    // Predicated region
    $region78: #{ssvae_forward.1} parent=1 // pred_check
      _
    $region79: #{ssvae_forward.1} parent=1 // pred_check_branch
      %71 = sbr.rel (0) target = $region81
    $region80: #{ssvae_forward.1} parent=1 // pred_region
      _
    $region81: #{ssvae_forward.1} parent=1 // pred_fallthru
      _
    // Predicated region
    $region82: #{ssvae_forward.1} parent=1 // pred_check
      _
    $region83: #{ssvae_forward.1} parent=1 // pred_check_branch
      %73 = sbr.rel (0) target = $region85
    $region84: #{ssvae_forward.1} parent=1 // pred_region
      _
    $region85: #{ssvae_forward.1} parent=1 // pred_fallthru
      _
    %v74 = vld [vmem:[%s0] sm:$0xff]
    %v75 = vld [vmem:[%s0 + $0x8] sm:$0xff]
    %v76 = vld [vmem:[%s0 + $0x10] sm:$0xff]
    %v77 = vld [vmem:[%s1] sm:$0xff]
    %v78 = vld [vmem:[%s1 + $0x8] sm:$0xff]
    %v79 = vld [vmem:[%s1 + $0x10] sm:$0xff]
    %v80 = vld [vmem:[%s1 + $0x18] sm:$0xff]
    %v81 = vld [vmem:[%s1 + $0x20] sm:$0xff]
    %v82 = vld [vmem:[%s1 + $0x28] sm:$0xff]
    %v83 = vld [vmem:[%s2] sm:$0x1]
    %v85 = vlaneseq
    %v86 = vshrl.u32 %v85, 7
    %v87 = vsub.s32 0, %v86
    %v88 = vrot.slane %v83, %v87
    %vm90 = vcmask 392192
    %v92 = vsel %vm90, %v74, 0
    %v95 = vsel %vm90, %v75, 0
    %v98 = vsel %vm90, %v76, 0
    %100 = vmatprep.subr.mxu0 0.0
    %101 = vmatpush1.msra.mxu0 %v77
    %102 = vmatprep.subr.mxu0 0.0
    %103 = vmatpush1.msra.mxu0 %v78
    %104 = vmatprep.subr.mxu0 0.0
    %105 = vmatpush1.msra.mxu0 %v79
    %106 = vmatprep.subr.mxu0 0.0
    %107 = vmatpush1.msra.mxu0 %v80
    %108 = vmatprep.subr.mxu0 0.0
    %109 = vmatpush1.msra.mxu0 %v81
    %110 = vmatprep.subr.mxu0 0.0
    %111 = vmatpush1.msra.mxu0 %v82
    %112 = vmatprep.subr.mxu0 0.0
    %113 = vmatpush1.msra.mxu0 0.0
    %114 = vmatprep.subr.mxu0 0.0
    %115 = vmatpush1.msra.mxu0 0.0
    %116 = vmatprep.subr.mxu0 0.0
    %117 = vmatpush1.msra.mxu0 0.0
    %118 = vmatprep.subr.mxu0 0.0
    %119 = vmatpush1.msra.mxu0 0.0
    %120 = vmatprep.subr.mxu0 0.0
    %121 = vmatpush1.msra.mxu0 0.0
    %122 = vmatprep.subr.mxu0 0.0
    %123 = vmatpush1.msra.mxu0 0.0
    %124 = vmatprep.subr.mxu0 0.0
    %125 = vmatpush1.msra.mxu0 0.0
    %126 = vmatprep.subr.mxu0 0.0
    %127 = vmatpush1.msra.mxu0 0.0
    %128 = vmatprep.subr.mxu0 0.0
    %129 = vmatpush1.msra.mxu0 0.0
    %130 = vmatprep.subr.mxu0 0.0
    %131 = vmatpush1.msra.mxu0 0.0
    %132 = vmatprep.subr.mxu0 0.0
    %133 = vmatpush1.msra.mxu0 0.0
    %134 = vmatprep.subr.mxu0 0.0
    %135 = vmatpush1.msra.mxu0 0.0
    %136 = vmatprep.subr.mxu0 0.0
    %137 = vmatpush1.msra.mxu0 0.0
    %138 = vmatprep.subr.mxu0 0.0
    %139 = vmatpush1.msra.mxu0 0.0
    %140 = vmatprep.subr.mxu0 0.0
    %141 = vmatpush1.msra.mxu0 0.0
    %142 = vmatprep.subr.mxu0 0.0
    %143 = vmatpush1.msra.mxu0 0.0
    %144 = vmatprep.subr.mxu0 0.0
    %145 = vmatpush1.msra.mxu0 0.0
    %146 = vmatprep.subr.mxu0 0.0
    %147 = vmatpush1.msra.mxu0 0.0
    %148 = vmatprep.subr.mxu0 0.0
    %149 = vmatpush1.msra.mxu0 0.0
    %150 = vmatprep.subr.mxu0 0.0
    %151 = vmatpush1.msra.mxu0 0.0
    %152 = vmatprep.subr.mxu0 0.0
    %153 = vmatpush1.msra.mxu0 0.0
    %154 = vmatprep.subr.mxu0 0.0
    %155 = vmatpush1.msra.mxu0 0.0
    %156 = vmatprep.subr.mxu0 0.0
    %157 = vmatpush1.msra.mxu0 0.0
    %158 = vmatprep.subr.mxu0 0.0
    %159 = vmatpush1.msra.mxu0 0.0
    %160 = vmatprep.subr.mxu0 0.0
    %161 = vmatpush1.msra.mxu0 0.0
    %162 = vmatprep.subr.mxu0 0.0
    %163 = vmatpush1.msra.mxu0 0.0
    %164 = vmatprep.mubr.f32.mxu0 0.0
    %165 = vmatmul.mubr.f32.gmra.mrb[0].mxu0 %v92
    %v166 = vpop.f32.mrb[0].mxu0
    %v167 = vadd.f32 %v88, %v166
    %v168 = vpop.f32.mrb[0].mxu0
    %169 = vmatprep.mubr.f32.mxu0 0.0
    %170 = vmatmul.mubr.f32.gmra.mrb[0].mxu0 %v95
    %v171 = vpop.f32.mrb[0].mxu0
    %v172 = vadd.f32 %v88, %v171
    %v173 = vpop.f32.mrb[0].mxu0
    %174 = vmatprep.mubr.f32.mxu0 0.0
    %175 = vmatmul.mubr.f32.gmra.mrb[0].mxu0 %v98
    %v176 = vpop.f32.mrb[0].mxu0
    %v177 = vadd.f32 %v88, %v176
    %v178 = vpop.f32.mrb[0].mxu0
    %179 = vdwg.mxu0
    %vm180 = vcmp.ge.f32.partialorder %v167, 0.0
    %vm181 = vcmp.ge.f32.partialorder %v172, 0.0
    %vm182 = vcmp.ge.f32.partialorder %v177, 0.0
    %v183 = vmul.f32 %v167, 0.01
    %v184 = vmul.f32 %v172, 0.01
    %v185 = vmul.f32 %v177, 0.01
    %v186 = vsel %vm180, %v167, %v183
    %v187 = vsel %vm181, %v172, %v184
    %v188 = vsel %vm182, %v177, %v185
    %v189 = vmax.f32 %v186, %v187
    %v190 = vmax.f32 %v189, %v188
    %v191 = vld [vmem:[%s4] sm:$0x1]
    %v192 = vld [vmem:[%s3] sm:$0xff]
    %v193 = vld [vmem:[%s3 + $0x8] sm:$0xff]
    %v194 = vld [vmem:[%s3 + $0x10] sm:$0xf]
    %vm195 = vcmask 162816
    %v197 = vsel %vm195, %v190, 0
    %vm199 = vcmask 1043456
    %v201 = vsel %vm199, %v194, 0
    %203 = vmatprep.subr.mxu0 0.0
    %204 = vmatpush1.msra.mxu0 %v192
    %205 = vmatprep.subr.mxu0 0.0
    %206 = vmatpush1.msra.mxu0 %v193
    %207 = vmatprep.subr.mxu0 0.0
    %208 = vmatpush1.msra.mxu0 %v201
    %209 = vmatprep.subr.mxu0 0.0
    %210 = vmatpush1.msra.mxu0 0.0
    %211 = vmatprep.subr.mxu0 0.0
    %212 = vmatpush1.msra.mxu0 0.0
    %213 = vmatprep.subr.mxu0 0.0
    %214 = vmatpush1.msra.mxu0 0.0
    %215 = vmatprep.subr.mxu0 0.0
    %216 = vmatpush1.msra.mxu0 0.0
    %217 = vmatprep.subr.mxu0 0.0
    %218 = vmatpush1.msra.mxu0 0.0
    %219 = vmatprep.subr.mxu0 0.0
    %220 = vmatpush1.msra.mxu0 0.0
    %221 = vmatprep.subr.mxu0 0.0
    %222 = vmatpush1.msra.mxu0 0.0
    %223 = vmatprep.subr.mxu0 0.0
    %224 = vmatpush1.msra.mxu0 0.0
    %225 = vmatprep.subr.mxu0 0.0
    %226 = vmatpush1.msra.mxu0 0.0
    %227 = vmatprep.subr.mxu0 0.0
    %228 = vmatpush1.msra.mxu0 0.0
    %229 = vmatprep.subr.mxu0 0.0
    %230 = vmatpush1.msra.mxu0 0.0
    %231 = vmatprep.subr.mxu0 0.0
    %232 = vmatpush1.msra.mxu0 0.0
    %233 = vmatprep.subr.mxu0 0.0
    %234 = vmatpush1.msra.mxu0 0.0
    %235 = vmatprep.subr.mxu0 0.0
    %236 = vmatpush1.msra.mxu0 0.0
    %237 = vmatprep.subr.mxu0 0.0
    %238 = vmatpush1.msra.mxu0 0.0
    %239 = vmatprep.subr.mxu0 0.0
    %240 = vmatpush1.msra.mxu0 0.0
    %241 = vmatprep.subr.mxu0 0.0
    %242 = vmatpush1.msra.mxu0 0.0
    %243 = vmatprep.subr.mxu0 0.0
    %244 = vmatpush1.msra.mxu0 0.0
    %245 = vmatprep.subr.mxu0 0.0
    %246 = vmatpush1.msra.mxu0 0.0
    %247 = vmatprep.subr.mxu0 0.0
    %248 = vmatpush1.msra.mxu0 0.0
    %249 = vmatprep.subr.mxu0 0.0
    %250 = vmatpush1.msra.mxu0 0.0
    %251 = vmatprep.subr.mxu0 0.0
    %252 = vmatpush1.msra.mxu0 0.0
    %253 = vmatprep.subr.mxu0 0.0
    %254 = vmatpush1.msra.mxu0 0.0
    %255 = vmatprep.subr.mxu0 0.0
    %256 = vmatpush1.msra.mxu0 0.0
    %257 = vmatprep.subr.mxu0 0.0
    %258 = vmatpush1.msra.mxu0 0.0
    %259 = vmatprep.subr.mxu0 0.0
    %260 = vmatpush1.msra.mxu0 0.0
    %261 = vmatprep.subr.mxu0 0.0
    %262 = vmatpush1.msra.mxu0 0.0
    %263 = vmatprep.subr.mxu0 0.0
    %264 = vmatpush1.msra.mxu0 0.0
    %265 = vmatprep.subr.mxu0 0.0
    %266 = vmatpush1.msra.mxu0 0.0
    %267 = vmatprep.mubr.f32.mxu0 0.0
    %268 = vmatmul.mubr.f32.gmra.mrb[0].mxu0 %v197
    %v269 = vpop.f32.mrb[0].mxu0
    %v270 = vadd.f32 0.0, %v269
    %v271 = vpop.f32.mrb[0].mxu0
    %272 = vdwg.mxu0
    %v274 = vlaneseq
    %v275 = vshrl.u32 %v274, 7
    %v276 = vsub.s32 0, %v275
    %v277 = vrot.slane %v191, %v276
    %v279 = vadd.f32 %v277, %v270
    %s280 = scalar_lea.vmem %s3, 24
    %v281 = vld [vmem:[%s280] sm:$0xff]
    %v282 = vld [vmem:[%s280 + $0x8] sm:$0xff]
    %v283 = vld [vmem:[%s280 + $0x10] sm:$0xf]
    %v284 = vrot.slane %v190, 2
    %v285 = vsel %vm195, %v284, 0
    %v288 = vsel %vm199, %v283, 0
    %290 = vmatprep.subr.mxu0 0.0
    %291 = vmatpush1.msra.mxu0 %v281
    %292 = vmatprep.subr.mxu0 0.0
    %293 = vmatpush1.msra.mxu0 %v282
    %294 = vmatprep.subr.mxu0 0.0
    %295 = vmatpush1.msra.mxu0 %v288
    %296 = vmatprep.subr.mxu0 0.0
    %297 = vmatpush1.msra.mxu0 0.0
    %298 = vmatprep.subr.mxu0 0.0
    %299 = vmatpush1.msra.mxu0 0.0
    %300 = vmatprep.subr.mxu0 0.0
    %301 = vmatpush1.msra.mxu0 0.0
    %302 = vmatprep.subr.mxu0 0.0
    %303 = vmatpush1.msra.mxu0 0.0
    %304 = vmatprep.subr.mxu0 0.0
    %305 = vmatpush1.msra.mxu0 0.0
    %306 = vmatprep.subr.mxu0 0.0
    %307 = vmatpush1.msra.mxu0 0.0
    %308 = vmatprep.subr.mxu0 0.0
    %309 = vmatpush1.msra.mxu0 0.0
    %310 = vmatprep.subr.mxu0 0.0
    %311 = vmatpush1.msra.mxu0 0.0
    %312 = vmatprep.subr.mxu0 0.0
    %313 = vmatpush1.msra.mxu0 0.0
    %314 = vmatprep.subr.mxu0 0.0
    %315 = vmatpush1.msra.mxu0 0.0
    %316 = vmatprep.subr.mxu0 0.0
    %317 = vmatpush1.msra.mxu0 0.0
    %318 = vmatprep.subr.mxu0 0.0
    %319 = vmatpush1.msra.mxu0 0.0
    %320 = vmatprep.subr.mxu0 0.0
    %321 = vmatpush1.msra.mxu0 0.0
    %322 = vmatprep.subr.mxu0 0.0
    %323 = vmatpush1.msra.mxu0 0.0
    %324 = vmatprep.subr.mxu0 0.0
    %325 = vmatpush1.msra.mxu0 0.0
    %326 = vmatprep.subr.mxu0 0.0
    %327 = vmatpush1.msra.mxu0 0.0
    %328 = vmatprep.subr.mxu0 0.0
    %329 = vmatpush1.msra.mxu0 0.0
    %330 = vmatprep.subr.mxu0 0.0
    %331 = vmatpush1.msra.mxu0 0.0
    %332 = vmatprep.subr.mxu0 0.0
    %333 = vmatpush1.msra.mxu0 0.0
    %334 = vmatprep.subr.mxu0 0.0
    %335 = vmatpush1.msra.mxu0 0.0
    %336 = vmatprep.subr.mxu0 0.0
    %337 = vmatpush1.msra.mxu0 0.0
    %338 = vmatprep.subr.mxu0 0.0
    %339 = vmatpush1.msra.mxu0 0.0
    %340 = vmatprep.subr.mxu0 0.0
    %341 = vmatpush1.msra.mxu0 0.0
    %342 = vmatprep.subr.mxu0 0.0
    %343 = vmatpush1.msra.mxu0 0.0
    %344 = vmatprep.subr.mxu0 0.0
    %345 = vmatpush1.msra.mxu0 0.0
    %346 = vmatprep.subr.mxu0 0.0
    %347 = vmatpush1.msra.mxu0 0.0
    %348 = vmatprep.subr.mxu0 0.0
    %349 = vmatpush1.msra.mxu0 0.0
    %350 = vmatprep.subr.mxu0 0.0
    %351 = vmatpush1.msra.mxu0 0.0
    %352 = vmatprep.subr.mxu0 0.0
    %353 = vmatpush1.msra.mxu0 0.0
    %354 = vmatprep.mubr.f32.mxu0 0.0
    %355 = vmatmul.mubr.f32.gmra.mrb[0].mxu0 %v285
    %v356 = vpop.f32.mrb[0].mxu0
    %v357 = vadd.f32 0.0, %v356
    %v358 = vpop.f32.mrb[0].mxu0
    %359 = vdwg.mxu0
    %v360 = vadd.f32 %v279, %v357
    %s361 = scalar_lea.vmem %s3, 48
    %v362 = vld [vmem:[%s361] sm:$0xff]
    %v363 = vld [vmem:[%s361 + $0x8] sm:$0xff]
    %v364 = vld [vmem:[%s361 + $0x10] sm:$0xf]
    %v365 = vrot.slane %v190, 4
    %v366 = vsel %vm195, %v365, 0
    %v369 = vsel %vm199, %v364, 0
    %371 = vmatprep.subr.mxu0 0.0
    %372 = vmatpush1.msra.mxu0 %v362
    %373 = vmatprep.subr.mxu0 0.0
    %374 = vmatpush1.msra.mxu0 %v363
    %375 = vmatprep.subr.mxu0 0.0
    %376 = vmatpush1.msra.mxu0 %v369
    %377 = vmatprep.subr.mxu0 0.0
    %378 = vmatpush1.msra.mxu0 0.0
    %379 = vmatprep.subr.mxu0 0.0
    %380 = vmatpush1.msra.mxu0 0.0
    %381 = vmatprep.subr.mxu0 0.0
    %382 = vmatpush1.msra.mxu0 0.0
    %383 = vmatprep.subr.mxu0 0.0
    %384 = vmatpush1.msra.mxu0 0.0
    %385 = vmatprep.subr.mxu0 0.0
    %386 = vmatpush1.msra.mxu0 0.0
    %387 = vmatprep.subr.mxu0 0.0
    %388 = vmatpush1.msra.mxu0 0.0
    %389 = vmatprep.subr.mxu0 0.0
    %390 = vmatpush1.msra.mxu0 0.0
    %391 = vmatprep.subr.mxu0 0.0
    %392 = vmatpush1.msra.mxu0 0.0
    %393 = vmatprep.subr.mxu0 0.0
    %394 = vmatpush1.msra.mxu0 0.0
    %395 = vmatprep.subr.mxu0 0.0
    %396 = vmatpush1.msra.mxu0 0.0
    %397 = vmatprep.subr.mxu0 0.0
    %398 = vmatpush1.msra.mxu0 0.0
    %399 = vmatprep.subr.mxu0 0.0
    %400 = vmatpush1.msra.mxu0 0.0
    %401 = vmatprep.subr.mxu0 0.0
    %402 = vmatpush1.msra.mxu0 0.0
    %403 = vmatprep.subr.mxu0 0.0
    %404 = vmatpush1.msra.mxu0 0.0
    %405 = vmatprep.subr.mxu0 0.0
    %406 = vmatpush1.msra.mxu0 0.0
    %407 = vmatprep.subr.mxu0 0.0
    %408 = vmatpush1.msra.mxu0 0.0
    %409 = vmatprep.subr.mxu0 0.0
    %410 = vmatpush1.msra.mxu0 0.0
    %411 = vmatprep.subr.mxu0 0.0
    %412 = vmatpush1.msra.mxu0 0.0
    %413 = vmatprep.subr.mxu0 0.0
    %414 = vmatpush1.msra.mxu0 0.0
    %415 = vmatprep.subr.mxu0 0.0
    %416 = vmatpush1.msra.mxu0 0.0
    %417 = vmatprep.subr.mxu0 0.0
    %418 = vmatpush1.msra.mxu0 0.0
    %419 = vmatprep.subr.mxu0 0.0
    %420 = vmatpush1.msra.mxu0 0.0
    %421 = vmatprep.subr.mxu0 0.0
    %422 = vmatpush1.msra.mxu0 0.0
    %423 = vmatprep.subr.mxu0 0.0
    %424 = vmatpush1.msra.mxu0 0.0
    %425 = vmatprep.subr.mxu0 0.0
    %426 = vmatpush1.msra.mxu0 0.0
    %427 = vmatprep.subr.mxu0 0.0
    %428 = vmatpush1.msra.mxu0 0.0
    %429 = vmatprep.subr.mxu0 0.0
    %430 = vmatpush1.msra.mxu0 0.0
    %431 = vmatprep.subr.mxu0 0.0
    %432 = vmatpush1.msra.mxu0 0.0
    %433 = vmatprep.subr.mxu0 0.0
    %434 = vmatpush1.msra.mxu0 0.0
    %435 = vmatprep.mubr.f32.mxu0 0.0
    %436 = vmatmul.mubr.f32.gmra.mrb[0].mxu0 %v366
    %v437 = vpop.f32.mrb[0].mxu0
    %v438 = vadd.f32 0.0, %v437
    %v439 = vpop.f32.mrb[0].mxu0
    %440 = vdwg.mxu0
    %v441 = vadd.f32 %v360, %v438
    %s442 = scalar_lea.vmem %s3, 72
    %v443 = vld [vmem:[%s442] sm:$0xff]
    %v444 = vld [vmem:[%s442 + $0x8] sm:$0xff]
    %v445 = vld [vmem:[%s442 + $0x10] sm:$0xf]
    %v446 = vrot.slane %v190, 6
    %v447 = vsel %vm195, %v446, 0
    %v450 = vsel %vm199, %v445, 0
    %452 = vmatprep.subr.mxu0 0.0
    %453 = vmatpush1.msra.mxu0 %v443
    %454 = vmatprep.subr.mxu0 0.0
    %455 = vmatpush1.msra.mxu0 %v444
    %456 = vmatprep.subr.mxu0 0.0
    %457 = vmatpush1.msra.mxu0 %v450
    %458 = vmatprep.subr.mxu0 0.0
    %459 = vmatpush1.msra.mxu0 0.0
    %460 = vmatprep.subr.mxu0 0.0
    %461 = vmatpush1.msra.mxu0 0.0
    %462 = vmatprep.subr.mxu0 0.0
    %463 = vmatpush1.msra.mxu0 0.0
    %464 = vmatprep.subr.mxu0 0.0
    %465 = vmatpush1.msra.mxu0 0.0
    %466 = vmatprep.subr.mxu0 0.0
    %467 = vmatpush1.msra.mxu0 0.0
    %468 = vmatprep.subr.mxu0 0.0
    %469 = vmatpush1.msra.mxu0 0.0
    %470 = vmatprep.subr.mxu0 0.0
    %471 = vmatpush1.msra.mxu0 0.0
    %472 = vmatprep.subr.mxu0 0.0
    %473 = vmatpush1.msra.mxu0 0.0
    %474 = vmatprep.subr.mxu0 0.0
    %475 = vmatpush1.msra.mxu0 0.0
    %476 = vmatprep.subr.mxu0 0.0
    %477 = vmatpush1.msra.mxu0 0.0
    %478 = vmatprep.subr.mxu0 0.0
    %479 = vmatpush1.msra.mxu0 0.0
    %480 = vmatprep.subr.mxu0 0.0
    %481 = vmatpush1.msra.mxu0 0.0
    %482 = vmatprep.subr.mxu0 0.0
    %483 = vmatpush1.msra.mxu0 0.0
    %484 = vmatprep.subr.mxu0 0.0
    %485 = vmatpush1.msra.mxu0 0.0
    %486 = vmatprep.subr.mxu0 0.0
    %487 = vmatpush1.msra.mxu0 0.0
    %488 = vmatprep.subr.mxu0 0.0
    %489 = vmatpush1.msra.mxu0 0.0
    %490 = vmatprep.subr.mxu0 0.0
    %491 = vmatpush1.msra.mxu0 0.0
    %492 = vmatprep.subr.mxu0 0.0
    %493 = vmatpush1.msra.mxu0 0.0
    %494 = vmatprep.subr.mxu0 0.0
    %495 = vmatpush1.msra.mxu0 0.0
    %496 = vmatprep.subr.mxu0 0.0
    %497 = vmatpush1.msra.mxu0 0.0
    %498 = vmatprep.subr.mxu0 0.0
    %499 = vmatpush1.msra.mxu0 0.0
    %500 = vmatprep.subr.mxu0 0.0
    %501 = vmatpush1.msra.mxu0 0.0
    %502 = vmatprep.subr.mxu0 0.0
    %503 = vmatpush1.msra.mxu0 0.0
    %504 = vmatprep.subr.mxu0 0.0
    %505 = vmatpush1.msra.mxu0 0.0
    %506 = vmatprep.subr.mxu0 0.0
    %507 = vmatpush1.msra.mxu0 0.0
    %508 = vmatprep.subr.mxu0 0.0
    %509 = vmatpush1.msra.mxu0 0.0
    %510 = vmatprep.subr.mxu0 0.0
    %511 = vmatpush1.msra.mxu0 0.0
    %512 = vmatprep.subr.mxu0 0.0
    %513 = vmatpush1.msra.mxu0 0.0
    %514 = vmatprep.subr.mxu0 0.0
    %515 = vmatpush1.msra.mxu0 0.0
    %516 = vmatprep.mubr.f32.mxu0 0.0
    %517 = vmatmul.mubr.f32.gmra.mrb[0].mxu0 %v447
    %v518 = vpop.f32.mrb[0].mxu0
    %v519 = vadd.f32 0.0, %v518
    %v520 = vpop.f32.mrb[0].mxu0
    %521 = vdwg.mxu0
    %v522 = vadd.f32 %v441, %v519
    %vm523 = vcmp.ge.f32.partialorder %v522, 0.0
    %v524 = vmul.f32 %v522, 0.01
    %v525 = vsel %vm523, %v522, %v524
    %v526 = vld [vmem:[%s5] sm:$0xff]
    %v527 = vld [vmem:[%s5 + $0x8] sm:$0xff]
    %v528 = vld [vmem:[%s5 + $0x10] sm:$0xff]
    %v529 = vld [vmem:[%s5 + $0x18] sm:$0xff]
    %v530 = vld [vmem:[%s5 + $0x20] sm:$0xff]
    %v531 = vld [vmem:[%s5 + $0x28] sm:$0xff]
    %v532 = vld [vmem:[%s5 + $0x30] sm:$0x3]
    %v533 = vld [vmem:[%s6] sm:$0x1]
    %v535 = vlaneseq
    %v536 = vshrl.u32 %v535, 7
    %v537 = vsub.s32 0, %v536
    %v538 = vrot.slane %v533, %v537
    %541 = vrot.lane.b32.xlu0 %v525, 124
    %v542 = vpop.permute.xlu0 %541
    %vm543 = vcmask 408576
    %v544 = vsel %vm543, %v542, 0
    %vm546 = vcmask 1041408
    %v548 = vsel %vm546, %v532, 0
    %550 = vmatprep.subr.mxu0 0.0
    %551 = vmatpush1.msra.mxu0 %v526
    %552 = vmatprep.subr.mxu0 0.0
    %553 = vmatpush1.msra.mxu0 %v527
    %554 = vmatprep.subr.mxu0 0.0
    %555 = vmatpush1.msra.mxu0 %v528
    %556 = vmatprep.subr.mxu0 0.0
    %557 = vmatpush1.msra.mxu0 %v529
    %558 = vmatprep.subr.mxu0 0.0
    %559 = vmatpush1.msra.mxu0 %v530
    %560 = vmatprep.subr.mxu0 0.0
    %561 = vmatpush1.msra.mxu0 %v531
    %562 = vmatprep.subr.mxu0 0.0
    %563 = vmatpush1.msra.mxu0 %v548
    %564 = vmatprep.subr.mxu0 0.0
    %565 = vmatpush1.msra.mxu0 0.0
    %566 = vmatprep.subr.mxu0 0.0
    %567 = vmatpush1.msra.mxu0 0.0
    %568 = vmatprep.subr.mxu0 0.0
    %569 = vmatpush1.msra.mxu0 0.0
    %570 = vmatprep.subr.mxu0 0.0
    %571 = vmatpush1.msra.mxu0 0.0
    %572 = vmatprep.subr.mxu0 0.0
    %573 = vmatpush1.msra.mxu0 0.0
    %574 = vmatprep.subr.mxu0 0.0
    %575 = vmatpush1.msra.mxu0 0.0
    %576 = vmatprep.subr.mxu0 0.0
    %577 = vmatpush1.msra.mxu0 0.0
    %578 = vmatprep.subr.mxu0 0.0
    %579 = vmatpush1.msra.mxu0 0.0
    %580 = vmatprep.subr.mxu0 0.0
    %581 = vmatpush1.msra.mxu0 0.0
    %582 = vmatprep.subr.mxu0 0.0
    %583 = vmatpush1.msra.mxu0 0.0
    %584 = vmatprep.subr.mxu0 0.0
    %585 = vmatpush1.msra.mxu0 0.0
    %586 = vmatprep.subr.mxu0 0.0
    %587 = vmatpush1.msra.mxu0 0.0
    %588 = vmatprep.subr.mxu0 0.0
    %589 = vmatpush1.msra.mxu0 0.0
    %590 = vmatprep.subr.mxu0 0.0
    %591 = vmatpush1.msra.mxu0 0.0
    %592 = vmatprep.subr.mxu0 0.0
    %593 = vmatpush1.msra.mxu0 0.0
    %594 = vmatprep.subr.mxu0 0.0
    %595 = vmatpush1.msra.mxu0 0.0
    %596 = vmatprep.subr.mxu0 0.0
    %597 = vmatpush1.msra.mxu0 0.0
    %598 = vmatprep.subr.mxu0 0.0
    %599 = vmatpush1.msra.mxu0 0.0
    %600 = vmatprep.subr.mxu0 0.0
    %601 = vmatpush1.msra.mxu0 0.0
    %602 = vmatprep.subr.mxu0 0.0
    %603 = vmatpush1.msra.mxu0 0.0
    %604 = vmatprep.subr.mxu0 0.0
    %605 = vmatpush1.msra.mxu0 0.0
    %606 = vmatprep.subr.mxu0 0.0
    %607 = vmatpush1.msra.mxu0 0.0
    %608 = vmatprep.subr.mxu0 0.0
    %609 = vmatpush1.msra.mxu0 0.0
    %610 = vmatprep.subr.mxu0 0.0
    %611 = vmatpush1.msra.mxu0 0.0
    %612 = vmatprep.subr.mxu0 0.0
    %613 = vmatpush1.msra.mxu0 0.0
    %614 = vmatprep.mubr.f32.mxu0 0.0
    %615 = vmatmul.mubr.f32.gmra.mrb[0].mxu0 %v544
    %v616 = vpop.f32.mrb[0].mxu0
    %v617 = vadd.f32 %v538, %v616
    %v618 = vpop.f32.mrb[0].mxu0
    %619 = vdwg.mxu0
    %vm620 = vcmask 17408
    %v621 = vsel %vm620, %v617, -inf
    %622 = vmax.xlane.f32.xlu0 %v621
    %v623 = vpop.xlane.xlu0 %622
    %v624 = vsub.f32 %v617, %v623
    %v625 = vmul.f32 %v624, 1.442695
    %v626 = vpow.pop %v625
    %v627 = vsel %vm620, %v626, 0.0
    %628 = vadd.xlane.f32.xlu0 %v627
    %v629 = vpop.xlane.xlu0 %628
    %v630 = vlog2.pop %v629
    %v631 = vmul.f32 %v630, 0.6931472
    %v632 = vsub.f32 %v624, %v631
    %vm633 = vcmask 9216
    %634 = vst.msk [vmem:[#allocation2] sm:$0x3] %vm633, %v522
    %636 = vrot.lane.b32.xlu0 %v522, 126
    %v637 = vpop.permute.xlu0 %636
    %639 = vst.msk [vmem:[#allocation4] sm:$0x3] %vm633, %v637
    %640 = vst.msk [vmem:[#allocation6] sm:$0x3] %vm620, %v632
    %v641 = vmul.f32 %v522, 0.5
    %v642 = vmul.f32 %v641, 1.442695
    %v643 = vpow.pop %v642
    %v644 = vadd.f32 %v643, 0.1
    %v645 = vld [vmem:[%s7] sm:$0x3]
    %647 = vrot.lane.b32.xlu0 %v644, 126
    %v648 = vpop.permute.xlu0 %647
    %v650 = vmul.f32 %v645, %v648
    %v651 = vadd.f32 %v650, %v522
    %v652 = vld [vmem:[%s9] sm:$0x3]
    %v653 = vld [vmem:[%s10] sm:$0x7]
    %vm654 = vcmask 23552
    %v656 = vsel %vm654, %v632, 0
    %vm658 = vcmask 1042432
    %v660 = vsel %vm658, %v653, 0
    %662 = vmatprep.subr.mxu0 0.0
    %663 = vmatpush1.msra.mxu0 %v660
    %664 = vmatprep.subr.mxu0 0.0
    %665 = vmatpush1.msra.mxu0 0.0
    %666 = vmatprep.subr.mxu0 0.0
    %667 = vmatpush1.msra.mxu0 0.0
    %668 = vmatprep.subr.mxu0 0.0
    %669 = vmatpush1.msra.mxu0 0.0
    %670 = vmatprep.subr.mxu0 0.0
    %671 = vmatpush1.msra.mxu0 0.0
    %672 = vmatprep.subr.mxu0 0.0
    %673 = vmatpush1.msra.mxu0 0.0
    %674 = vmatprep.subr.mxu0 0.0
    %675 = vmatpush1.msra.mxu0 0.0
    %676 = vmatprep.subr.mxu0 0.0
    %677 = vmatpush1.msra.mxu0 0.0
    %678 = vmatprep.subr.mxu0 0.0
    %679 = vmatpush1.msra.mxu0 0.0
    %680 = vmatprep.subr.mxu0 0.0
    %681 = vmatpush1.msra.mxu0 0.0
    %682 = vmatprep.subr.mxu0 0.0
    %683 = vmatpush1.msra.mxu0 0.0
    %684 = vmatprep.subr.mxu0 0.0
    %685 = vmatpush1.msra.mxu0 0.0
    %686 = vmatprep.subr.mxu0 0.0
    %687 = vmatpush1.msra.mxu0 0.0
    %688 = vmatprep.subr.mxu0 0.0
    %689 = vmatpush1.msra.mxu0 0.0
    %690 = vmatprep.subr.mxu0 0.0
    %691 = vmatpush1.msra.mxu0 0.0
    %692 = vmatprep.subr.mxu0 0.0
    %693 = vmatpush1.msra.mxu0 0.0
    %694 = vmatprep.subr.mxu0 0.0
    %695 = vmatpush1.msra.mxu0 0.0
    %696 = vmatprep.subr.mxu0 0.0
    %697 = vmatpush1.msra.mxu0 0.0
    %698 = vmatprep.subr.mxu0 0.0
    %699 = vmatpush1.msra.mxu0 0.0
    %700 = vmatprep.subr.mxu0 0.0
    %701 = vmatpush1.msra.mxu0 0.0
    %702 = vmatprep.subr.mxu0 0.0
    %703 = vmatpush1.msra.mxu0 0.0
    %704 = vmatprep.subr.mxu0 0.0
    %705 = vmatpush1.msra.mxu0 0.0
    %706 = vmatprep.subr.mxu0 0.0
    %707 = vmatpush1.msra.mxu0 0.0
    %708 = vmatprep.subr.mxu0 0.0
    %709 = vmatpush1.msra.mxu0 0.0
    %710 = vmatprep.subr.mxu0 0.0
    %711 = vmatpush1.msra.mxu0 0.0
    %712 = vmatprep.subr.mxu0 0.0
    %713 = vmatpush1.msra.mxu0 0.0
    %714 = vmatprep.subr.mxu0 0.0
    %715 = vmatpush1.msra.mxu0 0.0
    %716 = vmatprep.subr.mxu0 0.0
    %717 = vmatpush1.msra.mxu0 0.0
    %718 = vmatprep.subr.mxu0 0.0
    %719 = vmatpush1.msra.mxu0 0.0
    %720 = vmatprep.subr.mxu0 0.0
    %721 = vmatpush1.msra.mxu0 0.0
    %722 = vmatprep.subr.mxu0 0.0
    %723 = vmatpush1.msra.mxu0 0.0
    %724 = vmatprep.subr.mxu0 0.0
    %725 = vmatpush1.msra.mxu0 0.0
    %726 = vmatprep.mubr.f32.mxu0 0.0
    %727 = vmatmul.mubr.f32.gmra.mrb[0].mxu0 %v656
    %v728 = vpop.f32.mrb[0].mxu0
    %v729 = vadd.f32 0.0, %v728
    %v730 = vpop.f32.mrb[0].mxu0
    %731 = vdwg.mxu0
    %vm732 = vcmask 15360
    %v734 = vsel %vm732, %v651, 0
    %v737 = vsel %vm546, %v652, 0
    %739 = vmatprep.subr.mxu0 0.0
    %740 = vmatpush1.msra.mxu0 %v737
    %741 = vmatprep.subr.mxu0 0.0
    %742 = vmatpush1.msra.mxu0 0.0
    %743 = vmatprep.subr.mxu0 0.0
    %744 = vmatpush1.msra.mxu0 0.0
    %745 = vmatprep.subr.mxu0 0.0
    %746 = vmatpush1.msra.mxu0 0.0
    %747 = vmatprep.subr.mxu0 0.0
    %748 = vmatpush1.msra.mxu0 0.0
    %749 = vmatprep.subr.mxu0 0.0
    %750 = vmatpush1.msra.mxu0 0.0
    %751 = vmatprep.subr.mxu0 0.0
    %752 = vmatpush1.msra.mxu0 0.0
    %753 = vmatprep.subr.mxu0 0.0
    %754 = vmatpush1.msra.mxu0 0.0
    %755 = vmatprep.subr.mxu0 0.0
    %756 = vmatpush1.msra.mxu0 0.0
    %757 = vmatprep.subr.mxu0 0.0
    %758 = vmatpush1.msra.mxu0 0.0
    %759 = vmatprep.subr.mxu0 0.0
    %760 = vmatpush1.msra.mxu0 0.0
    %761 = vmatprep.subr.mxu0 0.0
    %762 = vmatpush1.msra.mxu0 0.0
    %763 = vmatprep.subr.mxu0 0.0
    %764 = vmatpush1.msra.mxu0 0.0
    %765 = vmatprep.subr.mxu0 0.0
    %766 = vmatpush1.msra.mxu0 0.0
    %767 = vmatprep.subr.mxu0 0.0
    %768 = vmatpush1.msra.mxu0 0.0
    %769 = vmatprep.subr.mxu0 0.0
    %770 = vmatpush1.msra.mxu0 0.0
    %771 = vmatprep.subr.mxu0 0.0
    %772 = vmatpush1.msra.mxu0 0.0
    %773 = vmatprep.subr.mxu0 0.0
    %774 = vmatpush1.msra.mxu0 0.0
    %775 = vmatprep.subr.mxu0 0.0
    %776 = vmatpush1.msra.mxu0 0.0
    %777 = vmatprep.subr.mxu0 0.0
    %778 = vmatpush1.msra.mxu0 0.0
    %779 = vmatprep.subr.mxu0 0.0
    %780 = vmatpush1.msra.mxu0 0.0
    %781 = vmatprep.subr.mxu0 0.0
    %782 = vmatpush1.msra.mxu0 0.0
    %783 = vmatprep.subr.mxu0 0.0
    %784 = vmatpush1.msra.mxu0 0.0
    %785 = vmatprep.subr.mxu0 0.0
    %786 = vmatpush1.msra.mxu0 0.0
    %787 = vmatprep.subr.mxu0 0.0
    %788 = vmatpush1.msra.mxu0 0.0
    %789 = vmatprep.subr.mxu0 0.0
    %790 = vmatpush1.msra.mxu0 0.0
    %791 = vmatprep.subr.mxu0 0.0
    %792 = vmatpush1.msra.mxu0 0.0
    %793 = vmatprep.subr.mxu0 0.0
    %794 = vmatpush1.msra.mxu0 0.0
    %795 = vmatprep.subr.mxu0 0.0
    %796 = vmatpush1.msra.mxu0 0.0
    %797 = vmatprep.subr.mxu0 0.0
    %798 = vmatpush1.msra.mxu0 0.0
    %799 = vmatprep.subr.mxu0 0.0
    %800 = vmatpush1.msra.mxu0 0.0
    %801 = vmatprep.subr.mxu0 0.0
    %802 = vmatpush1.msra.mxu0 0.0
    %803 = vmatprep.mubr.f32.mxu0 0.0
    %804 = vmatmul.mubr.f32.gmra.mrb[0].mxu0 %v734
    %v805 = vpop.f32.mrb[0].mxu0
    %v806 = vadd.f32 %v729, %v805
    %v807 = vpop.f32.mrb[0].mxu0
    %808 = vdwg.mxu0
    %v809 = vld [vmem:[%s11] sm:$0x1]
    %v811 = vlaneseq
    %v812 = vshrl.u32 %v811, 7
    %v813 = vsub.s32 0, %v812
    %v814 = vrot.slane %v809, %v813
    %v816 = vadd.f32 %v806, %v814
    %vm817 = vcmp.ge.f32.partialorder %v816, 0.0
    %v818 = vmul.f32 %v816, 0.01
    %v819 = vsel %vm817, %v816, %v818
    %v820 = vld [vmem:[%s12] sm:$0xff]
    %v821 = vld [vmem:[%s12 + $0x8] sm:$0xff]
    %v822 = vld [vmem:[%s12 + $0x10] sm:$0xff]
    %v823 = vld [vmem:[%s12 + $0x18] sm:$0xff]
    %v824 = vld [vmem:[%s12 + $0x20] sm:$0xff]
    %v825 = vld [vmem:[%s12 + $0x28] sm:$0xff]
    %v826 = vld [vmem:[%s12 + $0x30] sm:$0x3]
    %v827 = vld [vmem:[%s13] sm:$0x1]
    %v829 = vlaneseq
    %v830 = vshrl.u32 %v829, 7
    %v831 = vsub.s32 0, %v830
    %v832 = vrot.slane %v827, %v831
    %v835 = vsel %vm543, %v819, 0
    %v838 = vsel %vm546, %v826, 0
    %840 = vmatprep.subr.mxu0 0.0
    %841 = vmatpush1.msra.mxu0 %v820
    %842 = vmatprep.subr.mxu0 0.0
    %843 = vmatpush1.msra.mxu0 %v821
    %844 = vmatprep.subr.mxu0 0.0
    %845 = vmatpush1.msra.mxu0 %v822
    %846 = vmatprep.subr.mxu0 0.0
    %847 = vmatpush1.msra.mxu0 %v823
    %848 = vmatprep.subr.mxu0 0.0
    %849 = vmatpush1.msra.mxu0 %v824
    %850 = vmatprep.subr.mxu0 0.0
    %851 = vmatpush1.msra.mxu0 %v825
    %852 = vmatprep.subr.mxu0 0.0
    %853 = vmatpush1.msra.mxu0 %v838
    %854 = vmatprep.subr.mxu0 0.0
    %855 = vmatpush1.msra.mxu0 0.0
    %856 = vmatprep.subr.mxu0 0.0
    %857 = vmatpush1.msra.mxu0 0.0
    %858 = vmatprep.subr.mxu0 0.0
    %859 = vmatpush1.msra.mxu0 0.0
    %860 = vmatprep.subr.mxu0 0.0
    %861 = vmatpush1.msra.mxu0 0.0
    %862 = vmatprep.subr.mxu0 0.0
    %863 = vmatpush1.msra.mxu0 0.0
    %864 = vmatprep.subr.mxu0 0.0
    %865 = vmatpush1.msra.mxu0 0.0
    %866 = vmatprep.subr.mxu0 0.0
    %867 = vmatpush1.msra.mxu0 0.0
    %868 = vmatprep.subr.mxu0 0.0
    %869 = vmatpush1.msra.mxu0 0.0
    %870 = vmatprep.subr.mxu0 0.0
    %871 = vmatpush1.msra.mxu0 0.0
    %872 = vmatprep.subr.mxu0 0.0
    %873 = vmatpush1.msra.mxu0 0.0
    %874 = vmatprep.subr.mxu0 0.0
    %875 = vmatpush1.msra.mxu0 0.0
    %876 = vmatprep.subr.mxu0 0.0
    %877 = vmatpush1.msra.mxu0 0.0
    %878 = vmatprep.subr.mxu0 0.0
    %879 = vmatpush1.msra.mxu0 0.0
    %880 = vmatprep.subr.mxu0 0.0
    %881 = vmatpush1.msra.mxu0 0.0
    %882 = vmatprep.subr.mxu0 0.0
    %883 = vmatpush1.msra.mxu0 0.0
    %884 = vmatprep.subr.mxu0 0.0
    %885 = vmatpush1.msra.mxu0 0.0
    %886 = vmatprep.subr.mxu0 0.0
    %887 = vmatpush1.msra.mxu0 0.0
    %888 = vmatprep.subr.mxu0 0.0
    %889 = vmatpush1.msra.mxu0 0.0
    %890 = vmatprep.subr.mxu0 0.0
    %891 = vmatpush1.msra.mxu0 0.0
    %892 = vmatprep.subr.mxu0 0.0
    %893 = vmatpush1.msra.mxu0 0.0
    %894 = vmatprep.subr.mxu0 0.0
    %895 = vmatpush1.msra.mxu0 0.0
    %896 = vmatprep.subr.mxu0 0.0
    %897 = vmatpush1.msra.mxu0 0.0
    %898 = vmatprep.subr.mxu0 0.0
    %899 = vmatpush1.msra.mxu0 0.0
    %900 = vmatprep.subr.mxu0 0.0
    %901 = vmatpush1.msra.mxu0 0.0
    %902 = vmatprep.subr.mxu0 0.0
    %903 = vmatpush1.msra.mxu0 0.0
    %904 = vmatprep.mubr.f32.mxu0 0.0
    %905 = vmatmul.mubr.f32.gmra.mrb[0].mxu0 %v835
    %v906 = vpop.f32.mrb[0].mxu0
    %v907 = vadd.f32 %v832, %v906
    %v908 = vpop.f32.mrb[0].mxu0
    %909 = vdwg.mxu0
    %vm910 = vcmp.ge.f32.partialorder %v907, 0.0
    %v911 = vmul.f32 %v907, 0.01
    %v912 = vsel %vm910, %v907, %v911
    %v913 = vld [vmem:[%s14] sm:$0xff]
    %v914 = vld [vmem:[%s14 + $0x8] sm:$0xff]
    %v915 = vld [vmem:[%s14 + $0x10] sm:$0xff]
    %v916 = vld [vmem:[%s14 + $0x18] sm:$0xff]
    %v917 = vld [vmem:[%s14 + $0x20] sm:$0xff]
    %v918 = vld [vmem:[%s15] sm:$0x1]
    %v920 = vlaneseq
    %v921 = vshrl.u32 %v920, 7
    %v922 = vsub.s32 0, %v921
    %v923 = vrot.slane %v918, %v922
    %vm925 = vcmask 326656
    %v927 = vsel %vm925, %v912, 0
    %929 = vmatprep.subr.mxu0 0.0
    %930 = vmatpush1.msra.mxu0 %v913
    %931 = vmatprep.subr.mxu0 0.0
    %932 = vmatpush1.msra.mxu0 %v914
    %933 = vmatprep.subr.mxu0 0.0
    %934 = vmatpush1.msra.mxu0 %v915
    %935 = vmatprep.subr.mxu0 0.0
    %936 = vmatpush1.msra.mxu0 %v916
    %937 = vmatprep.subr.mxu0 0.0
    %938 = vmatpush1.msra.mxu0 %v917
    %939 = vmatprep.subr.mxu0 0.0
    %940 = vmatpush1.msra.mxu0 0.0
    %941 = vmatprep.subr.mxu0 0.0
    %942 = vmatpush1.msra.mxu0 0.0
    %943 = vmatprep.subr.mxu0 0.0
    %944 = vmatpush1.msra.mxu0 0.0
    %945 = vmatprep.subr.mxu0 0.0
    %946 = vmatpush1.msra.mxu0 0.0
    %947 = vmatprep.subr.mxu0 0.0
    %948 = vmatpush1.msra.mxu0 0.0
    %949 = vmatprep.subr.mxu0 0.0
    %950 = vmatpush1.msra.mxu0 0.0
    %951 = vmatprep.subr.mxu0 0.0
    %952 = vmatpush1.msra.mxu0 0.0
    %953 = vmatprep.subr.mxu0 0.0
    %954 = vmatpush1.msra.mxu0 0.0
    %955 = vmatprep.subr.mxu0 0.0
    %956 = vmatpush1.msra.mxu0 0.0
    %957 = vmatprep.subr.mxu0 0.0
    %958 = vmatpush1.msra.mxu0 0.0
    %959 = vmatprep.subr.mxu0 0.0
    %960 = vmatpush1.msra.mxu0 0.0
    %961 = vmatprep.subr.mxu0 0.0
    %962 = vmatpush1.msra.mxu0 0.0
    %963 = vmatprep.subr.mxu0 0.0
    %964 = vmatpush1.msra.mxu0 0.0
    %965 = vmatprep.subr.mxu0 0.0
    %966 = vmatpush1.msra.mxu0 0.0
    %967 = vmatprep.subr.mxu0 0.0
    %968 = vmatpush1.msra.mxu0 0.0
    %969 = vmatprep.subr.mxu0 0.0
    %970 = vmatpush1.msra.mxu0 0.0
    %971 = vmatprep.subr.mxu0 0.0
    %972 = vmatpush1.msra.mxu0 0.0
    %973 = vmatprep.subr.mxu0 0.0
    %974 = vmatpush1.msra.mxu0 0.0
    %975 = vmatprep.subr.mxu0 0.0
    %976 = vmatpush1.msra.mxu0 0.0
    %977 = vmatprep.subr.mxu0 0.0
    %978 = vmatpush1.msra.mxu0 0.0
    %979 = vmatprep.subr.mxu0 0.0
    %980 = vmatpush1.msra.mxu0 0.0
    %981 = vmatprep.subr.mxu0 0.0
    %982 = vmatpush1.msra.mxu0 0.0
    %983 = vmatprep.subr.mxu0 0.0
    %984 = vmatpush1.msra.mxu0 0.0
    %985 = vmatprep.subr.mxu0 0.0
    %986 = vmatpush1.msra.mxu0 0.0
    %987 = vmatprep.subr.mxu0 0.0
    %988 = vmatpush1.msra.mxu0 0.0
    %989 = vmatprep.subr.mxu0 0.0
    %990 = vmatpush1.msra.mxu0 0.0
    %991 = vmatprep.subr.mxu0 0.0
    %992 = vmatpush1.msra.mxu0 0.0
    %993 = vmatprep.mubr.f32.mxu0 0.0
    %994 = vmatmul.mubr.f32.gmra.mrb[0].mxu0 %v927
    %v995 = vpop.f32.mrb[0].mxu0
    %v996 = vadd.f32 %v923, %v995
    %v997 = vpop.f32.mrb[0].mxu0
    %998 = vdwg.mxu0
    %vm999 = vcmp.ge.f32.partialorder %v996, 0.0
    %v1000 = vmul.f32 %v996, 0.01
    %v1001 = vsel %vm999, %v996, %v1000
    %v1002 = vld [vmem:[%s16] sm:$0xff]
    %v1003 = vld [vmem:[%s16 + $0x8] sm:$0xff]
    %v1004 = vld [vmem:[%s16 + $0x10] sm:$0xff]
    %v1005 = vld [vmem:[%s16 + $0x18] sm:$0xff]
    %v1006 = vld [vmem:[%s16 + $0x20] sm:$0xff]
    %v1007 = vld [vmem:[%s16 + $0x28] sm:$0xff]
    %v1008 = vld [vmem:[%s16 + $0x30] sm:$0xff]
    %v1009 = vld [vmem:[%s16 + $0x38] sm:$0xff]
    %v1010 = vld [vmem:[%s16 + $0x40] sm:$0xff]
    %v1011 = vld [vmem:[%s16 + $0x48] sm:$0xff]
    %v1012 = vld [vmem:[%s16 + $0x50] sm:$0xff]
    %v1013 = vld [vmem:[%s16 + $0x58] sm:$0xff]
    %v1014 = vld [vmem:[%s16 + $0x60] sm:$0xff]
    %v1015 = vld [vmem:[%s16 + $0x68] sm:$0xff]
    %v1016 = vld [vmem:[%s16 + $0x70] sm:$0xff]
    %v1017 = vld [vmem:[%s16 + $0x78] sm:$0xff]
    %v1018 = vld [vmem:[%s16 + $0x80] sm:$0xff]
    %v1019 = vld [vmem:[%s16 + $0x88] sm:$0xff]
    %v1020 = vld [vmem:[%s16 + $0x90] sm:$0xff]
    %v1021 = vld [vmem:[%s16 + $0x98] sm:$0xff]
    %v1022 = vld [vmem:[%s16 + $0xa0] sm:$0xff]
    %v1023 = vld [vmem:[%s16 + $0xa8] sm:$0xff]
    %v1024 = vld [vmem:[%s16 + $0xb0] sm:$0xff]
    %v1025 = vld [vmem:[%s16 + $0xb8] sm:$0xff]
    %v1026 = vld [vmem:[%s16 + $0xc0] sm:$0xff]
    %v1027 = vld [vmem:[%s16 + $0xc8] sm:$0xff]
    %v1028 = vld [vmem:[%s16 + $0xd0] sm:$0xff]
    %v1029 = vld [vmem:[%s16 + $0xd8] sm:$0xff]
    %v1030 = vld [vmem:[%s16 + $0xe0] sm:$0xff]
    %v1031 = vld [vmem:[%s16 + $0xe8] sm:$0xff]
    %v1032 = vld [vmem:[%s16 + $0xf0] sm:$0xff]
    %v1033 = vld [vmem:[%s16 + $0xf8] sm:$0xff]
    %v1034 = vld [vmem:[%s16 + $0x100] sm:$0xff]
    %v1035 = vld [vmem:[%s16 + $0x108] sm:$0xff]
    %v1036 = vld [vmem:[%s16 + $0x110] sm:$0xff]
    %v1037 = vld [vmem:[%s16 + $0x118] sm:$0xff]
    %v1038 = vld [vmem:[%s16 + $0x120] sm:$0xff]
    %v1039 = vld [vmem:[%s16 + $0x128] sm:$0xff]
    %v1040 = vld [vmem:[%s16 + $0x130] sm:$0xff]
    %v1041 = vld [vmem:[%s16 + $0x138] sm:$0xff]
    %v1042 = vld [vmem:[%s16 + $0x140] sm:$0xff]
    %v1043 = vld [vmem:[%s16 + $0x148] sm:$0xff]
    %v1044 = vld [vmem:[%s16 + $0x150] sm:$0xff]
    %v1045 = vld [vmem:[%s16 + $0x158] sm:$0xff]
    %v1046 = vld [vmem:[%s16 + $0x160] sm:$0xff]
    %v1047 = vld [vmem:[%s16 + $0x168] sm:$0xff]
    %v1048 = vld [vmem:[%s16 + $0x170] sm:$0xff]
    %v1049 = vld [vmem:[%s16 + $0x178] sm:$0xff]
    %v1050 = vld [vmem:[%s16 + $0x180] sm:$0xff]
    %v1051 = vld [vmem:[%s16 + $0x188] sm:$0xff]
    %v1052 = vld [vmem:[%s16 + $0x190] sm:$0xff]
    %v1053 = vld [vmem:[%s16 + $0x198] sm:$0xff]
    %v1054 = vld [vmem:[%s16 + $0x1a0] sm:$0xff]
    %v1055 = vld [vmem:[%s16 + $0x1a8] sm:$0xff]
    %v1056 = vld [vmem:[%s16 + $0x1b0] sm:$0xff]
    %v1057 = vld [vmem:[%s16 + $0x1b8] sm:$0xff]
    %v1058 = vld [vmem:[%s16 + $0x1c0] sm:$0xff]
    %v1059 = vld [vmem:[%s16 + $0x1c8] sm:$0xff]
    %v1060 = vld [vmem:[%s16 + $0x1d0] sm:$0xff]
    %v1061 = vld [vmem:[%s16 + $0x1d8] sm:$0xff]
    %v1062 = vld [vmem:[%s16 + $0x1e0] sm:$0xff]
    %v1063 = vld [vmem:[%s16 + $0x1e8] sm:$0xff]
    %v1064 = vld [vmem:[%s16 + $0x1f0] sm:$0xff]
    %v1065 = vld [vmem:[%s16 + $0x1f8] sm:$0xff]
    %v1066 = vld [vmem:[%s16 + $0x200] sm:$0xff]
    %v1067 = vld [vmem:[%s16 + $0x208] sm:$0xff]
    %v1068 = vld [vmem:[%s16 + $0x210] sm:$0xff]
    %v1069 = vld [vmem:[%s16 + $0x218] sm:$0xff]
    %v1070 = vld [vmem:[%s16 + $0x220] sm:$0xff]
    %v1071 = vld [vmem:[%s16 + $0x228] sm:$0xff]
    %v1072 = vld [vmem:[%s16 + $0x230] sm:$0xff]
    %v1073 = vld [vmem:[%s16 + $0x238] sm:$0xff]
    %v1074 = vld [vmem:[%s16 + $0x240] sm:$0xff]
    %v1075 = vld [vmem:[%s16 + $0x248] sm:$0xff]
    %v1076 = vld [vmem:[%s16 + $0x250] sm:$0xff]
    %v1077 = vld [vmem:[%s16 + $0x258] sm:$0xff]
    %v1078 = vld [vmem:[%s16 + $0x260] sm:$0xff]
    %v1079 = vld [vmem:[%s16 + $0x268] sm:$0xff]
    %v1080 = vld [vmem:[%s16 + $0x270] sm:$0xf]
    %v1081 = vld [vmem:[%s16 + $0x278] sm:$0xf]
    %v1082 = vld [vmem:[%s16 + $0x280] sm:$0xf]
    %v1083 = vld [vmem:[%s16 + $0x288] sm:$0xf]
    %v1084 = vld [vmem:[%s16 + $0x290] sm:$0xf]
    %v1085 = vld [vmem:[%s16 + $0x298] sm:$0xf]
    %v1086 = vld [vmem:[%s16 + $0x2a0] sm:$0xf]
    %v1087 = vld [vmem:[%s16 + $0x2a8] sm:$0xf]
    %v1088 = vld [vmem:[%s16 + $0x2b0] sm:$0xf]
    %v1089 = vld [vmem:[%s16 + $0x2b8] sm:$0xf]
    %v1090 = vld [vmem:[%s16 + $0x2c0] sm:$0xf]
    %v1091 = vld [vmem:[%s16 + $0x2c8] sm:$0xf]
    %v1092 = vld [vmem:[%s16 + $0x2d0] sm:$0xf]
    %v1093 = vld [vmem:[%s17] sm:$0xff]
    %v1094 = vld [vmem:[%s17 + $0x8] sm:$0x1f]
    %v1097 = vlaneseq
    %v1098 = vshrl.u32 %v1097, 7
    %v1099 = vsub.s32 0, %v1098
    %v1100 = vrot.slane %v1093, %v1099
    %v1101 = vlaneseq
    %v1102 = vshrl.u32 %v1101, 7
    %v1103 = vsub.s32 1, %v1102
    %v1104 = vrot.slane %v1093, %v1103
    %v1105 = vlaneseq
    %v1106 = vshrl.u32 %v1105, 7
    %v1107 = vsub.s32 2, %v1106
    %v1108 = vrot.slane %v1093, %v1107
    %v1109 = vlaneseq
    %v1110 = vshrl.u32 %v1109, 7
    %v1111 = vsub.s32 3, %v1110
    %v1112 = vrot.slane %v1093, %v1111
    %v1113 = vlaneseq
    %v1114 = vshrl.u32 %v1113, 7
    %v1115 = vsub.s32 4, %v1114
    %v1116 = vrot.slane %v1093, %v1115
    %v1117 = vlaneseq
    %v1118 = vshrl.u32 %v1117, 7
    %v1119 = vsub.s32 5, %v1118
    %v1120 = vrot.slane %v1093, %v1119
    %v1121 = vlaneseq
    %v1122 = vshrl.u32 %v1121, 7
    %v1123 = vsub.s32 6, %v1122
    %v1124 = vrot.slane %v1093, %v1123
    %v1125 = vlaneseq
    %v1126 = vshrl.u32 %v1125, 7
    %v1127 = vsub.s32 7, %v1126
    %v1128 = vrot.slane %v1093, %v1127
    %v1129 = vlaneseq
    %v1130 = vshrl.u32 %v1129, 7
    %v1131 = vsub.s32 0, %v1130
    %v1132 = vrot.slane %v1094, %v1131
    %v1133 = vlaneseq
    %v1134 = vshrl.u32 %v1133, 7
    %v1135 = vsub.s32 1, %v1134
    %v1136 = vrot.slane %v1094, %v1135
    %v1137 = vlaneseq
    %v1138 = vshrl.u32 %v1137, 7
    %v1139 = vsub.s32 2, %v1138
    %v1140 = vrot.slane %v1094, %v1139
    %v1141 = vlaneseq
    %v1142 = vshrl.u32 %v1141, 7
    %v1143 = vsub.s32 3, %v1142
    %v1144 = vrot.slane %v1094, %v1143
    %v1145 = vlaneseq
    %v1146 = vshrl.u32 %v1145, 7
    %v1147 = vsub.s32 4, %v1146
    %v1148 = vrot.slane %v1094, %v1147
    %vm1162 = vcmask 424960
    %v1164 = vsel %vm1162, %v1001, 0
    %v1167 = vsel %vm199, %v1080, 0
    %v1170 = vsel %vm199, %v1081, 0
    %v1173 = vsel %vm199, %v1082, 0
    %v1176 = vsel %vm199, %v1083, 0
    %v1179 = vsel %vm199, %v1084, 0
    %v1182 = vsel %vm199, %v1085, 0
    %v1185 = vsel %vm199, %v1086, 0
    %v1188 = vsel %vm199, %v1087, 0
    %v1191 = vsel %vm199, %v1088, 0
    %v1194 = vsel %vm199, %v1089, 0
    %v1197 = vsel %vm199, %v1090, 0
    %v1200 = vsel %vm199, %v1091, 0
    %v1203 = vsel %vm199, %v1092, 0
    %1205 = vmatprep.subr.mxu0 %v1003
    %1206 = vmatpush1.msra.mxu0 %v1002
    %1207 = vmatprep.subr.mxu0 %v1016
    %1208 = vmatpush1.msra.mxu0 %v1015
    %1209 = vmatprep.subr.mxu0 %v1029
    %1210 = vmatpush1.msra.mxu0 %v1028
    %1211 = vmatprep.subr.mxu0 %v1042
    %1212 = vmatpush1.msra.mxu0 %v1041
    %1213 = vmatprep.subr.mxu0 %v1055
    %1214 = vmatpush1.msra.mxu0 %v1054
    %1215 = vmatprep.subr.mxu0 %v1068
    %1216 = vmatpush1.msra.mxu0 %v1067
    %1217 = vmatprep.subr.mxu0 %v1170
    %1218 = vmatpush1.msra.mxu0 %v1167
    %1219 = vmatprep.subr.mxu0 0.0
    %1220 = vmatpush1.msra.mxu0 0.0
    %1221 = vmatprep.subr.mxu0 0.0
    %1222 = vmatpush1.msra.mxu0 0.0
    %1223 = vmatprep.subr.mxu0 0.0
    %1224 = vmatpush1.msra.mxu0 0.0
    %1225 = vmatprep.subr.mxu0 0.0
    %1226 = vmatpush1.msra.mxu0 0.0
    %1227 = vmatprep.subr.mxu0 0.0
    %1228 = vmatpush1.msra.mxu0 0.0
    %1229 = vmatprep.subr.mxu0 0.0
    %1230 = vmatpush1.msra.mxu0 0.0
    %1231 = vmatprep.subr.mxu0 0.0
    %1232 = vmatpush1.msra.mxu0 0.0
    %1233 = vmatprep.subr.mxu0 0.0
    %1234 = vmatpush1.msra.mxu0 0.0
    %1235 = vmatprep.subr.mxu0 0.0
    %1236 = vmatpush1.msra.mxu0 0.0
    %1237 = vmatprep.subr.mxu0 0.0
    %1238 = vmatpush1.msra.mxu0 0.0
    %1239 = vmatprep.subr.mxu0 0.0
    %1240 = vmatpush1.msra.mxu0 0.0
    %1241 = vmatprep.subr.mxu0 0.0
    %1242 = vmatpush1.msra.mxu0 0.0
    %1243 = vmatprep.subr.mxu0 0.0
    %1244 = vmatpush1.msra.mxu0 0.0
    %1245 = vmatprep.subr.mxu0 0.0
    %1246 = vmatpush1.msra.mxu0 0.0
    %1247 = vmatprep.subr.mxu0 0.0
    %1248 = vmatpush1.msra.mxu0 0.0
    %1249 = vmatprep.subr.mxu0 0.0
    %1250 = vmatpush1.msra.mxu0 0.0
    %1251 = vmatprep.subr.mxu0 0.0
    %1252 = vmatpush1.msra.mxu0 0.0
    %1253 = vmatprep.subr.mxu0 0.0
    %1254 = vmatpush1.msra.mxu0 0.0
    %1255 = vmatprep.subr.mxu0 0.0
    %1256 = vmatpush1.msra.mxu0 0.0
    %1257 = vmatprep.subr.mxu0 0.0
    %1258 = vmatpush1.msra.mxu0 0.0
    %1259 = vmatprep.subr.mxu0 0.0
    %1260 = vmatpush1.msra.mxu0 0.0
    %1261 = vmatprep.subr.mxu0 0.0
    %1262 = vmatpush1.msra.mxu0 0.0
    %1263 = vmatprep.subr.mxu0 0.0
    %1264 = vmatpush1.msra.mxu0 0.0
    %1265 = vmatprep.subr.mxu0 0.0
    %1266 = vmatpush1.msra.mxu0 0.0
    %1267 = vmatprep.subr.mxu0 0.0
    %1268 = vmatpush1.msra.mxu0 0.0
    %1269 = vmatprep.mubr.f32.mxu0 0.0
    %1270 = vmatmul.mubr.f32.gmra.mrb[0].mxu0 %v1164
    %v1271 = vpop.f32.mrb[0].mxu0
    %v1272 = vadd.f32 %v1100, %v1271
    %v1273 = vpop.f32.mrb[0].mxu0
    %v1274 = vadd.f32 %v1104, %v1273
    %1275 = vdwg.mxu0
    %1276 = vmatprep.subr.mxu0 %v1005
    %1277 = vmatpush1.msra.mxu0 %v1004
    %1278 = vmatprep.subr.mxu0 %v1018
    %1279 = vmatpush1.msra.mxu0 %v1017
    %1280 = vmatprep.subr.mxu0 %v1031
    %1281 = vmatpush1.msra.mxu0 %v1030
    %1282 = vmatprep.subr.mxu0 %v1044
    %1283 = vmatpush1.msra.mxu0 %v1043
    %1284 = vmatprep.subr.mxu0 %v1057
    %1285 = vmatpush1.msra.mxu0 %v1056
    %1286 = vmatprep.subr.mxu0 %v1070
    %1287 = vmatpush1.msra.mxu0 %v1069
    %1288 = vmatprep.subr.mxu0 %v1176
    %1289 = vmatpush1.msra.mxu0 %v1173
    %1290 = vmatprep.subr.mxu0 0.0
    %1291 = vmatpush1.msra.mxu0 0.0
    %1292 = vmatprep.subr.mxu0 0.0
    %1293 = vmatpush1.msra.mxu0 0.0
    %1294 = vmatprep.subr.mxu0 0.0
    %1295 = vmatpush1.msra.mxu0 0.0
    %1296 = vmatprep.subr.mxu0 0.0
    %1297 = vmatpush1.msra.mxu0 0.0
    %1298 = vmatprep.subr.mxu0 0.0
    %1299 = vmatpush1.msra.mxu0 0.0
    %1300 = vmatprep.subr.mxu0 0.0
    %1301 = vmatpush1.msra.mxu0 0.0
    %1302 = vmatprep.subr.mxu0 0.0
    %1303 = vmatpush1.msra.mxu0 0.0
    %1304 = vmatprep.subr.mxu0 0.0
    %1305 = vmatpush1.msra.mxu0 0.0
    %1306 = vmatprep.subr.mxu0 0.0
    %1307 = vmatpush1.msra.mxu0 0.0
    %1308 = vmatprep.subr.mxu0 0.0
    %1309 = vmatpush1.msra.mxu0 0.0
    %1310 = vmatprep.subr.mxu0 0.0
    %1311 = vmatpush1.msra.mxu0 0.0
    %1312 = vmatprep.subr.mxu0 0.0
    %1313 = vmatpush1.msra.mxu0 0.0
    %1314 = vmatprep.subr.mxu0 0.0
    %1315 = vmatpush1.msra.mxu0 0.0
    %1316 = vmatprep.subr.mxu0 0.0
    %1317 = vmatpush1.msra.mxu0 0.0
    %1318 = vmatprep.subr.mxu0 0.0
    %1319 = vmatpush1.msra.mxu0 0.0
    %1320 = vmatprep.subr.mxu0 0.0
    %1321 = vmatpush1.msra.mxu0 0.0
    %1322 = vmatprep.subr.mxu0 0.0
    %1323 = vmatpush1.msra.mxu0 0.0
    %1324 = vmatprep.subr.mxu0 0.0
    %1325 = vmatpush1.msra.mxu0 0.0
    %1326 = vmatprep.subr.mxu0 0.0
    %1327 = vmatpush1.msra.mxu0 0.0
    %1328 = vmatprep.subr.mxu0 0.0
    %1329 = vmatpush1.msra.mxu0 0.0
    %1330 = vmatprep.subr.mxu0 0.0
    %1331 = vmatpush1.msra.mxu0 0.0
    %1332 = vmatprep.subr.mxu0 0.0
    %1333 = vmatpush1.msra.mxu0 0.0
    %1334 = vmatprep.subr.mxu0 0.0
    %1335 = vmatpush1.msra.mxu0 0.0
    %1336 = vmatprep.subr.mxu0 0.0
    %1337 = vmatpush1.msra.mxu0 0.0
    %1338 = vmatprep.subr.mxu0 0.0
    %1339 = vmatpush1.msra.mxu0 0.0
    %1340 = vmatprep.mubr.f32.mxu0 0.0
    %1341 = vmatmul.mubr.f32.gmra.mrb[0].mxu0 %v1164
    %v1342 = vpop.f32.mrb[0].mxu0
    %v1343 = vadd.f32 %v1108, %v1342
    %v1344 = vpop.f32.mrb[0].mxu0
    %v1345 = vadd.f32 %v1112, %v1344
    %1346 = vdwg.mxu0
    %1347 = vmatprep.subr.mxu0 %v1007
    %1348 = vmatpush1.msra.mxu0 %v1006
    %1349 = vmatprep.subr.mxu0 %v1020
    %1350 = vmatpush1.msra.mxu0 %v1019
    %1351 = vmatprep.subr.mxu0 %v1033
    %1352 = vmatpush1.msra.mxu0 %v1032
    %1353 = vmatprep.subr.mxu0 %v1046
    %1354 = vmatpush1.msra.mxu0 %v1045
    %1355 = vmatprep.subr.mxu0 %v1059
    %1356 = vmatpush1.msra.mxu0 %v1058
    %1357 = vmatprep.subr.mxu0 %v1072
    %1358 = vmatpush1.msra.mxu0 %v1071
    %1359 = vmatprep.subr.mxu0 %v1182
    %1360 = vmatpush1.msra.mxu0 %v1179
    %1361 = vmatprep.subr.mxu0 0.0
    %1362 = vmatpush1.msra.mxu0 0.0
    %1363 = vmatprep.subr.mxu0 0.0
    %1364 = vmatpush1.msra.mxu0 0.0
    %1365 = vmatprep.subr.mxu0 0.0
    %1366 = vmatpush1.msra.mxu0 0.0
    %1367 = vmatprep.subr.mxu0 0.0
    %1368 = vmatpush1.msra.mxu0 0.0
    %1369 = vmatprep.subr.mxu0 0.0
    %1370 = vmatpush1.msra.mxu0 0.0
    %1371 = vmatprep.subr.mxu0 0.0
    %1372 = vmatpush1.msra.mxu0 0.0
    %1373 = vmatprep.subr.mxu0 0.0
    %1374 = vmatpush1.msra.mxu0 0.0
    %1375 = vmatprep.subr.mxu0 0.0
    %1376 = vmatpush1.msra.mxu0 0.0
    %1377 = vmatprep.subr.mxu0 0.0
    %1378 = vmatpush1.msra.mxu0 0.0
    %1379 = vmatprep.subr.mxu0 0.0
    %1380 = vmatpush1.msra.mxu0 0.0
    %1381 = vmatprep.subr.mxu0 0.0
    %1382 = vmatpush1.msra.mxu0 0.0
    %1383 = vmatprep.subr.mxu0 0.0
    %1384 = vmatpush1.msra.mxu0 0.0
    %1385 = vmatprep.subr.mxu0 0.0
    %1386 = vmatpush1.msra.mxu0 0.0
    %1387 = vmatprep.subr.mxu0 0.0
    %1388 = vmatpush1.msra.mxu0 0.0
    %1389 = vmatprep.subr.mxu0 0.0
    %1390 = vmatpush1.msra.mxu0 0.0
    %1391 = vmatprep.subr.mxu0 0.0
    %1392 = vmatpush1.msra.mxu0 0.0
    %1393 = vmatprep.subr.mxu0 0.0
    %1394 = vmatpush1.msra.mxu0 0.0
    %1395 = vmatprep.subr.mxu0 0.0
    %1396 = vmatpush1.msra.mxu0 0.0
    %1397 = vmatprep.subr.mxu0 0.0
    %1398 = vmatpush1.msra.mxu0 0.0
    %1399 = vmatprep.subr.mxu0 0.0
    %1400 = vmatpush1.msra.mxu0 0.0
    %1401 = vmatprep.subr.mxu0 0.0
    %1402 = vmatpush1.msra.mxu0 0.0
    %1403 = vmatprep.subr.mxu0 0.0
    %1404 = vmatpush1.msra.mxu0 0.0
    %1405 = vmatprep.subr.mxu0 0.0
    %1406 = vmatpush1.msra.mxu0 0.0
    %1407 = vmatprep.subr.mxu0 0.0
    %1408 = vmatpush1.msra.mxu0 0.0
    %1409 = vmatprep.subr.mxu0 0.0
    %1410 = vmatpush1.msra.mxu0 0.0
    %1411 = vmatprep.mubr.f32.mxu0 0.0
    %1412 = vmatmul.mubr.f32.gmra.mrb[0].mxu0 %v1164
    %v1413 = vpop.f32.mrb[0].mxu0
    %v1414 = vadd.f32 %v1116, %v1413
    %v1415 = vpop.f32.mrb[0].mxu0
    %v1416 = vadd.f32 %v1120, %v1415
    %1417 = vdwg.mxu0
    %1418 = vmatprep.subr.mxu0 %v1009
    %1419 = vmatpush1.msra.mxu0 %v1008
    %1420 = vmatprep.subr.mxu0 %v1022
    %1421 = vmatpush1.msra.mxu0 %v1021
    %1422 = vmatprep.subr.mxu0 %v1035
    %1423 = vmatpush1.msra.mxu0 %v1034
    %1424 = vmatprep.subr.mxu0 %v1048
    %1425 = vmatpush1.msra.mxu0 %v1047
    %1426 = vmatprep.subr.mxu0 %v1061
    %1427 = vmatpush1.msra.mxu0 %v1060
    %1428 = vmatprep.subr.mxu0 %v1074
    %1429 = vmatpush1.msra.mxu0 %v1073
    %1430 = vmatprep.subr.mxu0 %v1188
    %1431 = vmatpush1.msra.mxu0 %v1185
    %1432 = vmatprep.subr.mxu0 0.0
    %1433 = vmatpush1.msra.mxu0 0.0
    %1434 = vmatprep.subr.mxu0 0.0
    %1435 = vmatpush1.msra.mxu0 0.0
    %1436 = vmatprep.subr.mxu0 0.0
    %1437 = vmatpush1.msra.mxu0 0.0
    %1438 = vmatprep.subr.mxu0 0.0
    %1439 = vmatpush1.msra.mxu0 0.0
    %1440 = vmatprep.subr.mxu0 0.0
    %1441 = vmatpush1.msra.mxu0 0.0
    %1442 = vmatprep.subr.mxu0 0.0
    %1443 = vmatpush1.msra.mxu0 0.0
    %1444 = vmatprep.subr.mxu0 0.0
    %1445 = vmatpush1.msra.mxu0 0.0
    %1446 = vmatprep.subr.mxu0 0.0
    %1447 = vmatpush1.msra.mxu0 0.0
    %1448 = vmatprep.subr.mxu0 0.0
    %1449 = vmatpush1.msra.mxu0 0.0
    %1450 = vmatprep.subr.mxu0 0.0
    %1451 = vmatpush1.msra.mxu0 0.0
    %1452 = vmatprep.subr.mxu0 0.0
    %1453 = vmatpush1.msra.mxu0 0.0
    %1454 = vmatprep.subr.mxu0 0.0
    %1455 = vmatpush1.msra.mxu0 0.0
    %1456 = vmatprep.subr.mxu0 0.0
    %1457 = vmatpush1.msra.mxu0 0.0
    %1458 = vmatprep.subr.mxu0 0.0
    %1459 = vmatpush1.msra.mxu0 0.0
    %1460 = vmatprep.subr.mxu0 0.0
    %1461 = vmatpush1.msra.mxu0 0.0
    %1462 = vmatprep.subr.mxu0 0.0
    %1463 = vmatpush1.msra.mxu0 0.0
    %1464 = vmatprep.subr.mxu0 0.0
    %1465 = vmatpush1.msra.mxu0 0.0
    %1466 = vmatprep.subr.mxu0 0.0
    %1467 = vmatpush1.msra.mxu0 0.0
    %1468 = vmatprep.subr.mxu0 0.0
    %1469 = vmatpush1.msra.mxu0 0.0
    %1470 = vmatprep.subr.mxu0 0.0
    %1471 = vmatpush1.msra.mxu0 0.0
    %1472 = vmatprep.subr.mxu0 0.0
    %1473 = vmatpush1.msra.mxu0 0.0
    %1474 = vmatprep.subr.mxu0 0.0
    %1475 = vmatpush1.msra.mxu0 0.0
    %1476 = vmatprep.subr.mxu0 0.0
    %1477 = vmatpush1.msra.mxu0 0.0
    %1478 = vmatprep.subr.mxu0 0.0
    %1479 = vmatpush1.msra.mxu0 0.0
    %1480 = vmatprep.subr.mxu0 0.0
    %1481 = vmatpush1.msra.mxu0 0.0
    %1482 = vmatprep.mubr.f32.mxu0 0.0
    %1483 = vmatmul.mubr.f32.gmra.mrb[0].mxu0 %v1164
    %v1484 = vpop.f32.mrb[0].mxu0
    %v1485 = vadd.f32 %v1124, %v1484
    %v1486 = vpop.f32.mrb[0].mxu0
    %v1487 = vadd.f32 %v1128, %v1486
    %1488 = vdwg.mxu0
    %1489 = vmatprep.subr.mxu0 %v1011
    %1490 = vmatpush1.msra.mxu0 %v1010
    %1491 = vmatprep.subr.mxu0 %v1024
    %1492 = vmatpush1.msra.mxu0 %v1023
    %1493 = vmatprep.subr.mxu0 %v1037
    %1494 = vmatpush1.msra.mxu0 %v1036
    %1495 = vmatprep.subr.mxu0 %v1050
    %1496 = vmatpush1.msra.mxu0 %v1049
    %1497 = vmatprep.subr.mxu0 %v1063
    %1498 = vmatpush1.msra.mxu0 %v1062
    %1499 = vmatprep.subr.mxu0 %v1076
    %1500 = vmatpush1.msra.mxu0 %v1075
    %1501 = vmatprep.subr.mxu0 %v1194
    %1502 = vmatpush1.msra.mxu0 %v1191
    %1503 = vmatprep.subr.mxu0 0.0
    %1504 = vmatpush1.msra.mxu0 0.0
    %1505 = vmatprep.subr.mxu0 0.0
    %1506 = vmatpush1.msra.mxu0 0.0
    %1507 = vmatprep.subr.mxu0 0.0
    %1508 = vmatpush1.msra.mxu0 0.0
    %1509 = vmatprep.subr.mxu0 0.0
    %1510 = vmatpush1.msra.mxu0 0.0
    %1511 = vmatprep.subr.mxu0 0.0
    %1512 = vmatpush1.msra.mxu0 0.0
    %1513 = vmatprep.subr.mxu0 0.0
    %1514 = vmatpush1.msra.mxu0 0.0
    %1515 = vmatprep.subr.mxu0 0.0
    %1516 = vmatpush1.msra.mxu0 0.0
    %1517 = vmatprep.subr.mxu0 0.0
    %1518 = vmatpush1.msra.mxu0 0.0
    %1519 = vmatprep.subr.mxu0 0.0
    %1520 = vmatpush1.msra.mxu0 0.0
    %1521 = vmatprep.subr.mxu0 0.0
    %1522 = vmatpush1.msra.mxu0 0.0
    %1523 = vmatprep.subr.mxu0 0.0
    %1524 = vmatpush1.msra.mxu0 0.0
    %1525 = vmatprep.subr.mxu0 0.0
    %1526 = vmatpush1.msra.mxu0 0.0
    %1527 = vmatprep.subr.mxu0 0.0
    %1528 = vmatpush1.msra.mxu0 0.0
    %1529 = vmatprep.subr.mxu0 0.0
    %1530 = vmatpush1.msra.mxu0 0.0
    %1531 = vmatprep.subr.mxu0 0.0
    %1532 = vmatpush1.msra.mxu0 0.0
    %1533 = vmatprep.subr.mxu0 0.0
    %1534 = vmatpush1.msra.mxu0 0.0
    %1535 = vmatprep.subr.mxu0 0.0
    %1536 = vmatpush1.msra.mxu0 0.0
    %1537 = vmatprep.subr.mxu0 0.0
    %1538 = vmatpush1.msra.mxu0 0.0
    %1539 = vmatprep.subr.mxu0 0.0
    %1540 = vmatpush1.msra.mxu0 0.0
    %1541 = vmatprep.subr.mxu0 0.0
    %1542 = vmatpush1.msra.mxu0 0.0
    %1543 = vmatprep.subr.mxu0 0.0
    %1544 = vmatpush1.msra.mxu0 0.0
    %1545 = vmatprep.subr.mxu0 0.0
    %1546 = vmatpush1.msra.mxu0 0.0
    %1547 = vmatprep.subr.mxu0 0.0
    %1548 = vmatpush1.msra.mxu0 0.0
    %1549 = vmatprep.subr.mxu0 0.0
    %1550 = vmatpush1.msra.mxu0 0.0
    %1551 = vmatprep.subr.mxu0 0.0
    %1552 = vmatpush1.msra.mxu0 0.0
    %1553 = vmatprep.mubr.f32.mxu0 0.0
    %1554 = vmatmul.mubr.f32.gmra.mrb[0].mxu0 %v1164
    %v1555 = vpop.f32.mrb[0].mxu0
    %v1556 = vadd.f32 %v1132, %v1555
    %v1557 = vpop.f32.mrb[0].mxu0
    %v1558 = vadd.f32 %v1136, %v1557
    %1559 = vdwg.mxu0
    %1560 = vmatprep.subr.mxu0 %v1013
    %1561 = vmatpush1.msra.mxu0 %v1012
    %1562 = vmatprep.subr.mxu0 %v1026
    %1563 = vmatpush1.msra.mxu0 %v1025
    %1564 = vmatprep.subr.mxu0 %v1039
    %1565 = vmatpush1.msra.mxu0 %v1038
    %1566 = vmatprep.subr.mxu0 %v1052
    %1567 = vmatpush1.msra.mxu0 %v1051
    %1568 = vmatprep.subr.mxu0 %v1065
    %1569 = vmatpush1.msra.mxu0 %v1064
    %1570 = vmatprep.subr.mxu0 %v1078
    %1571 = vmatpush1.msra.mxu0 %v1077
    %1572 = vmatprep.subr.mxu0 %v1200
    %1573 = vmatpush1.msra.mxu0 %v1197
    %1574 = vmatprep.subr.mxu0 0.0
    %1575 = vmatpush1.msra.mxu0 0.0
    %1576 = vmatprep.subr.mxu0 0.0
    %1577 = vmatpush1.msra.mxu0 0.0
    %1578 = vmatprep.subr.mxu0 0.0
    %1579 = vmatpush1.msra.mxu0 0.0
    %1580 = vmatprep.subr.mxu0 0.0
    %1581 = vmatpush1.msra.mxu0 0.0
    %1582 = vmatprep.subr.mxu0 0.0
    %1583 = vmatpush1.msra.mxu0 0.0
    %1584 = vmatprep.subr.mxu0 0.0
    %1585 = vmatpush1.msra.mxu0 0.0
    %1586 = vmatprep.subr.mxu0 0.0
    %1587 = vmatpush1.msra.mxu0 0.0
    %1588 = vmatprep.subr.mxu0 0.0
    %1589 = vmatpush1.msra.mxu0 0.0
    %1590 = vmatprep.subr.mxu0 0.0
    %1591 = vmatpush1.msra.mxu0 0.0
    %1592 = vmatprep.subr.mxu0 0.0
    %1593 = vmatpush1.msra.mxu0 0.0
    %1594 = vmatprep.subr.mxu0 0.0
    %1595 = vmatpush1.msra.mxu0 0.0
    %1596 = vmatprep.subr.mxu0 0.0
    %1597 = vmatpush1.msra.mxu0 0.0
    %1598 = vmatprep.subr.mxu0 0.0
    %1599 = vmatpush1.msra.mxu0 0.0
    %1600 = vmatprep.subr.mxu0 0.0
    %1601 = vmatpush1.msra.mxu0 0.0
    %1602 = vmatprep.subr.mxu0 0.0
    %1603 = vmatpush1.msra.mxu0 0.0
    %1604 = vmatprep.subr.mxu0 0.0
    %1605 = vmatpush1.msra.mxu0 0.0
    %1606 = vmatprep.subr.mxu0 0.0
    %1607 = vmatpush1.msra.mxu0 0.0
    %1608 = vmatprep.subr.mxu0 0.0
    %1609 = vmatpush1.msra.mxu0 0.0
    %1610 = vmatprep.subr.mxu0 0.0
    %1611 = vmatpush1.msra.mxu0 0.0
    %1612 = vmatprep.subr.mxu0 0.0
    %1613 = vmatpush1.msra.mxu0 0.0
    %1614 = vmatprep.subr.mxu0 0.0
    %1615 = vmatpush1.msra.mxu0 0.0
    %1616 = vmatprep.subr.mxu0 0.0
    %1617 = vmatpush1.msra.mxu0 0.0
    %1618 = vmatprep.subr.mxu0 0.0
    %1619 = vmatpush1.msra.mxu0 0.0
    %1620 = vmatprep.subr.mxu0 0.0
    %1621 = vmatpush1.msra.mxu0 0.0
    %1622 = vmatprep.subr.mxu0 0.0
    %1623 = vmatpush1.msra.mxu0 0.0
    %1624 = vmatprep.mubr.f32.mxu0 0.0
    %1625 = vmatmul.mubr.f32.gmra.mrb[0].mxu0 %v1164
    %v1626 = vpop.f32.mrb[0].mxu0
    %v1627 = vadd.f32 %v1140, %v1626
    %v1628 = vpop.f32.mrb[0].mxu0
    %v1629 = vadd.f32 %v1144, %v1628
    %1630 = vdwg.mxu0
    %1631 = vmatprep.subr.mxu0 0.0
    %1632 = vmatpush1.msra.mxu0 %v1014
    %1633 = vmatprep.subr.mxu0 0.0
    %1634 = vmatpush1.msra.mxu0 %v1027
    %1635 = vmatprep.subr.mxu0 0.0
    %1636 = vmatpush1.msra.mxu0 %v1040
    %1637 = vmatprep.subr.mxu0 0.0
    %1638 = vmatpush1.msra.mxu0 %v1053
    %1639 = vmatprep.subr.mxu0 0.0
    %1640 = vmatpush1.msra.mxu0 %v1066
    %1641 = vmatprep.subr.mxu0 0.0
    %1642 = vmatpush1.msra.mxu0 %v1079
    %1643 = vmatprep.subr.mxu0 0.0
    %1644 = vmatpush1.msra.mxu0 %v1203
    %1645 = vmatprep.subr.mxu0 0.0
    %1646 = vmatpush1.msra.mxu0 0.0
    %1647 = vmatprep.subr.mxu0 0.0
    %1648 = vmatpush1.msra.mxu0 0.0
    %1649 = vmatprep.subr.mxu0 0.0
    %1650 = vmatpush1.msra.mxu0 0.0
    %1651 = vmatprep.subr.mxu0 0.0
    %1652 = vmatpush1.msra.mxu0 0.0
    %1653 = vmatprep.subr.mxu0 0.0
    %1654 = vmatpush1.msra.mxu0 0.0
    %1655 = vmatprep.subr.mxu0 0.0
    %1656 = vmatpush1.msra.mxu0 0.0
    %1657 = vmatprep.subr.mxu0 0.0
    %1658 = vmatpush1.msra.mxu0 0.0
    %1659 = vmatprep.subr.mxu0 0.0
    %1660 = vmatpush1.msra.mxu0 0.0
    %1661 = vmatprep.subr.mxu0 0.0
    %1662 = vmatpush1.msra.mxu0 0.0
    %1663 = vmatprep.subr.mxu0 0.0
    %1664 = vmatpush1.msra.mxu0 0.0
    %1665 = vmatprep.subr.mxu0 0.0
    %1666 = vmatpush1.msra.mxu0 0.0
    %1667 = vmatprep.subr.mxu0 0.0
    %1668 = vmatpush1.msra.mxu0 0.0
    %1669 = vmatprep.subr.mxu0 0.0
    %1670 = vmatpush1.msra.mxu0 0.0
    %1671 = vmatprep.subr.mxu0 0.0
    %1672 = vmatpush1.msra.mxu0 0.0
    %1673 = vmatprep.subr.mxu0 0.0
    %1674 = vmatpush1.msra.mxu0 0.0
    %1675 = vmatprep.subr.mxu0 0.0
    %1676 = vmatpush1.msra.mxu0 0.0
    %1677 = vmatprep.subr.mxu0 0.0
    %1678 = vmatpush1.msra.mxu0 0.0
    %1679 = vmatprep.subr.mxu0 0.0
    %1680 = vmatpush1.msra.mxu0 0.0
    %1681 = vmatprep.subr.mxu0 0.0
    %1682 = vmatpush1.msra.mxu0 0.0
    %1683 = vmatprep.subr.mxu0 0.0
    %1684 = vmatpush1.msra.mxu0 0.0
    %1685 = vmatprep.subr.mxu0 0.0
    %1686 = vmatpush1.msra.mxu0 0.0
    %1687 = vmatprep.subr.mxu0 0.0
    %1688 = vmatpush1.msra.mxu0 0.0
    %1689 = vmatprep.subr.mxu0 0.0
    %1690 = vmatpush1.msra.mxu0 0.0
    %1691 = vmatprep.subr.mxu0 0.0
    %1692 = vmatpush1.msra.mxu0 0.0
    %1693 = vmatprep.subr.mxu0 0.0
    %1694 = vmatpush1.msra.mxu0 0.0
    %1695 = vmatprep.mubr.f32.mxu0 0.0
    %1696 = vmatmul.mubr.f32.gmra.mrb[0].mxu0 %v1164
    %v1697 = vpop.f32.mrb[0].mxu0
    %v1698 = vadd.f32 %v1148, %v1697
    %v1699 = vpop.f32.mrb[0].mxu0
    %1700 = vdwg.mxu0
    %v1701 = vld [vmem:[%s18] sm:$0xff]
    %v1702 = vld [vmem:[%s18 + $0x8] sm:$0xff]
    %v1703 = vld [vmem:[%s18 + $0x10] sm:$0xf]
    %v1705 = vsel %vm195, 0.0, 0
    %v1708 = vsel %vm199, %v1703, 0
    %1710 = vmatprep.subr.mxu0 0.0
    %1711 = vmatpush1.msra.mxu0 %v1701
    %1712 = vmatprep.subr.mxu0 0.0
    %1713 = vmatpush1.msra.mxu0 %v1702
    %1714 = vmatprep.subr.mxu0 0.0
    %1715 = vmatpush1.msra.mxu0 %v1708
    %1716 = vmatprep.subr.mxu0 0.0
    %1717 = vmatpush1.msra.mxu0 0.0
    %1718 = vmatprep.subr.mxu0 0.0
    %1719 = vmatpush1.msra.mxu0 0.0
    %1720 = vmatprep.subr.mxu0 0.0
    %1721 = vmatpush1.msra.mxu0 0.0
    %1722 = vmatprep.subr.mxu0 0.0
    %1723 = vmatpush1.msra.mxu0 0.0
    %1724 = vmatprep.subr.mxu0 0.0
    %1725 = vmatpush1.msra.mxu0 0.0
    %1726 = vmatprep.subr.mxu0 0.0
    %1727 = vmatpush1.msra.mxu0 0.0
    %1728 = vmatprep.subr.mxu0 0.0
    %1729 = vmatpush1.msra.mxu0 0.0
    %1730 = vmatprep.subr.mxu0 0.0
    %1731 = vmatpush1.msra.mxu0 0.0
    %1732 = vmatprep.subr.mxu0 0.0
    %1733 = vmatpush1.msra.mxu0 0.0
    %1734 = vmatprep.subr.mxu0 0.0
    %1735 = vmatpush1.msra.mxu0 0.0
    %1736 = vmatprep.subr.mxu0 0.0
    %1737 = vmatpush1.msra.mxu0 0.0
    %1738 = vmatprep.subr.mxu0 0.0
    %1739 = vmatpush1.msra.mxu0 0.0
    %1740 = vmatprep.subr.mxu0 0.0
    %1741 = vmatpush1.msra.mxu0 0.0
    %1742 = vmatprep.subr.mxu0 0.0
    %1743 = vmatpush1.msra.mxu0 0.0
    %1744 = vmatprep.subr.mxu0 0.0
    %1745 = vmatpush1.msra.mxu0 0.0
    %1746 = vmatprep.subr.mxu0 0.0
    %1747 = vmatpush1.msra.mxu0 0.0
    %1748 = vmatprep.subr.mxu0 0.0
    %1749 = vmatpush1.msra.mxu0 0.0
    %1750 = vmatprep.subr.mxu0 0.0
    %1751 = vmatpush1.msra.mxu0 0.0
    %1752 = vmatprep.subr.mxu0 0.0
    %1753 = vmatpush1.msra.mxu0 0.0
    %1754 = vmatprep.subr.mxu0 0.0
    %1755 = vmatpush1.msra.mxu0 0.0
    %1756 = vmatprep.subr.mxu0 0.0
    %1757 = vmatpush1.msra.mxu0 0.0
    %1758 = vmatprep.subr.mxu0 0.0
    %1759 = vmatpush1.msra.mxu0 0.0
    %1760 = vmatprep.subr.mxu0 0.0
    %1761 = vmatpush1.msra.mxu0 0.0
    %1762 = vmatprep.subr.mxu0 0.0
    %1763 = vmatpush1.msra.mxu0 0.0
    %1764 = vmatprep.subr.mxu0 0.0
    %1765 = vmatpush1.msra.mxu0 0.0
    %1766 = vmatprep.subr.mxu0 0.0
    %1767 = vmatpush1.msra.mxu0 0.0
    %1768 = vmatprep.subr.mxu0 0.0
    %1769 = vmatpush1.msra.mxu0 0.0
    %1770 = vmatprep.subr.mxu0 0.0
    %1771 = vmatpush1.msra.mxu0 0.0
    %1772 = vmatprep.subr.mxu0 0.0
    %1773 = vmatpush1.msra.mxu0 0.0
    %1774 = vmatprep.mubr.f32.mxu0 0.0
    %1775 = vmatmul.mubr.f32.gmra.mrb[0].mxu0 %v1705
    %v1776 = vpop.f32.mrb[0].mxu0
    %v1777 = vadd.f32 0.0, %v1776
    %v1778 = vpop.f32.mrb[0].mxu0
    %1779 = vdwg.mxu0
    %v1780 = vadd.f32 %v1272, %v1777
    %v1781 = vxor.u32 %v1780, 2147483648
    %v1782 = vmul.f32 %v1781, 1.442695
    %v1783 = vpow.pop %v1782
    %v1784 = vadd.f32 %v1783, 1.0
    %v1785 = vrcp.pop %v1784
    %v1786 = vmul.f32 1.0, %v1785
    %v1787 = vtanh.pop %v1780
    %v1788 = vmul.f32 %v1786, 0.0
    %1790 = vrot.lane.b32.xlu0 %v1787, 88
    %v1791 = vpop.permute.xlu0 %1790
    %v1793 = vmul.f32 %v1786, %v1791
    %1795 = vrot.lane.b32.xlu0 %v1793, 20
    %v1796 = vpop.permute.xlu0 %1795
    %v1798 = vadd.f32 %v1788, %v1796
    %v1799 = vtanh.pop %v1798
    %1801 = vrot.lane.b32.xlu0 %v1799, 40
    %v1802 = vpop.permute.xlu0 %1801
    %v1804 = vmul.f32 %v1786, %v1802
    %vm1805 = vcmp.ge.f32.partialorder %v1804, 0.0
    %v1806 = vmul.f32 %v1804, 0.01
    %v1807 = vsel %vm1805, %v1804, %v1806
    %v1808 = vld [vmem:[%s19] sm:$0xff]
    %v1809 = vld [vmem:[%s19 + $0x8] sm:$0xff]
    %v1810 = vld [vmem:[%s19 + $0x10] sm:$0xf]
    %1812 = vrot.lane.b32.xlu0 %v1804, 68
    %v1813 = vpop.permute.xlu0 %1812
    %v1814 = vsel %vm195, %v1813, 0
    %1816 = vmatprep.subr.mxu0 0.0
    %1817 = vmatpush1.msra.mxu0 %v1701
    %1818 = vmatprep.subr.mxu0 0.0
    %1819 = vmatpush1.msra.mxu0 %v1702
    %1820 = vmatprep.subr.mxu0 0.0
    %1821 = vmatpush1.msra.mxu0 %v1708
    %1822 = vmatprep.subr.mxu0 0.0
    %1823 = vmatpush1.msra.mxu0 0.0
    %1824 = vmatprep.subr.mxu0 0.0
    %1825 = vmatpush1.msra.mxu0 0.0
    %1826 = vmatprep.subr.mxu0 0.0
    %1827 = vmatpush1.msra.mxu0 0.0
    %1828 = vmatprep.subr.mxu0 0.0
    %1829 = vmatpush1.msra.mxu0 0.0
    %1830 = vmatprep.subr.mxu0 0.0
    %1831 = vmatpush1.msra.mxu0 0.0
    %1832 = vmatprep.subr.mxu0 0.0
    %1833 = vmatpush1.msra.mxu0 0.0
    %1834 = vmatprep.subr.mxu0 0.0
    %1835 = vmatpush1.msra.mxu0 0.0
    %1836 = vmatprep.subr.mxu0 0.0
    %1837 = vmatpush1.msra.mxu0 0.0
    %1838 = vmatprep.subr.mxu0 0.0
    %1839 = vmatpush1.msra.mxu0 0.0
    %1840 = vmatprep.subr.mxu0 0.0
    %1841 = vmatpush1.msra.mxu0 0.0
    %1842 = vmatprep.subr.mxu0 0.0
    %1843 = vmatpush1.msra.mxu0 0.0
    %1844 = vmatprep.subr.mxu0 0.0
    %1845 = vmatpush1.msra.mxu0 0.0
    %1846 = vmatprep.subr.mxu0 0.0
    %1847 = vmatpush1.msra.mxu0 0.0
    %1848 = vmatprep.subr.mxu0 0.0
    %1849 = vmatpush1.msra.mxu0 0.0
    %1850 = vmatprep.subr.mxu0 0.0
    %1851 = vmatpush1.msra.mxu0 0.0
    %1852 = vmatprep.subr.mxu0 0.0
    %1853 = vmatpush1.msra.mxu0 0.0
    %1854 = vmatprep.subr.mxu0 0.0
    %1855 = vmatpush1.msra.mxu0 0.0
    %1856 = vmatprep.subr.mxu0 0.0
    %1857 = vmatpush1.msra.mxu0 0.0
    %1858 = vmatprep.subr.mxu0 0.0
    %1859 = vmatpush1.msra.mxu0 0.0
    %1860 = vmatprep.subr.mxu0 0.0
    %1861 = vmatpush1.msra.mxu0 0.0
    %1862 = vmatprep.subr.mxu0 0.0
    %1863 = vmatpush1.msra.mxu0 0.0
    %1864 = vmatprep.subr.mxu0 0.0
    %1865 = vmatpush1.msra.mxu0 0.0
    %1866 = vmatprep.subr.mxu0 0.0
    %1867 = vmatpush1.msra.mxu0 0.0
    %1868 = vmatprep.subr.mxu0 0.0
    %1869 = vmatpush1.msra.mxu0 0.0
    %1870 = vmatprep.subr.mxu0 0.0
    %1871 = vmatpush1.msra.mxu0 0.0
    %1872 = vmatprep.subr.mxu0 0.0
    %1873 = vmatpush1.msra.mxu0 0.0
    %1874 = vmatprep.subr.mxu0 0.0
    %1875 = vmatpush1.msra.mxu0 0.0
    %1876 = vmatprep.subr.mxu0 0.0
    %1877 = vmatpush1.msra.mxu0 0.0
    %1878 = vmatprep.subr.mxu0 0.0
    %1879 = vmatpush1.msra.mxu0 0.0
    %1880 = vmatprep.mubr.f32.mxu0 0.0
    %1881 = vmatmul.mubr.f32.gmra.mrb[0].mxu0 %v1814
    %v1882 = vpop.f32.mrb[0].mxu0
    %v1883 = vadd.f32 0.0, %v1882
    %v1884 = vpop.f32.mrb[0].mxu0
    %1885 = vdwg.mxu0
    %v1886 = vadd.f32 %v1274, %v1883
    %v1887 = vxor.u32 %v1886, 2147483648
    %v1888 = vmul.f32 %v1887, 1.442695
    %v1889 = vpow.pop %v1888
    %v1890 = vadd.f32 %v1889, 1.0
    %v1891 = vrcp.pop %v1890
    %v1892 = vmul.f32 1.0, %v1891
    %v1893 = vtanh.pop %v1886
    %v1894 = vmul.f32 %v1892, %v1798
    %1896 = vrot.lane.b32.xlu0 %v1893, 88
    %v1897 = vpop.permute.xlu0 %1896
    %v1899 = vmul.f32 %v1892, %v1897
    %1901 = vrot.lane.b32.xlu0 %v1899, 20
    %v1902 = vpop.permute.xlu0 %1901
    %v1904 = vadd.f32 %v1894, %v1902
    %v1905 = vtanh.pop %v1904
    %1907 = vrot.lane.b32.xlu0 %v1905, 40
    %v1908 = vpop.permute.xlu0 %1907
    %v1910 = vmul.f32 %v1892, %v1908
    %vm1911 = vcmp.ge.f32.partialorder %v1910, 0.0
    %v1912 = vmul.f32 %v1910, 0.01
    %v1913 = vsel %vm1911, %v1910, %v1912
    %s1914 = scalar_lea.vmem %s19, 24
    %v1915 = vld [vmem:[%s1914] sm:$0xff]
    %v1916 = vld [vmem:[%s1914 + $0x8] sm:$0xff]
    %v1917 = vld [vmem:[%s1914 + $0x10] sm:$0xf]
    %1919 = vrot.lane.b32.xlu0 %v1913, 68
    %v1920 = vpop.permute.xlu0 %1919
    %v1921 = vsel %vm195, %v1920, 0
    %v1924 = vsel %vm199, %v1917, 0
    %1926 = vmatprep.subr.mxu0 0.0
    %1927 = vmatpush1.msra.mxu0 %v1915
    %1928 = vmatprep.subr.mxu0 0.0
    %1929 = vmatpush1.msra.mxu0 %v1916
    %1930 = vmatprep.subr.mxu0 0.0
    %1931 = vmatpush1.msra.mxu0 %v1924
    %1932 = vmatprep.subr.mxu0 0.0
    %1933 = vmatpush1.msra.mxu0 0.0
    %1934 = vmatprep.subr.mxu0 0.0
    %1935 = vmatpush1.msra.mxu0 0.0
    %1936 = vmatprep.subr.mxu0 0.0
    %1937 = vmatpush1.msra.mxu0 0.0
    %1938 = vmatprep.subr.mxu0 0.0
    %1939 = vmatpush1.msra.mxu0 0.0
    %1940 = vmatprep.subr.mxu0 0.0
    %1941 = vmatpush1.msra.mxu0 0.0
    %1942 = vmatprep.subr.mxu0 0.0
    %1943 = vmatpush1.msra.mxu0 0.0
    %1944 = vmatprep.subr.mxu0 0.0
    %1945 = vmatpush1.msra.mxu0 0.0
    %1946 = vmatprep.subr.mxu0 0.0
    %1947 = vmatpush1.msra.mxu0 0.0
    %1948 = vmatprep.subr.mxu0 0.0
    %1949 = vmatpush1.msra.mxu0 0.0
    %1950 = vmatprep.subr.mxu0 0.0
    %1951 = vmatpush1.msra.mxu0 0.0
    %1952 = vmatprep.subr.mxu0 0.0
    %1953 = vmatpush1.msra.mxu0 0.0
    %1954 = vmatprep.subr.mxu0 0.0
    %1955 = vmatpush1.msra.mxu0 0.0
    %1956 = vmatprep.subr.mxu0 0.0
    %1957 = vmatpush1.msra.mxu0 0.0
    %1958 = vmatprep.subr.mxu0 0.0
    %1959 = vmatpush1.msra.mxu0 0.0
    %1960 = vmatprep.subr.mxu0 0.0
    %1961 = vmatpush1.msra.mxu0 0.0
    %1962 = vmatprep.subr.mxu0 0.0
    %1963 = vmatpush1.msra.mxu0 0.0
    %1964 = vmatprep.subr.mxu0 0.0
    %1965 = vmatpush1.msra.mxu0 0.0
    %1966 = vmatprep.subr.mxu0 0.0
    %1967 = vmatpush1.msra.mxu0 0.0
    %1968 = vmatprep.subr.mxu0 0.0
    %1969 = vmatpush1.msra.mxu0 0.0
    %1970 = vmatprep.subr.mxu0 0.0
    %1971 = vmatpush1.msra.mxu0 0.0
    %1972 = vmatprep.subr.mxu0 0.0
    %1973 = vmatpush1.msra.mxu0 0.0
    %1974 = vmatprep.subr.mxu0 0.0
    %1975 = vmatpush1.msra.mxu0 0.0
    %1976 = vmatprep.subr.mxu0 0.0
    %1977 = vmatpush1.msra.mxu0 0.0
    %1978 = vmatprep.subr.mxu0 0.0
    %1979 = vmatpush1.msra.mxu0 0.0
    %1980 = vmatprep.subr.mxu0 0.0
    %1981 = vmatpush1.msra.mxu0 0.0
    %1982 = vmatprep.subr.mxu0 0.0
    %1983 = vmatpush1.msra.mxu0 0.0
    %1984 = vmatprep.subr.mxu0 0.0
    %1985 = vmatpush1.msra.mxu0 0.0
    %1986 = vmatprep.subr.mxu0 0.0
    %1987 = vmatpush1.msra.mxu0 0.0
    %1988 = vmatprep.subr.mxu0 0.0
    %1989 = vmatpush1.msra.mxu0 0.0
    %1990 = vmatprep.mubr.f32.mxu0 0.0
    %1991 = vmatmul.mubr.f32.gmra.mrb[0].mxu0 %v1921
    %v1992 = vpop.f32.mrb[0].mxu0
    %v1993 = vadd.f32 0.0, %v1992
    %v1994 = vpop.f32.mrb[0].mxu0
    %1995 = vdwg.mxu0
    %1997 = vrot.lane.b32.xlu0 %v1807, 68
    %v1998 = vpop.permute.xlu0 %1997
    %v1999 = vsel %vm195, %v1998, 0
    %v2002 = vsel %vm199, %v1810, 0
    %2004 = vmatprep.subr.mxu0 0.0
    %2005 = vmatpush1.msra.mxu0 %v1808
    %2006 = vmatprep.subr.mxu0 0.0
    %2007 = vmatpush1.msra.mxu0 %v1809
    %2008 = vmatprep.subr.mxu0 0.0
    %2009 = vmatpush1.msra.mxu0 %v2002
    %2010 = vmatprep.subr.mxu0 0.0
    %2011 = vmatpush1.msra.mxu0 0.0
    %2012 = vmatprep.subr.mxu0 0.0
    %2013 = vmatpush1.msra.mxu0 0.0
    %2014 = vmatprep.subr.mxu0 0.0
    %2015 = vmatpush1.msra.mxu0 0.0
    %2016 = vmatprep.subr.mxu0 0.0
    %2017 = vmatpush1.msra.mxu0 0.0
    %2018 = vmatprep.subr.mxu0 0.0
    %2019 = vmatpush1.msra.mxu0 0.0
    %2020 = vmatprep.subr.mxu0 0.0
    %2021 = vmatpush1.msra.mxu0 0.0
    %2022 = vmatprep.subr.mxu0 0.0
    %2023 = vmatpush1.msra.mxu0 0.0
    %2024 = vmatprep.subr.mxu0 0.0
    %2025 = vmatpush1.msra.mxu0 0.0
    %2026 = vmatprep.subr.mxu0 0.0
    %2027 = vmatpush1.msra.mxu0 0.0
    %2028 = vmatprep.subr.mxu0 0.0
    %2029 = vmatpush1.msra.mxu0 0.0
    %2030 = vmatprep.subr.mxu0 0.0
    %2031 = vmatpush1.msra.mxu0 0.0
    %2032 = vmatprep.subr.mxu0 0.0
    %2033 = vmatpush1.msra.mxu0 0.0
    %2034 = vmatprep.subr.mxu0 0.0
    %2035 = vmatpush1.msra.mxu0 0.0
    %2036 = vmatprep.subr.mxu0 0.0
    %2037 = vmatpush1.msra.mxu0 0.0
    %2038 = vmatprep.subr.mxu0 0.0
    %2039 = vmatpush1.msra.mxu0 0.0
    %2040 = vmatprep.subr.mxu0 0.0
    %2041 = vmatpush1.msra.mxu0 0.0
    %2042 = vmatprep.subr.mxu0 0.0
    %2043 = vmatpush1.msra.mxu0 0.0
    %2044 = vmatprep.subr.mxu0 0.0
    %2045 = vmatpush1.msra.mxu0 0.0
    %2046 = vmatprep.subr.mxu0 0.0
    %2047 = vmatpush1.msra.mxu0 0.0
    %2048 = vmatprep.subr.mxu0 0.0
    %2049 = vmatpush1.msra.mxu0 0.0
    %2050 = vmatprep.subr.mxu0 0.0
    %2051 = vmatpush1.msra.mxu0 0.0
    %2052 = vmatprep.subr.mxu0 0.0
    %2053 = vmatpush1.msra.mxu0 0.0
    %2054 = vmatprep.subr.mxu0 0.0
    %2055 = vmatpush1.msra.mxu0 0.0
    %2056 = vmatprep.subr.mxu0 0.0
    %2057 = vmatpush1.msra.mxu0 0.0
    %2058 = vmatprep.subr.mxu0 0.0
    %2059 = vmatpush1.msra.mxu0 0.0
    %2060 = vmatprep.subr.mxu0 0.0
    %2061 = vmatpush1.msra.mxu0 0.0
    %2062 = vmatprep.subr.mxu0 0.0
    %2063 = vmatpush1.msra.mxu0 0.0
    %2064 = vmatprep.subr.mxu0 0.0
    %2065 = vmatpush1.msra.mxu0 0.0
    %2066 = vmatprep.subr.mxu0 0.0
    %2067 = vmatpush1.msra.mxu0 0.0
    %2068 = vmatprep.mubr.f32.mxu0 0.0
    %2069 = vmatmul.mubr.f32.gmra.mrb[0].mxu0 %v1999
    %v2070 = vpop.f32.mrb[0].mxu0
    %v2071 = vadd.f32 %v1993, %v2070
    %v2072 = vpop.f32.mrb[0].mxu0
    %2073 = vdwg.mxu0
    %2075 = vrot.lane.b32.xlu0 %v1910, 68
    %v2076 = vpop.permute.xlu0 %2075
    %v2077 = vsel %vm195, %v2076, 0
    %2079 = vmatprep.subr.mxu0 0.0
    %2080 = vmatpush1.msra.mxu0 %v1701
    %2081 = vmatprep.subr.mxu0 0.0
    %2082 = vmatpush1.msra.mxu0 %v1702
    %2083 = vmatprep.subr.mxu0 0.0
    %2084 = vmatpush1.msra.mxu0 %v1708
    %2085 = vmatprep.subr.mxu0 0.0
    %2086 = vmatpush1.msra.mxu0 0.0
    %2087 = vmatprep.subr.mxu0 0.0
    %2088 = vmatpush1.msra.mxu0 0.0
    %2089 = vmatprep.subr.mxu0 0.0
    %2090 = vmatpush1.msra.mxu0 0.0
    %2091 = vmatprep.subr.mxu0 0.0
    %2092 = vmatpush1.msra.mxu0 0.0
    %2093 = vmatprep.subr.mxu0 0.0
    %2094 = vmatpush1.msra.mxu0 0.0
    %2095 = vmatprep.subr.mxu0 0.0
    %2096 = vmatpush1.msra.mxu0 0.0
    %2097 = vmatprep.subr.mxu0 0.0
    %2098 = vmatpush1.msra.mxu0 0.0
    %2099 = vmatprep.subr.mxu0 0.0
    %2100 = vmatpush1.msra.mxu0 0.0
    %2101 = vmatprep.subr.mxu0 0.0
    %2102 = vmatpush1.msra.mxu0 0.0
    %2103 = vmatprep.subr.mxu0 0.0
    %2104 = vmatpush1.msra.mxu0 0.0
    %2105 = vmatprep.subr.mxu0 0.0
    %2106 = vmatpush1.msra.mxu0 0.0
    %2107 = vmatprep.subr.mxu0 0.0
    %2108 = vmatpush1.msra.mxu0 0.0
    %2109 = vmatprep.subr.mxu0 0.0
    %2110 = vmatpush1.msra.mxu0 0.0
    %2111 = vmatprep.subr.mxu0 0.0
    %2112 = vmatpush1.msra.mxu0 0.0
    %2113 = vmatprep.subr.mxu0 0.0
    %2114 = vmatpush1.msra.mxu0 0.0
    %2115 = vmatprep.subr.mxu0 0.0
    %2116 = vmatpush1.msra.mxu0 0.0
    %2117 = vmatprep.subr.mxu0 0.0
    %2118 = vmatpush1.msra.mxu0 0.0
    %2119 = vmatprep.subr.mxu0 0.0
    %2120 = vmatpush1.msra.mxu0 0.0
    %2121 = vmatprep.subr.mxu0 0.0
    %2122 = vmatpush1.msra.mxu0 0.0
    %2123 = vmatprep.subr.mxu0 0.0
    %2124 = vmatpush1.msra.mxu0 0.0
    %2125 = vmatprep.subr.mxu0 0.0
    %2126 = vmatpush1.msra.mxu0 0.0
    %2127 = vmatprep.subr.mxu0 0.0
    %2128 = vmatpush1.msra.mxu0 0.0
    %2129 = vmatprep.subr.mxu0 0.0
    %2130 = vmatpush1.msra.mxu0 0.0
    %2131 = vmatprep.subr.mxu0 0.0
    %2132 = vmatpush1.msra.mxu0 0.0
    %2133 = vmatprep.subr.mxu0 0.0
    %2134 = vmatpush1.msra.mxu0 0.0
    %2135 = vmatprep.subr.mxu0 0.0
    %2136 = vmatpush1.msra.mxu0 0.0
    %2137 = vmatprep.subr.mxu0 0.0
    %2138 = vmatpush1.msra.mxu0 0.0
    %2139 = vmatprep.subr.mxu0 0.0
    %2140 = vmatpush1.msra.mxu0 0.0
    %2141 = vmatprep.subr.mxu0 0.0
    %2142 = vmatpush1.msra.mxu0 0.0
    %2143 = vmatprep.mubr.f32.mxu0 0.0
    %2144 = vmatmul.mubr.f32.gmra.mrb[0].mxu0 %v2077
    %v2145 = vpop.f32.mrb[0].mxu0
    %v2146 = vadd.f32 0.0, %v2145
    %v2147 = vpop.f32.mrb[0].mxu0
    %2148 = vdwg.mxu0
    %v2149 = vadd.f32 %v1343, %v2146
    %v2150 = vxor.u32 %v2149, 2147483648
    %v2151 = vmul.f32 %v2150, 1.442695
    %v2152 = vpow.pop %v2151
    %v2153 = vadd.f32 %v2152, 1.0
    %v2154 = vrcp.pop %v2153
    %v2155 = vmul.f32 1.0, %v2154
    %v2156 = vtanh.pop %v2149
    %v2157 = vmul.f32 %v2155, %v1904
    %2159 = vrot.lane.b32.xlu0 %v2156, 88
    %v2160 = vpop.permute.xlu0 %2159
    %v2162 = vmul.f32 %v2155, %v2160
    %2164 = vrot.lane.b32.xlu0 %v2162, 20
    %v2165 = vpop.permute.xlu0 %2164
    %v2167 = vadd.f32 %v2157, %v2165
    %v2168 = vtanh.pop %v2167
    %2170 = vrot.lane.b32.xlu0 %v2168, 40
    %v2171 = vpop.permute.xlu0 %2170
    %v2173 = vmul.f32 %v2155, %v2171
    %vm2174 = vcmp.ge.f32.partialorder %v2173, 0.0
    %v2175 = vmul.f32 %v2173, 0.01
    %v2176 = vsel %vm2174, %v2173, %v2175
    %s2177 = scalar_lea.vmem %s19, 48
    %v2178 = vld [vmem:[%s2177] sm:$0xff]
    %v2179 = vld [vmem:[%s2177 + $0x8] sm:$0xff]
    %v2180 = vld [vmem:[%s2177 + $0x10] sm:$0xf]
    %2182 = vrot.lane.b32.xlu0 %v2176, 68
    %v2183 = vpop.permute.xlu0 %2182
    %v2184 = vsel %vm195, %v2183, 0
    %v2187 = vsel %vm199, %v2180, 0
    %2189 = vmatprep.subr.mxu0 0.0
    %2190 = vmatpush1.msra.mxu0 %v2178
    %2191 = vmatprep.subr.mxu0 0.0
    %2192 = vmatpush1.msra.mxu0 %v2179
    %2193 = vmatprep.subr.mxu0 0.0
    %2194 = vmatpush1.msra.mxu0 %v2187
    %2195 = vmatprep.subr.mxu0 0.0
    %2196 = vmatpush1.msra.mxu0 0.0
    %2197 = vmatprep.subr.mxu0 0.0
    %2198 = vmatpush1.msra.mxu0 0.0
    %2199 = vmatprep.subr.mxu0 0.0
    %2200 = vmatpush1.msra.mxu0 0.0
    %2201 = vmatprep.subr.mxu0 0.0
    %2202 = vmatpush1.msra.mxu0 0.0
    %2203 = vmatprep.subr.mxu0 0.0
    %2204 = vmatpush1.msra.mxu0 0.0
    %2205 = vmatprep.subr.mxu0 0.0
    %2206 = vmatpush1.msra.mxu0 0.0
    %2207 = vmatprep.subr.mxu0 0.0
    %2208 = vmatpush1.msra.mxu0 0.0
    %2209 = vmatprep.subr.mxu0 0.0
    %2210 = vmatpush1.msra.mxu0 0.0
    %2211 = vmatprep.subr.mxu0 0.0
    %2212 = vmatpush1.msra.mxu0 0.0
    %2213 = vmatprep.subr.mxu0 0.0
    %2214 = vmatpush1.msra.mxu0 0.0
    %2215 = vmatprep.subr.mxu0 0.0
    %2216 = vmatpush1.msra.mxu0 0.0
    %2217 = vmatprep.subr.mxu0 0.0
    %2218 = vmatpush1.msra.mxu0 0.0
    %2219 = vmatprep.subr.mxu0 0.0
    %2220 = vmatpush1.msra.mxu0 0.0
    %2221 = vmatprep.subr.mxu0 0.0
    %2222 = vmatpush1.msra.mxu0 0.0
    %2223 = vmatprep.subr.mxu0 0.0
    %2224 = vmatpush1.msra.mxu0 0.0
    %2225 = vmatprep.subr.mxu0 0.0
    %2226 = vmatpush1.msra.mxu0 0.0
    %2227 = vmatprep.subr.mxu0 0.0
    %2228 = vmatpush1.msra.mxu0 0.0
    %2229 = vmatprep.subr.mxu0 0.0
    %2230 = vmatpush1.msra.mxu0 0.0
    %2231 = vmatprep.subr.mxu0 0.0
    %2232 = vmatpush1.msra.mxu0 0.0
    %2233 = vmatprep.subr.mxu0 0.0
    %2234 = vmatpush1.msra.mxu0 0.0
    %2235 = vmatprep.subr.mxu0 0.0
    %2236 = vmatpush1.msra.mxu0 0.0
    %2237 = vmatprep.subr.mxu0 0.0
    %2238 = vmatpush1.msra.mxu0 0.0
    %2239 = vmatprep.subr.mxu0 0.0
    %2240 = vmatpush1.msra.mxu0 0.0
    %2241 = vmatprep.subr.mxu0 0.0
    %2242 = vmatpush1.msra.mxu0 0.0
    %2243 = vmatprep.subr.mxu0 0.0
    %2244 = vmatpush1.msra.mxu0 0.0
    %2245 = vmatprep.subr.mxu0 0.0
    %2246 = vmatpush1.msra.mxu0 0.0
    %2247 = vmatprep.subr.mxu0 0.0
    %2248 = vmatpush1.msra.mxu0 0.0
    %2249 = vmatprep.subr.mxu0 0.0
    %2250 = vmatpush1.msra.mxu0 0.0
    %2251 = vmatprep.subr.mxu0 0.0
    %2252 = vmatpush1.msra.mxu0 0.0
    %2253 = vmatprep.mubr.f32.mxu0 0.0
    %2254 = vmatmul.mubr.f32.gmra.mrb[0].mxu0 %v2184
    %v2255 = vpop.f32.mrb[0].mxu0
    %v2256 = vadd.f32 0.0, %v2255
    %v2257 = vpop.f32.mrb[0].mxu0
    %2258 = vdwg.mxu0
    %v2259 = vadd.f32 %v2071, %v2256
    %2261 = vrot.lane.b32.xlu0 %v2173, 68
    %v2262 = vpop.permute.xlu0 %2261
    %v2263 = vsel %vm195, %v2262, 0
    %2265 = vmatprep.subr.mxu0 0.0
    %2266 = vmatpush1.msra.mxu0 %v1701
    %2267 = vmatprep.subr.mxu0 0.0
    %2268 = vmatpush1.msra.mxu0 %v1702
    %2269 = vmatprep.subr.mxu0 0.0
    %2270 = vmatpush1.msra.mxu0 %v1708
    %2271 = vmatprep.subr.mxu0 0.0
    %2272 = vmatpush1.msra.mxu0 0.0
    %2273 = vmatprep.subr.mxu0 0.0
    %2274 = vmatpush1.msra.mxu0 0.0
    %2275 = vmatprep.subr.mxu0 0.0
    %2276 = vmatpush1.msra.mxu0 0.0
    %2277 = vmatprep.subr.mxu0 0.0
    %2278 = vmatpush1.msra.mxu0 0.0
    %2279 = vmatprep.subr.mxu0 0.0
    %2280 = vmatpush1.msra.mxu0 0.0
    %2281 = vmatprep.subr.mxu0 0.0
    %2282 = vmatpush1.msra.mxu0 0.0
    %2283 = vmatprep.subr.mxu0 0.0
    %2284 = vmatpush1.msra.mxu0 0.0
    %2285 = vmatprep.subr.mxu0 0.0
    %2286 = vmatpush1.msra.mxu0 0.0
    %2287 = vmatprep.subr.mxu0 0.0
    %2288 = vmatpush1.msra.mxu0 0.0
    %2289 = vmatprep.subr.mxu0 0.0
    %2290 = vmatpush1.msra.mxu0 0.0
    %2291 = vmatprep.subr.mxu0 0.0
    %2292 = vmatpush1.msra.mxu0 0.0
    %2293 = vmatprep.subr.mxu0 0.0
    %2294 = vmatpush1.msra.mxu0 0.0
    %2295 = vmatprep.subr.mxu0 0.0
    %2296 = vmatpush1.msra.mxu0 0.0
    %2297 = vmatprep.subr.mxu0 0.0
    %2298 = vmatpush1.msra.mxu0 0.0
    %2299 = vmatprep.subr.mxu0 0.0
    %2300 = vmatpush1.msra.mxu0 0.0
    %2301 = vmatprep.subr.mxu0 0.0
    %2302 = vmatpush1.msra.mxu0 0.0
    %2303 = vmatprep.subr.mxu0 0.0
    %2304 = vmatpush1.msra.mxu0 0.0
    %2305 = vmatprep.subr.mxu0 0.0
    %2306 = vmatpush1.msra.mxu0 0.0
    %2307 = vmatprep.subr.mxu0 0.0
    %2308 = vmatpush1.msra.mxu0 0.0
    %2309 = vmatprep.subr.mxu0 0.0
    %2310 = vmatpush1.msra.mxu0 0.0
    %2311 = vmatprep.subr.mxu0 0.0
    %2312 = vmatpush1.msra.mxu0 0.0
    %2313 = vmatprep.subr.mxu0 0.0
    %2314 = vmatpush1.msra.mxu0 0.0
    %2315 = vmatprep.subr.mxu0 0.0
    %2316 = vmatpush1.msra.mxu0 0.0
    %2317 = vmatprep.subr.mxu0 0.0
    %2318 = vmatpush1.msra.mxu0 0.0
    %2319 = vmatprep.subr.mxu0 0.0
    %2320 = vmatpush1.msra.mxu0 0.0
    %2321 = vmatprep.subr.mxu0 0.0
    %2322 = vmatpush1.msra.mxu0 0.0
    %2323 = vmatprep.subr.mxu0 0.0
    %2324 = vmatpush1.msra.mxu0 0.0
    %2325 = vmatprep.subr.mxu0 0.0
    %2326 = vmatpush1.msra.mxu0 0.0
    %2327 = vmatprep.subr.mxu0 0.0
    %2328 = vmatpush1.msra.mxu0 0.0
    %2329 = vmatprep.mubr.f32.mxu0 0.0
    %2330 = vmatmul.mubr.f32.gmra.mrb[0].mxu0 %v2263
    %v2331 = vpop.f32.mrb[0].mxu0
    %v2332 = vadd.f32 0.0, %v2331
    %v2333 = vpop.f32.mrb[0].mxu0
    %2334 = vdwg.mxu0
    %v2335 = vadd.f32 %v1345, %v2332
    %v2336 = vxor.u32 %v2335, 2147483648
    %v2337 = vmul.f32 %v2336, 1.442695
    %v2338 = vpow.pop %v2337
    %v2339 = vadd.f32 %v2338, 1.0
    %v2340 = vrcp.pop %v2339
    %v2341 = vmul.f32 1.0, %v2340
    %v2342 = vtanh.pop %v2335
    %v2343 = vmul.f32 %v2341, %v2167
    %2345 = vrot.lane.b32.xlu0 %v2342, 88
    %v2346 = vpop.permute.xlu0 %2345
    %v2348 = vmul.f32 %v2341, %v2346
    %2350 = vrot.lane.b32.xlu0 %v2348, 20
    %v2351 = vpop.permute.xlu0 %2350
    %v2353 = vadd.f32 %v2343, %v2351
    %v2354 = vtanh.pop %v2353
    %2356 = vrot.lane.b32.xlu0 %v2354, 40
    %v2357 = vpop.permute.xlu0 %2356
    %v2359 = vmul.f32 %v2341, %v2357
    %vm2360 = vcmp.ge.f32.partialorder %v2359, 0.0
    %v2361 = vmul.f32 %v2359, 0.01
    %v2362 = vsel %vm2360, %v2359, %v2361
    %s2363 = scalar_lea.vmem %s19, 72
    %v2364 = vld [vmem:[%s2363] sm:$0xff]
    %v2365 = vld [vmem:[%s2363 + $0x8] sm:$0xff]
    %v2366 = vld [vmem:[%s2363 + $0x10] sm:$0xf]
    %2368 = vrot.lane.b32.xlu0 %v2362, 68
    %v2369 = vpop.permute.xlu0 %2368
    %v2370 = vsel %vm195, %v2369, 0
    %v2373 = vsel %vm199, %v2366, 0
    %2375 = vmatprep.subr.mxu0 0.0
    %2376 = vmatpush1.msra.mxu0 %v2364
    %2377 = vmatprep.subr.mxu0 0.0
    %2378 = vmatpush1.msra.mxu0 %v2365
    %2379 = vmatprep.subr.mxu0 0.0
    %2380 = vmatpush1.msra.mxu0 %v2373
    %2381 = vmatprep.subr.mxu0 0.0
    %2382 = vmatpush1.msra.mxu0 0.0
    %2383 = vmatprep.subr.mxu0 0.0
    %2384 = vmatpush1.msra.mxu0 0.0
    %2385 = vmatprep.subr.mxu0 0.0
    %2386 = vmatpush1.msra.mxu0 0.0
    %2387 = vmatprep.subr.mxu0 0.0
    %2388 = vmatpush1.msra.mxu0 0.0
    %2389 = vmatprep.subr.mxu0 0.0
    %2390 = vmatpush1.msra.mxu0 0.0
    %2391 = vmatprep.subr.mxu0 0.0
    %2392 = vmatpush1.msra.mxu0 0.0
    %2393 = vmatprep.subr.mxu0 0.0
    %2394 = vmatpush1.msra.mxu0 0.0
    %2395 = vmatprep.subr.mxu0 0.0
    %2396 = vmatpush1.msra.mxu0 0.0
    %2397 = vmatprep.subr.mxu0 0.0
    %2398 = vmatpush1.msra.mxu0 0.0
    %2399 = vmatprep.subr.mxu0 0.0
    %2400 = vmatpush1.msra.mxu0 0.0
    %2401 = vmatprep.subr.mxu0 0.0
    %2402 = vmatpush1.msra.mxu0 0.0
    %2403 = vmatprep.subr.mxu0 0.0
    %2404 = vmatpush1.msra.mxu0 0.0
    %2405 = vmatprep.subr.mxu0 0.0
    %2406 = vmatpush1.msra.mxu0 0.0
    %2407 = vmatprep.subr.mxu0 0.0
    %2408 = vmatpush1.msra.mxu0 0.0
    %2409 = vmatprep.subr.mxu0 0.0
    %2410 = vmatpush1.msra.mxu0 0.0
    %2411 = vmatprep.subr.mxu0 0.0
    %2412 = vmatpush1.msra.mxu0 0.0
    %2413 = vmatprep.subr.mxu0 0.0
    %2414 = vmatpush1.msra.mxu0 0.0
    %2415 = vmatprep.subr.mxu0 0.0
    %2416 = vmatpush1.msra.mxu0 0.0
    %2417 = vmatprep.subr.mxu0 0.0
    %2418 = vmatpush1.msra.mxu0 0.0
    %2419 = vmatprep.subr.mxu0 0.0
    %2420 = vmatpush1.msra.mxu0 0.0
    %2421 = vmatprep.subr.mxu0 0.0
    %2422 = vmatpush1.msra.mxu0 0.0
    %2423 = vmatprep.subr.mxu0 0.0
    %2424 = vmatpush1.msra.mxu0 0.0
    %2425 = vmatprep.subr.mxu0 0.0
    %2426 = vmatpush1.msra.mxu0 0.0
    %2427 = vmatprep.subr.mxu0 0.0
    %2428 = vmatpush1.msra.mxu0 0.0
    %2429 = vmatprep.subr.mxu0 0.0
    %2430 = vmatpush1.msra.mxu0 0.0
    %2431 = vmatprep.subr.mxu0 0.0
    %2432 = vmatpush1.msra.mxu0 0.0
    %2433 = vmatprep.subr.mxu0 0.0
    %2434 = vmatpush1.msra.mxu0 0.0
    %2435 = vmatprep.subr.mxu0 0.0
    %2436 = vmatpush1.msra.mxu0 0.0
    %2437 = vmatprep.subr.mxu0 0.0
    %2438 = vmatpush1.msra.mxu0 0.0
    %2439 = vmatprep.mubr.f32.mxu0 0.0
    %2440 = vmatmul.mubr.f32.gmra.mrb[0].mxu0 %v2370
    %v2441 = vpop.f32.mrb[0].mxu0
    %v2442 = vadd.f32 0.0, %v2441
    %v2443 = vpop.f32.mrb[0].mxu0
    %2444 = vdwg.mxu0
    %v2445 = vadd.f32 %v2259, %v2442
    %2447 = vrot.lane.b32.xlu0 %v2359, 68
    %v2448 = vpop.permute.xlu0 %2447
    %v2449 = vsel %vm195, %v2448, 0
    %2451 = vmatprep.subr.mxu0 0.0
    %2452 = vmatpush1.msra.mxu0 %v1701
    %2453 = vmatprep.subr.mxu0 0.0
    %2454 = vmatpush1.msra.mxu0 %v1702
    %2455 = vmatprep.subr.mxu0 0.0
    %2456 = vmatpush1.msra.mxu0 %v1708
    %2457 = vmatprep.subr.mxu0 0.0
    %2458 = vmatpush1.msra.mxu0 0.0
    %2459 = vmatprep.subr.mxu0 0.0
    %2460 = vmatpush1.msra.mxu0 0.0
    %2461 = vmatprep.subr.mxu0 0.0
    %2462 = vmatpush1.msra.mxu0 0.0
    %2463 = vmatprep.subr.mxu0 0.0
    %2464 = vmatpush1.msra.mxu0 0.0
    %2465 = vmatprep.subr.mxu0 0.0
    %2466 = vmatpush1.msra.mxu0 0.0
    %2467 = vmatprep.subr.mxu0 0.0
    %2468 = vmatpush1.msra.mxu0 0.0
    %2469 = vmatprep.subr.mxu0 0.0
    %2470 = vmatpush1.msra.mxu0 0.0
    %2471 = vmatprep.subr.mxu0 0.0
    %2472 = vmatpush1.msra.mxu0 0.0
    %2473 = vmatprep.subr.mxu0 0.0
    %2474 = vmatpush1.msra.mxu0 0.0
    %2475 = vmatprep.subr.mxu0 0.0
    %2476 = vmatpush1.msra.mxu0 0.0
    %2477 = vmatprep.subr.mxu0 0.0
    %2478 = vmatpush1.msra.mxu0 0.0
    %2479 = vmatprep.subr.mxu0 0.0
    %2480 = vmatpush1.msra.mxu0 0.0
    %2481 = vmatprep.subr.mxu0 0.0
    %2482 = vmatpush1.msra.mxu0 0.0
    %2483 = vmatprep.subr.mxu0 0.0
    %2484 = vmatpush1.msra.mxu0 0.0
    %2485 = vmatprep.subr.mxu0 0.0
    %2486 = vmatpush1.msra.mxu0 0.0
    %2487 = vmatprep.subr.mxu0 0.0
    %2488 = vmatpush1.msra.mxu0 0.0
    %2489 = vmatprep.subr.mxu0 0.0
    %2490 = vmatpush1.msra.mxu0 0.0
    %2491 = vmatprep.subr.mxu0 0.0
    %2492 = vmatpush1.msra.mxu0 0.0
    %2493 = vmatprep.subr.mxu0 0.0
    %2494 = vmatpush1.msra.mxu0 0.0
    %2495 = vmatprep.subr.mxu0 0.0
    %2496 = vmatpush1.msra.mxu0 0.0
    %2497 = vmatprep.subr.mxu0 0.0
    %2498 = vmatpush1.msra.mxu0 0.0
    %2499 = vmatprep.subr.mxu0 0.0
    %2500 = vmatpush1.msra.mxu0 0.0
    %2501 = vmatprep.subr.mxu0 0.0
    %2502 = vmatpush1.msra.mxu0 0.0
    %2503 = vmatprep.subr.mxu0 0.0
    %2504 = vmatpush1.msra.mxu0 0.0
    %2505 = vmatprep.subr.mxu0 0.0
    %2506 = vmatpush1.msra.mxu0 0.0
    %2507 = vmatprep.subr.mxu0 0.0
    %2508 = vmatpush1.msra.mxu0 0.0
    %2509 = vmatprep.subr.mxu0 0.0
    %2510 = vmatpush1.msra.mxu0 0.0
    %2511 = vmatprep.subr.mxu0 0.0
    %2512 = vmatpush1.msra.mxu0 0.0
    %2513 = vmatprep.subr.mxu0 0.0
    %2514 = vmatpush1.msra.mxu0 0.0
    %2515 = vmatprep.mubr.f32.mxu0 0.0
    %2516 = vmatmul.mubr.f32.gmra.mrb[0].mxu0 %v2449
    %v2517 = vpop.f32.mrb[0].mxu0
    %v2518 = vadd.f32 0.0, %v2517
    %v2519 = vpop.f32.mrb[0].mxu0
    %2520 = vdwg.mxu0
    %v2521 = vadd.f32 %v1414, %v2518
    %v2522 = vxor.u32 %v2521, 2147483648
    %v2523 = vmul.f32 %v2522, 1.442695
    %v2524 = vpow.pop %v2523
    %v2525 = vadd.f32 %v2524, 1.0
    %v2526 = vrcp.pop %v2525
    %v2527 = vmul.f32 1.0, %v2526
    %v2528 = vtanh.pop %v2521
    %v2529 = vmul.f32 %v2527, %v2353
    %2531 = vrot.lane.b32.xlu0 %v2528, 88
    %v2532 = vpop.permute.xlu0 %2531
    %v2534 = vmul.f32 %v2527, %v2532
    %2536 = vrot.lane.b32.xlu0 %v2534, 20
    %v2537 = vpop.permute.xlu0 %2536
    %v2539 = vadd.f32 %v2529, %v2537
    %v2540 = vtanh.pop %v2539
    %2542 = vrot.lane.b32.xlu0 %v2540, 40
    %v2543 = vpop.permute.xlu0 %2542
    %v2545 = vmul.f32 %v2527, %v2543
    %vm2546 = vcmp.ge.f32.partialorder %v2545, 0.0
    %v2547 = vmul.f32 %v2545, 0.01
    %v2548 = vsel %vm2546, %v2545, %v2547
    %s2549 = scalar_lea.vmem %s19, 96
    %v2550 = vld [vmem:[%s2549] sm:$0xff]
    %v2551 = vld [vmem:[%s2549 + $0x8] sm:$0xff]
    %v2552 = vld [vmem:[%s2549 + $0x10] sm:$0xf]
    %2554 = vrot.lane.b32.xlu0 %v2548, 68
    %v2555 = vpop.permute.xlu0 %2554
    %v2556 = vsel %vm195, %v2555, 0
    %v2559 = vsel %vm199, %v2552, 0
    %2561 = vmatprep.subr.mxu0 0.0
    %2562 = vmatpush1.msra.mxu0 %v2550
    %2563 = vmatprep.subr.mxu0 0.0
    %2564 = vmatpush1.msra.mxu0 %v2551
    %2565 = vmatprep.subr.mxu0 0.0
    %2566 = vmatpush1.msra.mxu0 %v2559
    %2567 = vmatprep.subr.mxu0 0.0
    %2568 = vmatpush1.msra.mxu0 0.0
    %2569 = vmatprep.subr.mxu0 0.0
    %2570 = vmatpush1.msra.mxu0 0.0
    %2571 = vmatprep.subr.mxu0 0.0
    %2572 = vmatpush1.msra.mxu0 0.0
    %2573 = vmatprep.subr.mxu0 0.0
    %2574 = vmatpush1.msra.mxu0 0.0
    %2575 = vmatprep.subr.mxu0 0.0
    %2576 = vmatpush1.msra.mxu0 0.0
    %2577 = vmatprep.subr.mxu0 0.0
    %2578 = vmatpush1.msra.mxu0 0.0
    %2579 = vmatprep.subr.mxu0 0.0
    %2580 = vmatpush1.msra.mxu0 0.0
    %2581 = vmatprep.subr.mxu0 0.0
    %2582 = vmatpush1.msra.mxu0 0.0
    %2583 = vmatprep.subr.mxu0 0.0
    %2584 = vmatpush1.msra.mxu0 0.0
    %2585 = vmatprep.subr.mxu0 0.0
    %2586 = vmatpush1.msra.mxu0 0.0
    %2587 = vmatprep.subr.mxu0 0.0
    %2588 = vmatpush1.msra.mxu0 0.0
    %2589 = vmatprep.subr.mxu0 0.0
    %2590 = vmatpush1.msra.mxu0 0.0
    %2591 = vmatprep.subr.mxu0 0.0
    %2592 = vmatpush1.msra.mxu0 0.0
    %2593 = vmatprep.subr.mxu0 0.0
    %2594 = vmatpush1.msra.mxu0 0.0
    %2595 = vmatprep.subr.mxu0 0.0
    %2596 = vmatpush1.msra.mxu0 0.0
    %2597 = vmatprep.subr.mxu0 0.0
    %2598 = vmatpush1.msra.mxu0 0.0
    %2599 = vmatprep.subr.mxu0 0.0
    %2600 = vmatpush1.msra.mxu0 0.0
    %2601 = vmatprep.subr.mxu0 0.0
    %2602 = vmatpush1.msra.mxu0 0.0
    %2603 = vmatprep.subr.mxu0 0.0
    %2604 = vmatpush1.msra.mxu0 0.0
    %2605 = vmatprep.subr.mxu0 0.0
    %2606 = vmatpush1.msra.mxu0 0.0
    %2607 = vmatprep.subr.mxu0 0.0
    %2608 = vmatpush1.msra.mxu0 0.0
    %2609 = vmatprep.subr.mxu0 0.0
    %2610 = vmatpush1.msra.mxu0 0.0
    %2611 = vmatprep.subr.mxu0 0.0
    %2612 = vmatpush1.msra.mxu0 0.0
    %2613 = vmatprep.subr.mxu0 0.0
    %2614 = vmatpush1.msra.mxu0 0.0
    %2615 = vmatprep.subr.mxu0 0.0
    %2616 = vmatpush1.msra.mxu0 0.0
    %2617 = vmatprep.subr.mxu0 0.0
    %2618 = vmatpush1.msra.mxu0 0.0
    %2619 = vmatprep.subr.mxu0 0.0
    %2620 = vmatpush1.msra.mxu0 0.0
    %2621 = vmatprep.subr.mxu0 0.0
    %2622 = vmatpush1.msra.mxu0 0.0
    %2623 = vmatprep.subr.mxu0 0.0
    %2624 = vmatpush1.msra.mxu0 0.0
    %2625 = vmatprep.mubr.f32.mxu0 0.0
    %2626 = vmatmul.mubr.f32.gmra.mrb[0].mxu0 %v2556
    %v2627 = vpop.f32.mrb[0].mxu0
    %v2628 = vadd.f32 0.0, %v2627
    %v2629 = vpop.f32.mrb[0].mxu0
    %2630 = vdwg.mxu0
    %v2631 = vadd.f32 %v2445, %v2628
    %2633 = vrot.lane.b32.xlu0 %v2545, 68
    %v2634 = vpop.permute.xlu0 %2633
    %v2635 = vsel %vm195, %v2634, 0
    %2637 = vmatprep.subr.mxu0 0.0
    %2638 = vmatpush1.msra.mxu0 %v1701
    %2639 = vmatprep.subr.mxu0 0.0
    %2640 = vmatpush1.msra.mxu0 %v1702
    %2641 = vmatprep.subr.mxu0 0.0
    %2642 = vmatpush1.msra.mxu0 %v1708
    %2643 = vmatprep.subr.mxu0 0.0
    %2644 = vmatpush1.msra.mxu0 0.0
    %2645 = vmatprep.subr.mxu0 0.0
    %2646 = vmatpush1.msra.mxu0 0.0
    %2647 = vmatprep.subr.mxu0 0.0
    %2648 = vmatpush1.msra.mxu0 0.0
    %2649 = vmatprep.subr.mxu0 0.0
    %2650 = vmatpush1.msra.mxu0 0.0
    %2651 = vmatprep.subr.mxu0 0.0
    %2652 = vmatpush1.msra.mxu0 0.0
    %2653 = vmatprep.subr.mxu0 0.0
    %2654 = vmatpush1.msra.mxu0 0.0
    %2655 = vmatprep.subr.mxu0 0.0
    %2656 = vmatpush1.msra.mxu0 0.0
    %2657 = vmatprep.subr.mxu0 0.0
    %2658 = vmatpush1.msra.mxu0 0.0
    %2659 = vmatprep.subr.mxu0 0.0
    %2660 = vmatpush1.msra.mxu0 0.0
    %2661 = vmatprep.subr.mxu0 0.0
    %2662 = vmatpush1.msra.mxu0 0.0
    %2663 = vmatprep.subr.mxu0 0.0
    %2664 = vmatpush1.msra.mxu0 0.0
    %2665 = vmatprep.subr.mxu0 0.0
    %2666 = vmatpush1.msra.mxu0 0.0
    %2667 = vmatprep.subr.mxu0 0.0
    %2668 = vmatpush1.msra.mxu0 0.0
    %2669 = vmatprep.subr.mxu0 0.0
    %2670 = vmatpush1.msra.mxu0 0.0
    %2671 = vmatprep.subr.mxu0 0.0
    %2672 = vmatpush1.msra.mxu0 0.0
    %2673 = vmatprep.subr.mxu0 0.0
    %2674 = vmatpush1.msra.mxu0 0.0
    %2675 = vmatprep.subr.mxu0 0.0
    %2676 = vmatpush1.msra.mxu0 0.0
    %2677 = vmatprep.subr.mxu0 0.0
    %2678 = vmatpush1.msra.mxu0 0.0
    %2679 = vmatprep.subr.mxu0 0.0
    %2680 = vmatpush1.msra.mxu0 0.0
    %2681 = vmatprep.subr.mxu0 0.0
    %2682 = vmatpush1.msra.mxu0 0.0
    %2683 = vmatprep.subr.mxu0 0.0
    %2684 = vmatpush1.msra.mxu0 0.0
    %2685 = vmatprep.subr.mxu0 0.0
    %2686 = vmatpush1.msra.mxu0 0.0
    %2687 = vmatprep.subr.mxu0 0.0
    %2688 = vmatpush1.msra.mxu0 0.0
    %2689 = vmatprep.subr.mxu0 0.0
    %2690 = vmatpush1.msra.mxu0 0.0
    %2691 = vmatprep.subr.mxu0 0.0
    %2692 = vmatpush1.msra.mxu0 0.0
    %2693 = vmatprep.subr.mxu0 0.0
    %2694 = vmatpush1.msra.mxu0 0.0
    %2695 = vmatprep.subr.mxu0 0.0
    %2696 = vmatpush1.msra.mxu0 0.0
    %2697 = vmatprep.subr.mxu0 0.0
    %2698 = vmatpush1.msra.mxu0 0.0
    %2699 = vmatprep.subr.mxu0 0.0
    %2700 = vmatpush1.msra.mxu0 0.0
    %2701 = vmatprep.mubr.f32.mxu0 0.0
    %2702 = vmatmul.mubr.f32.gmra.mrb[0].mxu0 %v2635
    %v2703 = vpop.f32.mrb[0].mxu0
    %v2704 = vadd.f32 0.0, %v2703
    %v2705 = vpop.f32.mrb[0].mxu0
    %2706 = vdwg.mxu0
    %v2707 = vadd.f32 %v1416, %v2704
    %v2708 = vxor.u32 %v2707, 2147483648
    %v2709 = vmul.f32 %v2708, 1.442695
    %v2710 = vpow.pop %v2709
    %v2711 = vadd.f32 %v2710, 1.0
    %v2712 = vrcp.pop %v2711
    %v2713 = vmul.f32 1.0, %v2712
    %v2714 = vtanh.pop %v2707
    %v2715 = vmul.f32 %v2713, %v2539
    %2717 = vrot.lane.b32.xlu0 %v2714, 88
    %v2718 = vpop.permute.xlu0 %2717
    %v2720 = vmul.f32 %v2713, %v2718
    %2722 = vrot.lane.b32.xlu0 %v2720, 20
    %v2723 = vpop.permute.xlu0 %2722
    %v2725 = vadd.f32 %v2715, %v2723
    %v2726 = vtanh.pop %v2725
    %2728 = vrot.lane.b32.xlu0 %v2726, 40
    %v2729 = vpop.permute.xlu0 %2728
    %v2731 = vmul.f32 %v2713, %v2729
    %vm2732 = vcmp.ge.f32.partialorder %v2731, 0.0
    %v2733 = vmul.f32 %v2731, 0.01
    %v2734 = vsel %vm2732, %v2731, %v2733
    %s2735 = scalar_lea.vmem %s19, 120
    %v2736 = vld [vmem:[%s2735] sm:$0xff]
    %v2737 = vld [vmem:[%s2735 + $0x8] sm:$0xff]
    %v2738 = vld [vmem:[%s2735 + $0x10] sm:$0xf]
    %2740 = vrot.lane.b32.xlu0 %v2734, 68
    %v2741 = vpop.permute.xlu0 %2740
    %v2742 = vsel %vm195, %v2741, 0
    %v2745 = vsel %vm199, %v2738, 0
    %2747 = vmatprep.subr.mxu0 0.0
    %2748 = vmatpush1.msra.mxu0 %v2736
    %2749 = vmatprep.subr.mxu0 0.0
    %2750 = vmatpush1.msra.mxu0 %v2737
    %2751 = vmatprep.subr.mxu0 0.0
    %2752 = vmatpush1.msra.mxu0 %v2745
    %2753 = vmatprep.subr.mxu0 0.0
    %2754 = vmatpush1.msra.mxu0 0.0
    %2755 = vmatprep.subr.mxu0 0.0
    %2756 = vmatpush1.msra.mxu0 0.0
    %2757 = vmatprep.subr.mxu0 0.0
    %2758 = vmatpush1.msra.mxu0 0.0
    %2759 = vmatprep.subr.mxu0 0.0
    %2760 = vmatpush1.msra.mxu0 0.0
    %2761 = vmatprep.subr.mxu0 0.0
    %2762 = vmatpush1.msra.mxu0 0.0
    %2763 = vmatprep.subr.mxu0 0.0
    %2764 = vmatpush1.msra.mxu0 0.0
    %2765 = vmatprep.subr.mxu0 0.0
    %2766 = vmatpush1.msra.mxu0 0.0
    %2767 = vmatprep.subr.mxu0 0.0
    %2768 = vmatpush1.msra.mxu0 0.0
    %2769 = vmatprep.subr.mxu0 0.0
    %2770 = vmatpush1.msra.mxu0 0.0
    %2771 = vmatprep.subr.mxu0 0.0
    %2772 = vmatpush1.msra.mxu0 0.0
    %2773 = vmatprep.subr.mxu0 0.0
    %2774 = vmatpush1.msra.mxu0 0.0
    %2775 = vmatprep.subr.mxu0 0.0
    %2776 = vmatpush1.msra.mxu0 0.0
    %2777 = vmatprep.subr.mxu0 0.0
    %2778 = vmatpush1.msra.mxu0 0.0
    %2779 = vmatprep.subr.mxu0 0.0
    %2780 = vmatpush1.msra.mxu0 0.0
    %2781 = vmatprep.subr.mxu0 0.0
    %2782 = vmatpush1.msra.mxu0 0.0
    %2783 = vmatprep.subr.mxu0 0.0
    %2784 = vmatpush1.msra.mxu0 0.0
    %2785 = vmatprep.subr.mxu0 0.0
    %2786 = vmatpush1.msra.mxu0 0.0
    %2787 = vmatprep.subr.mxu0 0.0
    %2788 = vmatpush1.msra.mxu0 0.0
    %2789 = vmatprep.subr.mxu0 0.0
    %2790 = vmatpush1.msra.mxu0 0.0
    %2791 = vmatprep.subr.mxu0 0.0
    %2792 = vmatpush1.msra.mxu0 0.0
    %2793 = vmatprep.subr.mxu0 0.0
    %2794 = vmatpush1.msra.mxu0 0.0
    %2795 = vmatprep.subr.mxu0 0.0
    %2796 = vmatpush1.msra.mxu0 0.0
    %2797 = vmatprep.subr.mxu0 0.0
    %2798 = vmatpush1.msra.mxu0 0.0
    %2799 = vmatprep.subr.mxu0 0.0
    %2800 = vmatpush1.msra.mxu0 0.0
    %2801 = vmatprep.subr.mxu0 0.0
    %2802 = vmatpush1.msra.mxu0 0.0
    %2803 = vmatprep.subr.mxu0 0.0
    %2804 = vmatpush1.msra.mxu0 0.0
    %2805 = vmatprep.subr.mxu0 0.0
    %2806 = vmatpush1.msra.mxu0 0.0
    %2807 = vmatprep.subr.mxu0 0.0
    %2808 = vmatpush1.msra.mxu0 0.0
    %2809 = vmatprep.subr.mxu0 0.0
    %2810 = vmatpush1.msra.mxu0 0.0
    %2811 = vmatprep.mubr.f32.mxu0 0.0
    %2812 = vmatmul.mubr.f32.gmra.mrb[0].mxu0 %v2742
    %v2813 = vpop.f32.mrb[0].mxu0
    %v2814 = vadd.f32 0.0, %v2813
    %v2815 = vpop.f32.mrb[0].mxu0
    %2816 = vdwg.mxu0
    %v2817 = vadd.f32 %v2631, %v2814
    %2819 = vrot.lane.b32.xlu0 %v2731, 68
    %v2820 = vpop.permute.xlu0 %2819
    %v2821 = vsel %vm195, %v2820, 0
    %2823 = vmatprep.subr.mxu0 0.0
    %2824 = vmatpush1.msra.mxu0 %v1701
    %2825 = vmatprep.subr.mxu0 0.0
    %2826 = vmatpush1.msra.mxu0 %v1702
    %2827 = vmatprep.subr.mxu0 0.0
    %2828 = vmatpush1.msra.mxu0 %v1708
    %2829 = vmatprep.subr.mxu0 0.0
    %2830 = vmatpush1.msra.mxu0 0.0
    %2831 = vmatprep.subr.mxu0 0.0
    %2832 = vmatpush1.msra.mxu0 0.0
    %2833 = vmatprep.subr.mxu0 0.0
    %2834 = vmatpush1.msra.mxu0 0.0
    %2835 = vmatprep.subr.mxu0 0.0
    %2836 = vmatpush1.msra.mxu0 0.0
    %2837 = vmatprep.subr.mxu0 0.0
    %2838 = vmatpush1.msra.mxu0 0.0
    %2839 = vmatprep.subr.mxu0 0.0
    %2840 = vmatpush1.msra.mxu0 0.0
    %2841 = vmatprep.subr.mxu0 0.0
    %2842 = vmatpush1.msra.mxu0 0.0
    %2843 = vmatprep.subr.mxu0 0.0
    %2844 = vmatpush1.msra.mxu0 0.0
    %2845 = vmatprep.subr.mxu0 0.0
    %2846 = vmatpush1.msra.mxu0 0.0
    %2847 = vmatprep.subr.mxu0 0.0
    %2848 = vmatpush1.msra.mxu0 0.0
    %2849 = vmatprep.subr.mxu0 0.0
    %2850 = vmatpush1.msra.mxu0 0.0
    %2851 = vmatprep.subr.mxu0 0.0
    %2852 = vmatpush1.msra.mxu0 0.0
    %2853 = vmatprep.subr.mxu0 0.0
    %2854 = vmatpush1.msra.mxu0 0.0
    %2855 = vmatprep.subr.mxu0 0.0
    %2856 = vmatpush1.msra.mxu0 0.0
    %2857 = vmatprep.subr.mxu0 0.0
    %2858 = vmatpush1.msra.mxu0 0.0
    %2859 = vmatprep.subr.mxu0 0.0
    %2860 = vmatpush1.msra.mxu0 0.0
    %2861 = vmatprep.subr.mxu0 0.0
    %2862 = vmatpush1.msra.mxu0 0.0
    %2863 = vmatprep.subr.mxu0 0.0
    %2864 = vmatpush1.msra.mxu0 0.0
    %2865 = vmatprep.subr.mxu0 0.0
    %2866 = vmatpush1.msra.mxu0 0.0
    %2867 = vmatprep.subr.mxu0 0.0
    %2868 = vmatpush1.msra.mxu0 0.0
    %2869 = vmatprep.subr.mxu0 0.0
    %2870 = vmatpush1.msra.mxu0 0.0
    %2871 = vmatprep.subr.mxu0 0.0
    %2872 = vmatpush1.msra.mxu0 0.0
    %2873 = vmatprep.subr.mxu0 0.0
    %2874 = vmatpush1.msra.mxu0 0.0
    %2875 = vmatprep.subr.mxu0 0.0
    %2876 = vmatpush1.msra.mxu0 0.0
    %2877 = vmatprep.subr.mxu0 0.0
    %2878 = vmatpush1.msra.mxu0 0.0
    %2879 = vmatprep.subr.mxu0 0.0
    %2880 = vmatpush1.msra.mxu0 0.0
    %2881 = vmatprep.subr.mxu0 0.0
    %2882 = vmatpush1.msra.mxu0 0.0
    %2883 = vmatprep.subr.mxu0 0.0
    %2884 = vmatpush1.msra.mxu0 0.0
    %2885 = vmatprep.subr.mxu0 0.0
    %2886 = vmatpush1.msra.mxu0 0.0
    %2887 = vmatprep.mubr.f32.mxu0 0.0
    %2888 = vmatmul.mubr.f32.gmra.mrb[0].mxu0 %v2821
    %v2889 = vpop.f32.mrb[0].mxu0
    %v2890 = vadd.f32 0.0, %v2889
    %v2891 = vpop.f32.mrb[0].mxu0
    %2892 = vdwg.mxu0
    %v2893 = vadd.f32 %v1485, %v2890
    %v2894 = vxor.u32 %v2893, 2147483648
    %v2895 = vmul.f32 %v2894, 1.442695
    %v2896 = vpow.pop %v2895
    %v2897 = vadd.f32 %v2896, 1.0
    %v2898 = vrcp.pop %v2897
    %v2899 = vmul.f32 1.0, %v2898
    %v2900 = vtanh.pop %v2893
    %v2901 = vmul.f32 %v2899, %v2725
    %2903 = vrot.lane.b32.xlu0 %v2900, 88
    %v2904 = vpop.permute.xlu0 %2903
    %v2906 = vmul.f32 %v2899, %v2904
    %2908 = vrot.lane.b32.xlu0 %v2906, 20
    %v2909 = vpop.permute.xlu0 %2908
    %v2911 = vadd.f32 %v2901, %v2909
    %v2912 = vtanh.pop %v2911
    %2914 = vrot.lane.b32.xlu0 %v2912, 40
    %v2915 = vpop.permute.xlu0 %2914
    %v2917 = vmul.f32 %v2899, %v2915
    %vm2918 = vcmp.ge.f32.partialorder %v2917, 0.0
    %v2919 = vmul.f32 %v2917, 0.01
    %v2920 = vsel %vm2918, %v2917, %v2919
    %s2921 = scalar_lea.vmem %s19, 144
    %v2922 = vld [vmem:[%s2921] sm:$0xff]
    %v2923 = vld [vmem:[%s2921 + $0x8] sm:$0xff]
    %v2924 = vld [vmem:[%s2921 + $0x10] sm:$0xf]
    %2926 = vrot.lane.b32.xlu0 %v2920, 68
    %v2927 = vpop.permute.xlu0 %2926
    %v2928 = vsel %vm195, %v2927, 0
    %v2931 = vsel %vm199, %v2924, 0
    %2933 = vmatprep.subr.mxu0 0.0
    %2934 = vmatpush1.msra.mxu0 %v2922
    %2935 = vmatprep.subr.mxu0 0.0
    %2936 = vmatpush1.msra.mxu0 %v2923
    %2937 = vmatprep.subr.mxu0 0.0
    %2938 = vmatpush1.msra.mxu0 %v2931
    %2939 = vmatprep.subr.mxu0 0.0
    %2940 = vmatpush1.msra.mxu0 0.0
    %2941 = vmatprep.subr.mxu0 0.0
    %2942 = vmatpush1.msra.mxu0 0.0
    %2943 = vmatprep.subr.mxu0 0.0
    %2944 = vmatpush1.msra.mxu0 0.0
    %2945 = vmatprep.subr.mxu0 0.0
    %2946 = vmatpush1.msra.mxu0 0.0
    %2947 = vmatprep.subr.mxu0 0.0
    %2948 = vmatpush1.msra.mxu0 0.0
    %2949 = vmatprep.subr.mxu0 0.0
    %2950 = vmatpush1.msra.mxu0 0.0
    %2951 = vmatprep.subr.mxu0 0.0
    %2952 = vmatpush1.msra.mxu0 0.0
    %2953 = vmatprep.subr.mxu0 0.0
    %2954 = vmatpush1.msra.mxu0 0.0
    %2955 = vmatprep.subr.mxu0 0.0
    %2956 = vmatpush1.msra.mxu0 0.0
    %2957 = vmatprep.subr.mxu0 0.0
    %2958 = vmatpush1.msra.mxu0 0.0
    %2959 = vmatprep.subr.mxu0 0.0
    %2960 = vmatpush1.msra.mxu0 0.0
    %2961 = vmatprep.subr.mxu0 0.0
    %2962 = vmatpush1.msra.mxu0 0.0
    %2963 = vmatprep.subr.mxu0 0.0
    %2964 = vmatpush1.msra.mxu0 0.0
    %2965 = vmatprep.subr.mxu0 0.0
    %2966 = vmatpush1.msra.mxu0 0.0
    %2967 = vmatprep.subr.mxu0 0.0
    %2968 = vmatpush1.msra.mxu0 0.0
    %2969 = vmatprep.subr.mxu0 0.0
    %2970 = vmatpush1.msra.mxu0 0.0
    %2971 = vmatprep.subr.mxu0 0.0
    %2972 = vmatpush1.msra.mxu0 0.0
    %2973 = vmatprep.subr.mxu0 0.0
    %2974 = vmatpush1.msra.mxu0 0.0
    %2975 = vmatprep.subr.mxu0 0.0
    %2976 = vmatpush1.msra.mxu0 0.0
    %2977 = vmatprep.subr.mxu0 0.0
    %2978 = vmatpush1.msra.mxu0 0.0
    %2979 = vmatprep.subr.mxu0 0.0
    %2980 = vmatpush1.msra.mxu0 0.0
    %2981 = vmatprep.subr.mxu0 0.0
    %2982 = vmatpush1.msra.mxu0 0.0
    %2983 = vmatprep.subr.mxu0 0.0
    %2984 = vmatpush1.msra.mxu0 0.0
    %2985 = vmatprep.subr.mxu0 0.0
    %2986 = vmatpush1.msra.mxu0 0.0
    %2987 = vmatprep.subr.mxu0 0.0
    %2988 = vmatpush1.msra.mxu0 0.0
    %2989 = vmatprep.subr.mxu0 0.0
    %2990 = vmatpush1.msra.mxu0 0.0
    %2991 = vmatprep.subr.mxu0 0.0
    %2992 = vmatpush1.msra.mxu0 0.0
    %2993 = vmatprep.subr.mxu0 0.0
    %2994 = vmatpush1.msra.mxu0 0.0
    %2995 = vmatprep.subr.mxu0 0.0
    %2996 = vmatpush1.msra.mxu0 0.0
    %2997 = vmatprep.mubr.f32.mxu0 0.0
    %2998 = vmatmul.mubr.f32.gmra.mrb[0].mxu0 %v2928
    %v2999 = vpop.f32.mrb[0].mxu0
    %v3000 = vadd.f32 0.0, %v2999
    %v3001 = vpop.f32.mrb[0].mxu0
    %3002 = vdwg.mxu0
    %v3003 = vadd.f32 %v2817, %v3000
    %3005 = vrot.lane.b32.xlu0 %v2917, 68
    %v3006 = vpop.permute.xlu0 %3005
    %v3007 = vsel %vm195, %v3006, 0
    %3009 = vmatprep.subr.mxu0 0.0
    %3010 = vmatpush1.msra.mxu0 %v1701
    %3011 = vmatprep.subr.mxu0 0.0
    %3012 = vmatpush1.msra.mxu0 %v1702
    %3013 = vmatprep.subr.mxu0 0.0
    %3014 = vmatpush1.msra.mxu0 %v1708
    %3015 = vmatprep.subr.mxu0 0.0
    %3016 = vmatpush1.msra.mxu0 0.0
    %3017 = vmatprep.subr.mxu0 0.0
    %3018 = vmatpush1.msra.mxu0 0.0
    %3019 = vmatprep.subr.mxu0 0.0
    %3020 = vmatpush1.msra.mxu0 0.0
    %3021 = vmatprep.subr.mxu0 0.0
    %3022 = vmatpush1.msra.mxu0 0.0
    %3023 = vmatprep.subr.mxu0 0.0
    %3024 = vmatpush1.msra.mxu0 0.0
    %3025 = vmatprep.subr.mxu0 0.0
    %3026 = vmatpush1.msra.mxu0 0.0
    %3027 = vmatprep.subr.mxu0 0.0
    %3028 = vmatpush1.msra.mxu0 0.0
    %3029 = vmatprep.subr.mxu0 0.0
    %3030 = vmatpush1.msra.mxu0 0.0
    %3031 = vmatprep.subr.mxu0 0.0
    %3032 = vmatpush1.msra.mxu0 0.0
    %3033 = vmatprep.subr.mxu0 0.0
    %3034 = vmatpush1.msra.mxu0 0.0
    %3035 = vmatprep.subr.mxu0 0.0
    %3036 = vmatpush1.msra.mxu0 0.0
    %3037 = vmatprep.subr.mxu0 0.0
    %3038 = vmatpush1.msra.mxu0 0.0
    %3039 = vmatprep.subr.mxu0 0.0
    %3040 = vmatpush1.msra.mxu0 0.0
    %3041 = vmatprep.subr.mxu0 0.0
    %3042 = vmatpush1.msra.mxu0 0.0
    %3043 = vmatprep.subr.mxu0 0.0
    %3044 = vmatpush1.msra.mxu0 0.0
    %3045 = vmatprep.subr.mxu0 0.0
    %3046 = vmatpush1.msra.mxu0 0.0
    %3047 = vmatprep.subr.mxu0 0.0
    %3048 = vmatpush1.msra.mxu0 0.0
    %3049 = vmatprep.subr.mxu0 0.0
    %3050 = vmatpush1.msra.mxu0 0.0
    %3051 = vmatprep.subr.mxu0 0.0
    %3052 = vmatpush1.msra.mxu0 0.0
    %3053 = vmatprep.subr.mxu0 0.0
    %3054 = vmatpush1.msra.mxu0 0.0
    %3055 = vmatprep.subr.mxu0 0.0
    %3056 = vmatpush1.msra.mxu0 0.0
    %3057 = vmatprep.subr.mxu0 0.0
    %3058 = vmatpush1.msra.mxu0 0.0
    %3059 = vmatprep.subr.mxu0 0.0
    %3060 = vmatpush1.msra.mxu0 0.0
    %3061 = vmatprep.subr.mxu0 0.0
    %3062 = vmatpush1.msra.mxu0 0.0
    %3063 = vmatprep.subr.mxu0 0.0
    %3064 = vmatpush1.msra.mxu0 0.0
    %3065 = vmatprep.subr.mxu0 0.0
    %3066 = vmatpush1.msra.mxu0 0.0
    %3067 = vmatprep.subr.mxu0 0.0
    %3068 = vmatpush1.msra.mxu0 0.0
    %3069 = vmatprep.subr.mxu0 0.0
    %3070 = vmatpush1.msra.mxu0 0.0
    %3071 = vmatprep.subr.mxu0 0.0
    %3072 = vmatpush1.msra.mxu0 0.0
    %3073 = vmatprep.mubr.f32.mxu0 0.0
    %3074 = vmatmul.mubr.f32.gmra.mrb[0].mxu0 %v3007
    %v3075 = vpop.f32.mrb[0].mxu0
    %v3076 = vadd.f32 0.0, %v3075
    %v3077 = vpop.f32.mrb[0].mxu0
    %3078 = vdwg.mxu0
    %v3079 = vadd.f32 %v1487, %v3076
    %v3080 = vxor.u32 %v3079, 2147483648
    %v3081 = vmul.f32 %v3080, 1.442695
    %v3082 = vpow.pop %v3081
    %v3083 = vadd.f32 %v3082, 1.0
    %v3084 = vrcp.pop %v3083
    %v3085 = vmul.f32 1.0, %v3084
    %v3086 = vtanh.pop %v3079
    %v3087 = vmul.f32 %v3085, %v2911
    %3089 = vrot.lane.b32.xlu0 %v3086, 88
    %v3090 = vpop.permute.xlu0 %3089
    %v3092 = vmul.f32 %v3085, %v3090
    %3094 = vrot.lane.b32.xlu0 %v3092, 20
    %v3095 = vpop.permute.xlu0 %3094
    %v3097 = vadd.f32 %v3087, %v3095
    %v3098 = vtanh.pop %v3097
    %3100 = vrot.lane.b32.xlu0 %v3098, 40
    %v3101 = vpop.permute.xlu0 %3100
    %v3103 = vmul.f32 %v3085, %v3101
    %vm3104 = vcmp.ge.f32.partialorder %v3103, 0.0
    %v3105 = vmul.f32 %v3103, 0.01
    %v3106 = vsel %vm3104, %v3103, %v3105
    %s3107 = scalar_lea.vmem %s19, 168
    %v3108 = vld [vmem:[%s3107] sm:$0xff]
    %v3109 = vld [vmem:[%s3107 + $0x8] sm:$0xff]
    %v3110 = vld [vmem:[%s3107 + $0x10] sm:$0xf]
    %3112 = vrot.lane.b32.xlu0 %v3106, 68
    %v3113 = vpop.permute.xlu0 %3112
    %v3114 = vsel %vm195, %v3113, 0
    %v3117 = vsel %vm199, %v3110, 0
    %3119 = vmatprep.subr.mxu0 0.0
    %3120 = vmatpush1.msra.mxu0 %v3108
    %3121 = vmatprep.subr.mxu0 0.0
    %3122 = vmatpush1.msra.mxu0 %v3109
    %3123 = vmatprep.subr.mxu0 0.0
    %3124 = vmatpush1.msra.mxu0 %v3117
    %3125 = vmatprep.subr.mxu0 0.0
    %3126 = vmatpush1.msra.mxu0 0.0
    %3127 = vmatprep.subr.mxu0 0.0
    %3128 = vmatpush1.msra.mxu0 0.0
    %3129 = vmatprep.subr.mxu0 0.0
    %3130 = vmatpush1.msra.mxu0 0.0
    %3131 = vmatprep.subr.mxu0 0.0
    %3132 = vmatpush1.msra.mxu0 0.0
    %3133 = vmatprep.subr.mxu0 0.0
    %3134 = vmatpush1.msra.mxu0 0.0
    %3135 = vmatprep.subr.mxu0 0.0
    %3136 = vmatpush1.msra.mxu0 0.0
    %3137 = vmatprep.subr.mxu0 0.0
    %3138 = vmatpush1.msra.mxu0 0.0
    %3139 = vmatprep.subr.mxu0 0.0
    %3140 = vmatpush1.msra.mxu0 0.0
    %3141 = vmatprep.subr.mxu0 0.0
    %3142 = vmatpush1.msra.mxu0 0.0
    %3143 = vmatprep.subr.mxu0 0.0
    %3144 = vmatpush1.msra.mxu0 0.0
    %3145 = vmatprep.subr.mxu0 0.0
    %3146 = vmatpush1.msra.mxu0 0.0
    %3147 = vmatprep.subr.mxu0 0.0
    %3148 = vmatpush1.msra.mxu0 0.0
    %3149 = vmatprep.subr.mxu0 0.0
    %3150 = vmatpush1.msra.mxu0 0.0
    %3151 = vmatprep.subr.mxu0 0.0
    %3152 = vmatpush1.msra.mxu0 0.0
    %3153 = vmatprep.subr.mxu0 0.0
    %3154 = vmatpush1.msra.mxu0 0.0
    %3155 = vmatprep.subr.mxu0 0.0
    %3156 = vmatpush1.msra.mxu0 0.0
    %3157 = vmatprep.subr.mxu0 0.0
    %3158 = vmatpush1.msra.mxu0 0.0
    %3159 = vmatprep.subr.mxu0 0.0
    %3160 = vmatpush1.msra.mxu0 0.0
    %3161 = vmatprep.subr.mxu0 0.0
    %3162 = vmatpush1.msra.mxu0 0.0
    %3163 = vmatprep.subr.mxu0 0.0
    %3164 = vmatpush1.msra.mxu0 0.0
    %3165 = vmatprep.subr.mxu0 0.0
    %3166 = vmatpush1.msra.mxu0 0.0
    %3167 = vmatprep.subr.mxu0 0.0
    %3168 = vmatpush1.msra.mxu0 0.0
    %3169 = vmatprep.subr.mxu0 0.0
    %3170 = vmatpush1.msra.mxu0 0.0
    %3171 = vmatprep.subr.mxu0 0.0
    %3172 = vmatpush1.msra.mxu0 0.0
    %3173 = vmatprep.subr.mxu0 0.0
    %3174 = vmatpush1.msra.mxu0 0.0
    %3175 = vmatprep.subr.mxu0 0.0
    %3176 = vmatpush1.msra.mxu0 0.0
    %3177 = vmatprep.subr.mxu0 0.0
    %3178 = vmatpush1.msra.mxu0 0.0
    %3179 = vmatprep.subr.mxu0 0.0
    %3180 = vmatpush1.msra.mxu0 0.0
    %3181 = vmatprep.subr.mxu0 0.0
    %3182 = vmatpush1.msra.mxu0 0.0
    %3183 = vmatprep.mubr.f32.mxu0 0.0
    %3184 = vmatmul.mubr.f32.gmra.mrb[0].mxu0 %v3114
    %v3185 = vpop.f32.mrb[0].mxu0
    %v3186 = vadd.f32 0.0, %v3185
    %v3187 = vpop.f32.mrb[0].mxu0
    %3188 = vdwg.mxu0
    %v3189 = vadd.f32 %v3003, %v3186
    %3191 = vrot.lane.b32.xlu0 %v3103, 68
    %v3192 = vpop.permute.xlu0 %3191
    %v3193 = vsel %vm195, %v3192, 0
    %3195 = vmatprep.subr.mxu0 0.0
    %3196 = vmatpush1.msra.mxu0 %v1701
    %3197 = vmatprep.subr.mxu0 0.0
    %3198 = vmatpush1.msra.mxu0 %v1702
    %3199 = vmatprep.subr.mxu0 0.0
    %3200 = vmatpush1.msra.mxu0 %v1708
    %3201 = vmatprep.subr.mxu0 0.0
    %3202 = vmatpush1.msra.mxu0 0.0
    %3203 = vmatprep.subr.mxu0 0.0
    %3204 = vmatpush1.msra.mxu0 0.0
    %3205 = vmatprep.subr.mxu0 0.0
    %3206 = vmatpush1.msra.mxu0 0.0
    %3207 = vmatprep.subr.mxu0 0.0
    %3208 = vmatpush1.msra.mxu0 0.0
    %3209 = vmatprep.subr.mxu0 0.0
    %3210 = vmatpush1.msra.mxu0 0.0
    %3211 = vmatprep.subr.mxu0 0.0
    %3212 = vmatpush1.msra.mxu0 0.0
    %3213 = vmatprep.subr.mxu0 0.0
    %3214 = vmatpush1.msra.mxu0 0.0
    %3215 = vmatprep.subr.mxu0 0.0
    %3216 = vmatpush1.msra.mxu0 0.0
    %3217 = vmatprep.subr.mxu0 0.0
    %3218 = vmatpush1.msra.mxu0 0.0
    %3219 = vmatprep.subr.mxu0 0.0
    %3220 = vmatpush1.msra.mxu0 0.0
    %3221 = vmatprep.subr.mxu0 0.0
    %3222 = vmatpush1.msra.mxu0 0.0
    %3223 = vmatprep.subr.mxu0 0.0
    %3224 = vmatpush1.msra.mxu0 0.0
    %3225 = vmatprep.subr.mxu0 0.0
    %3226 = vmatpush1.msra.mxu0 0.0
    %3227 = vmatprep.subr.mxu0 0.0
    %3228 = vmatpush1.msra.mxu0 0.0
    %3229 = vmatprep.subr.mxu0 0.0
    %3230 = vmatpush1.msra.mxu0 0.0
    %3231 = vmatprep.subr.mxu0 0.0
    %3232 = vmatpush1.msra.mxu0 0.0
    %3233 = vmatprep.subr.mxu0 0.0
    %3234 = vmatpush1.msra.mxu0 0.0
    %3235 = vmatprep.subr.mxu0 0.0
    %3236 = vmatpush1.msra.mxu0 0.0
    %3237 = vmatprep.subr.mxu0 0.0
    %3238 = vmatpush1.msra.mxu0 0.0
    %3239 = vmatprep.subr.mxu0 0.0
    %3240 = vmatpush1.msra.mxu0 0.0
    %3241 = vmatprep.subr.mxu0 0.0
    %3242 = vmatpush1.msra.mxu0 0.0
    %3243 = vmatprep.subr.mxu0 0.0
    %3244 = vmatpush1.msra.mxu0 0.0
    %3245 = vmatprep.subr.mxu0 0.0
    %3246 = vmatpush1.msra.mxu0 0.0
    %3247 = vmatprep.subr.mxu0 0.0
    %3248 = vmatpush1.msra.mxu0 0.0
    %3249 = vmatprep.subr.mxu0 0.0
    %3250 = vmatpush1.msra.mxu0 0.0
    %3251 = vmatprep.subr.mxu0 0.0
    %3252 = vmatpush1.msra.mxu0 0.0
    %3253 = vmatprep.subr.mxu0 0.0
    %3254 = vmatpush1.msra.mxu0 0.0
    %3255 = vmatprep.subr.mxu0 0.0
    %3256 = vmatpush1.msra.mxu0 0.0
    %3257 = vmatprep.subr.mxu0 0.0
    %3258 = vmatpush1.msra.mxu0 0.0
    %3259 = vmatprep.mubr.f32.mxu0 0.0
    %3260 = vmatmul.mubr.f32.gmra.mrb[0].mxu0 %v3193
    %v3261 = vpop.f32.mrb[0].mxu0
    %v3262 = vadd.f32 0.0, %v3261
    %v3263 = vpop.f32.mrb[0].mxu0
    %3264 = vdwg.mxu0
    %v3265 = vadd.f32 %v1556, %v3262
    %v3266 = vxor.u32 %v3265, 2147483648
    %v3267 = vmul.f32 %v3266, 1.442695
    %v3268 = vpow.pop %v3267
    %v3269 = vadd.f32 %v3268, 1.0
    %v3270 = vrcp.pop %v3269
    %v3271 = vmul.f32 1.0, %v3270
    %v3272 = vtanh.pop %v3265
    %v3273 = vmul.f32 %v3271, %v3097
    %3275 = vrot.lane.b32.xlu0 %v3272, 88
    %v3276 = vpop.permute.xlu0 %3275
    %v3278 = vmul.f32 %v3271, %v3276
    %3280 = vrot.lane.b32.xlu0 %v3278, 20
    %v3281 = vpop.permute.xlu0 %3280
    %v3283 = vadd.f32 %v3273, %v3281
    %v3284 = vtanh.pop %v3283
    %3286 = vrot.lane.b32.xlu0 %v3284, 40
    %v3287 = vpop.permute.xlu0 %3286
    %v3289 = vmul.f32 %v3271, %v3287
    %vm3290 = vcmp.ge.f32.partialorder %v3289, 0.0
    %v3291 = vmul.f32 %v3289, 0.01
    %v3292 = vsel %vm3290, %v3289, %v3291
    %s3293 = scalar_lea.vmem %s19, 192
    %v3294 = vld [vmem:[%s3293] sm:$0xff]
    %v3295 = vld [vmem:[%s3293 + $0x8] sm:$0xff]
    %v3296 = vld [vmem:[%s3293 + $0x10] sm:$0xf]
    %3298 = vrot.lane.b32.xlu0 %v3292, 68
    %v3299 = vpop.permute.xlu0 %3298
    %v3300 = vsel %vm195, %v3299, 0
    %v3303 = vsel %vm199, %v3296, 0
    %3305 = vmatprep.subr.mxu0 0.0
    %3306 = vmatpush1.msra.mxu0 %v3294
    %3307 = vmatprep.subr.mxu0 0.0
    %3308 = vmatpush1.msra.mxu0 %v3295
    %3309 = vmatprep.subr.mxu0 0.0
    %3310 = vmatpush1.msra.mxu0 %v3303
    %3311 = vmatprep.subr.mxu0 0.0
    %3312 = vmatpush1.msra.mxu0 0.0
    %3313 = vmatprep.subr.mxu0 0.0
    %3314 = vmatpush1.msra.mxu0 0.0
    %3315 = vmatprep.subr.mxu0 0.0
    %3316 = vmatpush1.msra.mxu0 0.0
    %3317 = vmatprep.subr.mxu0 0.0
    %3318 = vmatpush1.msra.mxu0 0.0
    %3319 = vmatprep.subr.mxu0 0.0
    %3320 = vmatpush1.msra.mxu0 0.0
    %3321 = vmatprep.subr.mxu0 0.0
    %3322 = vmatpush1.msra.mxu0 0.0
    %3323 = vmatprep.subr.mxu0 0.0
    %3324 = vmatpush1.msra.mxu0 0.0
    %3325 = vmatprep.subr.mxu0 0.0
    %3326 = vmatpush1.msra.mxu0 0.0
    %3327 = vmatprep.subr.mxu0 0.0
    %3328 = vmatpush1.msra.mxu0 0.0
    %3329 = vmatprep.subr.mxu0 0.0
    %3330 = vmatpush1.msra.mxu0 0.0
    %3331 = vmatprep.subr.mxu0 0.0
    %3332 = vmatpush1.msra.mxu0 0.0
    %3333 = vmatprep.subr.mxu0 0.0
    %3334 = vmatpush1.msra.mxu0 0.0
    %3335 = vmatprep.subr.mxu0 0.0
    %3336 = vmatpush1.msra.mxu0 0.0
    %3337 = vmatprep.subr.mxu0 0.0
    %3338 = vmatpush1.msra.mxu0 0.0
    %3339 = vmatprep.subr.mxu0 0.0
    %3340 = vmatpush1.msra.mxu0 0.0
    %3341 = vmatprep.subr.mxu0 0.0
    %3342 = vmatpush1.msra.mxu0 0.0
    %3343 = vmatprep.subr.mxu0 0.0
    %3344 = vmatpush1.msra.mxu0 0.0
    %3345 = vmatprep.subr.mxu0 0.0
    %3346 = vmatpush1.msra.mxu0 0.0
    %3347 = vmatprep.subr.mxu0 0.0
    %3348 = vmatpush1.msra.mxu0 0.0
    %3349 = vmatprep.subr.mxu0 0.0
    %3350 = vmatpush1.msra.mxu0 0.0
    %3351 = vmatprep.subr.mxu0 0.0
    %3352 = vmatpush1.msra.mxu0 0.0
    %3353 = vmatprep.subr.mxu0 0.0
    %3354 = vmatpush1.msra.mxu0 0.0
    %3355 = vmatprep.subr.mxu0 0.0
    %3356 = vmatpush1.msra.mxu0 0.0
    %3357 = vmatprep.subr.mxu0 0.0
    %3358 = vmatpush1.msra.mxu0 0.0
    %3359 = vmatprep.subr.mxu0 0.0
    %3360 = vmatpush1.msra.mxu0 0.0
    %3361 = vmatprep.subr.mxu0 0.0
    %3362 = vmatpush1.msra.mxu0 0.0
    %3363 = vmatprep.subr.mxu0 0.0
    %3364 = vmatpush1.msra.mxu0 0.0
    %3365 = vmatprep.subr.mxu0 0.0
    %3366 = vmatpush1.msra.mxu0 0.0
    %3367 = vmatprep.subr.mxu0 0.0
    %3368 = vmatpush1.msra.mxu0 0.0
    %3369 = vmatprep.mubr.f32.mxu0 0.0
    %3370 = vmatmul.mubr.f32.gmra.mrb[0].mxu0 %v3300
    %v3371 = vpop.f32.mrb[0].mxu0
    %v3372 = vadd.f32 0.0, %v3371
    %v3373 = vpop.f32.mrb[0].mxu0
    %3374 = vdwg.mxu0
    %v3375 = vadd.f32 %v3189, %v3372
    %3377 = vrot.lane.b32.xlu0 %v3289, 68
    %v3378 = vpop.permute.xlu0 %3377
    %v3379 = vsel %vm195, %v3378, 0
    %3381 = vmatprep.subr.mxu0 0.0
    %3382 = vmatpush1.msra.mxu0 %v1701
    %3383 = vmatprep.subr.mxu0 0.0
    %3384 = vmatpush1.msra.mxu0 %v1702
    %3385 = vmatprep.subr.mxu0 0.0
    %3386 = vmatpush1.msra.mxu0 %v1708
    %3387 = vmatprep.subr.mxu0 0.0
    %3388 = vmatpush1.msra.mxu0 0.0
    %3389 = vmatprep.subr.mxu0 0.0
    %3390 = vmatpush1.msra.mxu0 0.0
    %3391 = vmatprep.subr.mxu0 0.0
    %3392 = vmatpush1.msra.mxu0 0.0
    %3393 = vmatprep.subr.mxu0 0.0
    %3394 = vmatpush1.msra.mxu0 0.0
    %3395 = vmatprep.subr.mxu0 0.0
    %3396 = vmatpush1.msra.mxu0 0.0
    %3397 = vmatprep.subr.mxu0 0.0
    %3398 = vmatpush1.msra.mxu0 0.0
    %3399 = vmatprep.subr.mxu0 0.0
    %3400 = vmatpush1.msra.mxu0 0.0
    %3401 = vmatprep.subr.mxu0 0.0
    %3402 = vmatpush1.msra.mxu0 0.0
    %3403 = vmatprep.subr.mxu0 0.0
    %3404 = vmatpush1.msra.mxu0 0.0
    %3405 = vmatprep.subr.mxu0 0.0
    %3406 = vmatpush1.msra.mxu0 0.0
    %3407 = vmatprep.subr.mxu0 0.0
    %3408 = vmatpush1.msra.mxu0 0.0
    %3409 = vmatprep.subr.mxu0 0.0
    %3410 = vmatpush1.msra.mxu0 0.0
    %3411 = vmatprep.subr.mxu0 0.0
    %3412 = vmatpush1.msra.mxu0 0.0
    %3413 = vmatprep.subr.mxu0 0.0
    %3414 = vmatpush1.msra.mxu0 0.0
    %3415 = vmatprep.subr.mxu0 0.0
    %3416 = vmatpush1.msra.mxu0 0.0
    %3417 = vmatprep.subr.mxu0 0.0
    %3418 = vmatpush1.msra.mxu0 0.0
    %3419 = vmatprep.subr.mxu0 0.0
    %3420 = vmatpush1.msra.mxu0 0.0
    %3421 = vmatprep.subr.mxu0 0.0
    %3422 = vmatpush1.msra.mxu0 0.0
    %3423 = vmatprep.subr.mxu0 0.0
    %3424 = vmatpush1.msra.mxu0 0.0
    %3425 = vmatprep.subr.mxu0 0.0
    %3426 = vmatpush1.msra.mxu0 0.0
    %3427 = vmatprep.subr.mxu0 0.0
    %3428 = vmatpush1.msra.mxu0 0.0
    %3429 = vmatprep.subr.mxu0 0.0
    %3430 = vmatpush1.msra.mxu0 0.0
    %3431 = vmatprep.subr.mxu0 0.0
    %3432 = vmatpush1.msra.mxu0 0.0
    %3433 = vmatprep.subr.mxu0 0.0
    %3434 = vmatpush1.msra.mxu0 0.0
    %3435 = vmatprep.subr.mxu0 0.0
    %3436 = vmatpush1.msra.mxu0 0.0
    %3437 = vmatprep.subr.mxu0 0.0
    %3438 = vmatpush1.msra.mxu0 0.0
    %3439 = vmatprep.subr.mxu0 0.0
    %3440 = vmatpush1.msra.mxu0 0.0
    %3441 = vmatprep.subr.mxu0 0.0
    %3442 = vmatpush1.msra.mxu0 0.0
    %3443 = vmatprep.subr.mxu0 0.0
    %3444 = vmatpush1.msra.mxu0 0.0
    %3445 = vmatprep.mubr.f32.mxu0 0.0
    %3446 = vmatmul.mubr.f32.gmra.mrb[0].mxu0 %v3379
    %v3447 = vpop.f32.mrb[0].mxu0
    %v3448 = vadd.f32 0.0, %v3447
    %v3449 = vpop.f32.mrb[0].mxu0
    %3450 = vdwg.mxu0
    %v3451 = vadd.f32 %v1558, %v3448
    %v3452 = vxor.u32 %v3451, 2147483648
    %v3453 = vmul.f32 %v3452, 1.442695
    %v3454 = vpow.pop %v3453
    %v3455 = vadd.f32 %v3454, 1.0
    %v3456 = vrcp.pop %v3455
    %v3457 = vmul.f32 1.0, %v3456
    %v3458 = vtanh.pop %v3451
    %v3459 = vmul.f32 %v3457, %v3283
    %3461 = vrot.lane.b32.xlu0 %v3458, 88
    %v3462 = vpop.permute.xlu0 %3461
    %v3464 = vmul.f32 %v3457, %v3462
    %3466 = vrot.lane.b32.xlu0 %v3464, 20
    %v3467 = vpop.permute.xlu0 %3466
    %v3469 = vadd.f32 %v3459, %v3467
    %v3470 = vtanh.pop %v3469
    %3472 = vrot.lane.b32.xlu0 %v3470, 40
    %v3473 = vpop.permute.xlu0 %3472
    %v3475 = vmul.f32 %v3457, %v3473
    %vm3476 = vcmp.ge.f32.partialorder %v3475, 0.0
    %v3477 = vmul.f32 %v3475, 0.01
    %v3478 = vsel %vm3476, %v3475, %v3477
    %s3479 = scalar_lea.vmem %s19, 216
    %v3480 = vld [vmem:[%s3479] sm:$0xff]
    %v3481 = vld [vmem:[%s3479 + $0x8] sm:$0xff]
    %v3482 = vld [vmem:[%s3479 + $0x10] sm:$0xf]
    %3484 = vrot.lane.b32.xlu0 %v3478, 68
    %v3485 = vpop.permute.xlu0 %3484
    %v3486 = vsel %vm195, %v3485, 0
    %v3489 = vsel %vm199, %v3482, 0
    %3491 = vmatprep.subr.mxu0 0.0
    %3492 = vmatpush1.msra.mxu0 %v3480
    %3493 = vmatprep.subr.mxu0 0.0
    %3494 = vmatpush1.msra.mxu0 %v3481
    %3495 = vmatprep.subr.mxu0 0.0
    %3496 = vmatpush1.msra.mxu0 %v3489
    %3497 = vmatprep.subr.mxu0 0.0
    %3498 = vmatpush1.msra.mxu0 0.0
    %3499 = vmatprep.subr.mxu0 0.0
    %3500 = vmatpush1.msra.mxu0 0.0
    %3501 = vmatprep.subr.mxu0 0.0
    %3502 = vmatpush1.msra.mxu0 0.0
    %3503 = vmatprep.subr.mxu0 0.0
    %3504 = vmatpush1.msra.mxu0 0.0
    %3505 = vmatprep.subr.mxu0 0.0
    %3506 = vmatpush1.msra.mxu0 0.0
    %3507 = vmatprep.subr.mxu0 0.0
    %3508 = vmatpush1.msra.mxu0 0.0
    %3509 = vmatprep.subr.mxu0 0.0
    %3510 = vmatpush1.msra.mxu0 0.0
    %3511 = vmatprep.subr.mxu0 0.0
    %3512 = vmatpush1.msra.mxu0 0.0
    %3513 = vmatprep.subr.mxu0 0.0
    %3514 = vmatpush1.msra.mxu0 0.0
    %3515 = vmatprep.subr.mxu0 0.0
    %3516 = vmatpush1.msra.mxu0 0.0
    %3517 = vmatprep.subr.mxu0 0.0
    %3518 = vmatpush1.msra.mxu0 0.0
    %3519 = vmatprep.subr.mxu0 0.0
    %3520 = vmatpush1.msra.mxu0 0.0
    %3521 = vmatprep.subr.mxu0 0.0
    %3522 = vmatpush1.msra.mxu0 0.0
    %3523 = vmatprep.subr.mxu0 0.0
    %3524 = vmatpush1.msra.mxu0 0.0
    %3525 = vmatprep.subr.mxu0 0.0
    %3526 = vmatpush1.msra.mxu0 0.0
    %3527 = vmatprep.subr.mxu0 0.0
    %3528 = vmatpush1.msra.mxu0 0.0
    %3529 = vmatprep.subr.mxu0 0.0
    %3530 = vmatpush1.msra.mxu0 0.0
    %3531 = vmatprep.subr.mxu0 0.0
    %3532 = vmatpush1.msra.mxu0 0.0
    %3533 = vmatprep.subr.mxu0 0.0
    %3534 = vmatpush1.msra.mxu0 0.0
    %3535 = vmatprep.subr.mxu0 0.0
    %3536 = vmatpush1.msra.mxu0 0.0
    %3537 = vmatprep.subr.mxu0 0.0
    %3538 = vmatpush1.msra.mxu0 0.0
    %3539 = vmatprep.subr.mxu0 0.0
    %3540 = vmatpush1.msra.mxu0 0.0
    %3541 = vmatprep.subr.mxu0 0.0
    %3542 = vmatpush1.msra.mxu0 0.0
    %3543 = vmatprep.subr.mxu0 0.0
    %3544 = vmatpush1.msra.mxu0 0.0
    %3545 = vmatprep.subr.mxu0 0.0
    %3546 = vmatpush1.msra.mxu0 0.0
    %3547 = vmatprep.subr.mxu0 0.0
    %3548 = vmatpush1.msra.mxu0 0.0
    %3549 = vmatprep.subr.mxu0 0.0
    %3550 = vmatpush1.msra.mxu0 0.0
    %3551 = vmatprep.subr.mxu0 0.0
    %3552 = vmatpush1.msra.mxu0 0.0
    %3553 = vmatprep.subr.mxu0 0.0
    %3554 = vmatpush1.msra.mxu0 0.0
    %3555 = vmatprep.mubr.f32.mxu0 0.0
    %3556 = vmatmul.mubr.f32.gmra.mrb[0].mxu0 %v3486
    %v3557 = vpop.f32.mrb[0].mxu0
    %v3558 = vadd.f32 0.0, %v3557
    %v3559 = vpop.f32.mrb[0].mxu0
    %3560 = vdwg.mxu0
    %v3561 = vadd.f32 %v3375, %v3558
    %3563 = vrot.lane.b32.xlu0 %v3475, 68
    %v3564 = vpop.permute.xlu0 %3563
    %v3565 = vsel %vm195, %v3564, 0
    %3567 = vmatprep.subr.mxu0 0.0
    %3568 = vmatpush1.msra.mxu0 %v1701
    %3569 = vmatprep.subr.mxu0 0.0
    %3570 = vmatpush1.msra.mxu0 %v1702
    %3571 = vmatprep.subr.mxu0 0.0
    %3572 = vmatpush1.msra.mxu0 %v1708
    %3573 = vmatprep.subr.mxu0 0.0
    %3574 = vmatpush1.msra.mxu0 0.0
    %3575 = vmatprep.subr.mxu0 0.0
    %3576 = vmatpush1.msra.mxu0 0.0
    %3577 = vmatprep.subr.mxu0 0.0
    %3578 = vmatpush1.msra.mxu0 0.0
    %3579 = vmatprep.subr.mxu0 0.0
    %3580 = vmatpush1.msra.mxu0 0.0
    %3581 = vmatprep.subr.mxu0 0.0
    %3582 = vmatpush1.msra.mxu0 0.0
    %3583 = vmatprep.subr.mxu0 0.0
    %3584 = vmatpush1.msra.mxu0 0.0
    %3585 = vmatprep.subr.mxu0 0.0
    %3586 = vmatpush1.msra.mxu0 0.0
    %3587 = vmatprep.subr.mxu0 0.0
    %3588 = vmatpush1.msra.mxu0 0.0
    %3589 = vmatprep.subr.mxu0 0.0
    %3590 = vmatpush1.msra.mxu0 0.0
    %3591 = vmatprep.subr.mxu0 0.0
    %3592 = vmatpush1.msra.mxu0 0.0
    %3593 = vmatprep.subr.mxu0 0.0
    %3594 = vmatpush1.msra.mxu0 0.0
    %3595 = vmatprep.subr.mxu0 0.0
    %3596 = vmatpush1.msra.mxu0 0.0
    %3597 = vmatprep.subr.mxu0 0.0
    %3598 = vmatpush1.msra.mxu0 0.0
    %3599 = vmatprep.subr.mxu0 0.0
    %3600 = vmatpush1.msra.mxu0 0.0
    %3601 = vmatprep.subr.mxu0 0.0
    %3602 = vmatpush1.msra.mxu0 0.0
    %3603 = vmatprep.subr.mxu0 0.0
    %3604 = vmatpush1.msra.mxu0 0.0
    %3605 = vmatprep.subr.mxu0 0.0
    %3606 = vmatpush1.msra.mxu0 0.0
    %3607 = vmatprep.subr.mxu0 0.0
    %3608 = vmatpush1.msra.mxu0 0.0
    %3609 = vmatprep.subr.mxu0 0.0
    %3610 = vmatpush1.msra.mxu0 0.0
    %3611 = vmatprep.subr.mxu0 0.0
    %3612 = vmatpush1.msra.mxu0 0.0
    %3613 = vmatprep.subr.mxu0 0.0
    %3614 = vmatpush1.msra.mxu0 0.0
    %3615 = vmatprep.subr.mxu0 0.0
    %3616 = vmatpush1.msra.mxu0 0.0
    %3617 = vmatprep.subr.mxu0 0.0
    %3618 = vmatpush1.msra.mxu0 0.0
    %3619 = vmatprep.subr.mxu0 0.0
    %3620 = vmatpush1.msra.mxu0 0.0
    %3621 = vmatprep.subr.mxu0 0.0
    %3622 = vmatpush1.msra.mxu0 0.0
    %3623 = vmatprep.subr.mxu0 0.0
    %3624 = vmatpush1.msra.mxu0 0.0
    %3625 = vmatprep.subr.mxu0 0.0
    %3626 = vmatpush1.msra.mxu0 0.0
    %3627 = vmatprep.subr.mxu0 0.0
    %3628 = vmatpush1.msra.mxu0 0.0
    %3629 = vmatprep.subr.mxu0 0.0
    %3630 = vmatpush1.msra.mxu0 0.0
    %3631 = vmatprep.mubr.f32.mxu0 0.0
    %3632 = vmatmul.mubr.f32.gmra.mrb[0].mxu0 %v3565
    %v3633 = vpop.f32.mrb[0].mxu0
    %v3634 = vadd.f32 0.0, %v3633
    %v3635 = vpop.f32.mrb[0].mxu0
    %3636 = vdwg.mxu0
    %v3637 = vadd.f32 %v1627, %v3634
    %v3638 = vxor.u32 %v3637, 2147483648
    %v3639 = vmul.f32 %v3638, 1.442695
    %v3640 = vpow.pop %v3639
    %v3641 = vadd.f32 %v3640, 1.0
    %v3642 = vrcp.pop %v3641
    %v3643 = vmul.f32 1.0, %v3642
    %v3644 = vtanh.pop %v3637
    %v3645 = vmul.f32 %v3643, %v3469
    %3647 = vrot.lane.b32.xlu0 %v3644, 88
    %v3648 = vpop.permute.xlu0 %3647
    %v3650 = vmul.f32 %v3643, %v3648
    %3652 = vrot.lane.b32.xlu0 %v3650, 20
    %v3653 = vpop.permute.xlu0 %3652
    %v3655 = vadd.f32 %v3645, %v3653
    %v3656 = vtanh.pop %v3655
    %3658 = vrot.lane.b32.xlu0 %v3656, 40
    %v3659 = vpop.permute.xlu0 %3658
    %v3661 = vmul.f32 %v3643, %v3659
    %vm3662 = vcmp.ge.f32.partialorder %v3661, 0.0
    %v3663 = vmul.f32 %v3661, 0.01
    %v3664 = vsel %vm3662, %v3661, %v3663
    %s3665 = scalar_lea.vmem %s19, 240
    %v3666 = vld [vmem:[%s3665] sm:$0xff]
    %v3667 = vld [vmem:[%s3665 + $0x8] sm:$0xff]
    %v3668 = vld [vmem:[%s3665 + $0x10] sm:$0xf]
    %3670 = vrot.lane.b32.xlu0 %v3664, 68
    %v3671 = vpop.permute.xlu0 %3670
    %v3672 = vsel %vm195, %v3671, 0
    %v3675 = vsel %vm199, %v3668, 0
    %3677 = vmatprep.subr.mxu0 0.0
    %3678 = vmatpush1.msra.mxu0 %v3666
    %3679 = vmatprep.subr.mxu0 0.0
    %3680 = vmatpush1.msra.mxu0 %v3667
    %3681 = vmatprep.subr.mxu0 0.0
    %3682 = vmatpush1.msra.mxu0 %v3675
    %3683 = vmatprep.subr.mxu0 0.0
    %3684 = vmatpush1.msra.mxu0 0.0
    %3685 = vmatprep.subr.mxu0 0.0
    %3686 = vmatpush1.msra.mxu0 0.0
    %3687 = vmatprep.subr.mxu0 0.0
    %3688 = vmatpush1.msra.mxu0 0.0
    %3689 = vmatprep.subr.mxu0 0.0
    %3690 = vmatpush1.msra.mxu0 0.0
    %3691 = vmatprep.subr.mxu0 0.0
    %3692 = vmatpush1.msra.mxu0 0.0
    %3693 = vmatprep.subr.mxu0 0.0
    %3694 = vmatpush1.msra.mxu0 0.0
    %3695 = vmatprep.subr.mxu0 0.0
    %3696 = vmatpush1.msra.mxu0 0.0
    %3697 = vmatprep.subr.mxu0 0.0
    %3698 = vmatpush1.msra.mxu0 0.0
    %3699 = vmatprep.subr.mxu0 0.0
    %3700 = vmatpush1.msra.mxu0 0.0
    %3701 = vmatprep.subr.mxu0 0.0
    %3702 = vmatpush1.msra.mxu0 0.0
    %3703 = vmatprep.subr.mxu0 0.0
    %3704 = vmatpush1.msra.mxu0 0.0
    %3705 = vmatprep.subr.mxu0 0.0
    %3706 = vmatpush1.msra.mxu0 0.0
    %3707 = vmatprep.subr.mxu0 0.0
    %3708 = vmatpush1.msra.mxu0 0.0
    %3709 = vmatprep.subr.mxu0 0.0
    %3710 = vmatpush1.msra.mxu0 0.0
    %3711 = vmatprep.subr.mxu0 0.0
    %3712 = vmatpush1.msra.mxu0 0.0
    %3713 = vmatprep.subr.mxu0 0.0
    %3714 = vmatpush1.msra.mxu0 0.0
    %3715 = vmatprep.subr.mxu0 0.0
    %3716 = vmatpush1.msra.mxu0 0.0
    %3717 = vmatprep.subr.mxu0 0.0
    %3718 = vmatpush1.msra.mxu0 0.0
    %3719 = vmatprep.subr.mxu0 0.0
    %3720 = vmatpush1.msra.mxu0 0.0
    %3721 = vmatprep.subr.mxu0 0.0
    %3722 = vmatpush1.msra.mxu0 0.0
    %3723 = vmatprep.subr.mxu0 0.0
    %3724 = vmatpush1.msra.mxu0 0.0
    %3725 = vmatprep.subr.mxu0 0.0
    %3726 = vmatpush1.msra.mxu0 0.0
    %3727 = vmatprep.subr.mxu0 0.0
    %3728 = vmatpush1.msra.mxu0 0.0
    %3729 = vmatprep.subr.mxu0 0.0
    %3730 = vmatpush1.msra.mxu0 0.0
    %3731 = vmatprep.subr.mxu0 0.0
    %3732 = vmatpush1.msra.mxu0 0.0
    %3733 = vmatprep.subr.mxu0 0.0
    %3734 = vmatpush1.msra.mxu0 0.0
    %3735 = vmatprep.subr.mxu0 0.0
    %3736 = vmatpush1.msra.mxu0 0.0
    %3737 = vmatprep.subr.mxu0 0.0
    %3738 = vmatpush1.msra.mxu0 0.0
    %3739 = vmatprep.subr.mxu0 0.0
    %3740 = vmatpush1.msra.mxu0 0.0
    %3741 = vmatprep.mubr.f32.mxu0 0.0
    %3742 = vmatmul.mubr.f32.gmra.mrb[0].mxu0 %v3672
    %v3743 = vpop.f32.mrb[0].mxu0
    %v3744 = vadd.f32 0.0, %v3743
    %v3745 = vpop.f32.mrb[0].mxu0
    %3746 = vdwg.mxu0
    %v3747 = vadd.f32 %v3561, %v3744
    %3749 = vrot.lane.b32.xlu0 %v3661, 68
    %v3750 = vpop.permute.xlu0 %3749
    %v3751 = vsel %vm195, %v3750, 0
    %3753 = vmatprep.subr.mxu0 0.0
    %3754 = vmatpush1.msra.mxu0 %v1701
    %3755 = vmatprep.subr.mxu0 0.0
    %3756 = vmatpush1.msra.mxu0 %v1702
    %3757 = vmatprep.subr.mxu0 0.0
    %3758 = vmatpush1.msra.mxu0 %v1708
    %3759 = vmatprep.subr.mxu0 0.0
    %3760 = vmatpush1.msra.mxu0 0.0
    %3761 = vmatprep.subr.mxu0 0.0
    %3762 = vmatpush1.msra.mxu0 0.0
    %3763 = vmatprep.subr.mxu0 0.0
    %3764 = vmatpush1.msra.mxu0 0.0
    %3765 = vmatprep.subr.mxu0 0.0
    %3766 = vmatpush1.msra.mxu0 0.0
    %3767 = vmatprep.subr.mxu0 0.0
    %3768 = vmatpush1.msra.mxu0 0.0
    %3769 = vmatprep.subr.mxu0 0.0
    %3770 = vmatpush1.msra.mxu0 0.0
    %3771 = vmatprep.subr.mxu0 0.0
    %3772 = vmatpush1.msra.mxu0 0.0
    %3773 = vmatprep.subr.mxu0 0.0
    %3774 = vmatpush1.msra.mxu0 0.0
    %3775 = vmatprep.subr.mxu0 0.0
    %3776 = vmatpush1.msra.mxu0 0.0
    %3777 = vmatprep.subr.mxu0 0.0
    %3778 = vmatpush1.msra.mxu0 0.0
    %3779 = vmatprep.subr.mxu0 0.0
    %3780 = vmatpush1.msra.mxu0 0.0
    %3781 = vmatprep.subr.mxu0 0.0
    %3782 = vmatpush1.msra.mxu0 0.0
    %3783 = vmatprep.subr.mxu0 0.0
    %3784 = vmatpush1.msra.mxu0 0.0
    %3785 = vmatprep.subr.mxu0 0.0
    %3786 = vmatpush1.msra.mxu0 0.0
    %3787 = vmatprep.subr.mxu0 0.0
    %3788 = vmatpush1.msra.mxu0 0.0
    %3789 = vmatprep.subr.mxu0 0.0
    %3790 = vmatpush1.msra.mxu0 0.0
    %3791 = vmatprep.subr.mxu0 0.0
    %3792 = vmatpush1.msra.mxu0 0.0
    %3793 = vmatprep.subr.mxu0 0.0
    %3794 = vmatpush1.msra.mxu0 0.0
    %3795 = vmatprep.subr.mxu0 0.0
    %3796 = vmatpush1.msra.mxu0 0.0
    %3797 = vmatprep.subr.mxu0 0.0
    %3798 = vmatpush1.msra.mxu0 0.0
    %3799 = vmatprep.subr.mxu0 0.0
    %3800 = vmatpush1.msra.mxu0 0.0
    %3801 = vmatprep.subr.mxu0 0.0
    %3802 = vmatpush1.msra.mxu0 0.0
    %3803 = vmatprep.subr.mxu0 0.0
    %3804 = vmatpush1.msra.mxu0 0.0
    %3805 = vmatprep.subr.mxu0 0.0
    %3806 = vmatpush1.msra.mxu0 0.0
    %3807 = vmatprep.subr.mxu0 0.0
    %3808 = vmatpush1.msra.mxu0 0.0
    %3809 = vmatprep.subr.mxu0 0.0
    %3810 = vmatpush1.msra.mxu0 0.0
    %3811 = vmatprep.subr.mxu0 0.0
    %3812 = vmatpush1.msra.mxu0 0.0
    %3813 = vmatprep.subr.mxu0 0.0
    %3814 = vmatpush1.msra.mxu0 0.0
    %3815 = vmatprep.subr.mxu0 0.0
    %3816 = vmatpush1.msra.mxu0 0.0
    %3817 = vmatprep.mubr.f32.mxu0 0.0
    %3818 = vmatmul.mubr.f32.gmra.mrb[0].mxu0 %v3751
    %v3819 = vpop.f32.mrb[0].mxu0
    %v3820 = vadd.f32 0.0, %v3819
    %v3821 = vpop.f32.mrb[0].mxu0
    %3822 = vdwg.mxu0
    %v3823 = vadd.f32 %v1629, %v3820
    %v3824 = vxor.u32 %v3823, 2147483648
    %v3825 = vmul.f32 %v3824, 1.442695
    %v3826 = vpow.pop %v3825
    %v3827 = vadd.f32 %v3826, 1.0
    %v3828 = vrcp.pop %v3827
    %v3829 = vmul.f32 1.0, %v3828
    %v3830 = vtanh.pop %v3823
    %v3831 = vmul.f32 %v3829, %v3655
    %3833 = vrot.lane.b32.xlu0 %v3830, 88
    %v3834 = vpop.permute.xlu0 %3833
    %v3836 = vmul.f32 %v3829, %v3834
    %3838 = vrot.lane.b32.xlu0 %v3836, 20
    %v3839 = vpop.permute.xlu0 %3838
    %v3841 = vadd.f32 %v3831, %v3839
    %v3842 = vtanh.pop %v3841
    %3844 = vrot.lane.b32.xlu0 %v3842, 40
    %v3845 = vpop.permute.xlu0 %3844
    %v3847 = vmul.f32 %v3829, %v3845
    %vm3848 = vcmp.ge.f32.partialorder %v3847, 0.0
    %v3849 = vmul.f32 %v3847, 0.01
    %v3850 = vsel %vm3848, %v3847, %v3849
    %s3851 = scalar_lea.vmem %s19, 264
    %v3852 = vld [vmem:[%s3851] sm:$0xff]
    %v3853 = vld [vmem:[%s3851 + $0x8] sm:$0xff]
    %v3854 = vld [vmem:[%s3851 + $0x10] sm:$0xf]
    %3856 = vrot.lane.b32.xlu0 %v3850, 68
    %v3857 = vpop.permute.xlu0 %3856
    %v3858 = vsel %vm195, %v3857, 0
    %v3861 = vsel %vm199, %v3854, 0
    %3863 = vmatprep.subr.mxu0 0.0
    %3864 = vmatpush1.msra.mxu0 %v3852
    %3865 = vmatprep.subr.mxu0 0.0
    %3866 = vmatpush1.msra.mxu0 %v3853
    %3867 = vmatprep.subr.mxu0 0.0
    %3868 = vmatpush1.msra.mxu0 %v3861
    %3869 = vmatprep.subr.mxu0 0.0
    %3870 = vmatpush1.msra.mxu0 0.0
    %3871 = vmatprep.subr.mxu0 0.0
    %3872 = vmatpush1.msra.mxu0 0.0
    %3873 = vmatprep.subr.mxu0 0.0
    %3874 = vmatpush1.msra.mxu0 0.0
    %3875 = vmatprep.subr.mxu0 0.0
    %3876 = vmatpush1.msra.mxu0 0.0
    %3877 = vmatprep.subr.mxu0 0.0
    %3878 = vmatpush1.msra.mxu0 0.0
    %3879 = vmatprep.subr.mxu0 0.0
    %3880 = vmatpush1.msra.mxu0 0.0
    %3881 = vmatprep.subr.mxu0 0.0
    %3882 = vmatpush1.msra.mxu0 0.0
    %3883 = vmatprep.subr.mxu0 0.0
    %3884 = vmatpush1.msra.mxu0 0.0
    %3885 = vmatprep.subr.mxu0 0.0
    %3886 = vmatpush1.msra.mxu0 0.0
    %3887 = vmatprep.subr.mxu0 0.0
    %3888 = vmatpush1.msra.mxu0 0.0
    %3889 = vmatprep.subr.mxu0 0.0
    %3890 = vmatpush1.msra.mxu0 0.0
    %3891 = vmatprep.subr.mxu0 0.0
    %3892 = vmatpush1.msra.mxu0 0.0
    %3893 = vmatprep.subr.mxu0 0.0
    %3894 = vmatpush1.msra.mxu0 0.0
    %3895 = vmatprep.subr.mxu0 0.0
    %3896 = vmatpush1.msra.mxu0 0.0
    %3897 = vmatprep.subr.mxu0 0.0
    %3898 = vmatpush1.msra.mxu0 0.0
    %3899 = vmatprep.subr.mxu0 0.0
    %3900 = vmatpush1.msra.mxu0 0.0
    %3901 = vmatprep.subr.mxu0 0.0
    %3902 = vmatpush1.msra.mxu0 0.0
    %3903 = vmatprep.subr.mxu0 0.0
    %3904 = vmatpush1.msra.mxu0 0.0
    %3905 = vmatprep.subr.mxu0 0.0
    %3906 = vmatpush1.msra.mxu0 0.0
    %3907 = vmatprep.subr.mxu0 0.0
    %3908 = vmatpush1.msra.mxu0 0.0
    %3909 = vmatprep.subr.mxu0 0.0
    %3910 = vmatpush1.msra.mxu0 0.0
    %3911 = vmatprep.subr.mxu0 0.0
    %3912 = vmatpush1.msra.mxu0 0.0
    %3913 = vmatprep.subr.mxu0 0.0
    %3914 = vmatpush1.msra.mxu0 0.0
    %3915 = vmatprep.subr.mxu0 0.0
    %3916 = vmatpush1.msra.mxu0 0.0
    %3917 = vmatprep.subr.mxu0 0.0
    %3918 = vmatpush1.msra.mxu0 0.0
    %3919 = vmatprep.subr.mxu0 0.0
    %3920 = vmatpush1.msra.mxu0 0.0
    %3921 = vmatprep.subr.mxu0 0.0
    %3922 = vmatpush1.msra.mxu0 0.0
    %3923 = vmatprep.subr.mxu0 0.0
    %3924 = vmatpush1.msra.mxu0 0.0
    %3925 = vmatprep.subr.mxu0 0.0
    %3926 = vmatpush1.msra.mxu0 0.0
    %3927 = vmatprep.mubr.f32.mxu0 0.0
    %3928 = vmatmul.mubr.f32.gmra.mrb[0].mxu0 %v3858
    %v3929 = vpop.f32.mrb[0].mxu0
    %v3930 = vadd.f32 0.0, %v3929
    %v3931 = vpop.f32.mrb[0].mxu0
    %3932 = vdwg.mxu0
    %v3933 = vadd.f32 %v3747, %v3930
    %3935 = vrot.lane.b32.xlu0 %v3847, 68
    %v3936 = vpop.permute.xlu0 %3935
    %v3937 = vsel %vm195, %v3936, 0
    %3939 = vmatprep.subr.mxu0 0.0
    %3940 = vmatpush1.msra.mxu0 %v1701
    %3941 = vmatprep.subr.mxu0 0.0
    %3942 = vmatpush1.msra.mxu0 %v1702
    %3943 = vmatprep.subr.mxu0 0.0
    %3944 = vmatpush1.msra.mxu0 %v1708
    %3945 = vmatprep.subr.mxu0 0.0
    %3946 = vmatpush1.msra.mxu0 0.0
    %3947 = vmatprep.subr.mxu0 0.0
    %3948 = vmatpush1.msra.mxu0 0.0
    %3949 = vmatprep.subr.mxu0 0.0
    %3950 = vmatpush1.msra.mxu0 0.0
    %3951 = vmatprep.subr.mxu0 0.0
    %3952 = vmatpush1.msra.mxu0 0.0
    %3953 = vmatprep.subr.mxu0 0.0
    %3954 = vmatpush1.msra.mxu0 0.0
    %3955 = vmatprep.subr.mxu0 0.0
    %3956 = vmatpush1.msra.mxu0 0.0
    %3957 = vmatprep.subr.mxu0 0.0
    %3958 = vmatpush1.msra.mxu0 0.0
    %3959 = vmatprep.subr.mxu0 0.0
    %3960 = vmatpush1.msra.mxu0 0.0
    %3961 = vmatprep.subr.mxu0 0.0
    %3962 = vmatpush1.msra.mxu0 0.0
    %3963 = vmatprep.subr.mxu0 0.0
    %3964 = vmatpush1.msra.mxu0 0.0
    %3965 = vmatprep.subr.mxu0 0.0
    %3966 = vmatpush1.msra.mxu0 0.0
    %3967 = vmatprep.subr.mxu0 0.0
    %3968 = vmatpush1.msra.mxu0 0.0
    %3969 = vmatprep.subr.mxu0 0.0
    %3970 = vmatpush1.msra.mxu0 0.0
    %3971 = vmatprep.subr.mxu0 0.0
    %3972 = vmatpush1.msra.mxu0 0.0
    %3973 = vmatprep.subr.mxu0 0.0
    %3974 = vmatpush1.msra.mxu0 0.0
    %3975 = vmatprep.subr.mxu0 0.0
    %3976 = vmatpush1.msra.mxu0 0.0
    %3977 = vmatprep.subr.mxu0 0.0
    %3978 = vmatpush1.msra.mxu0 0.0
    %3979 = vmatprep.subr.mxu0 0.0
    %3980 = vmatpush1.msra.mxu0 0.0
    %3981 = vmatprep.subr.mxu0 0.0
    %3982 = vmatpush1.msra.mxu0 0.0
    %3983 = vmatprep.subr.mxu0 0.0
    %3984 = vmatpush1.msra.mxu0 0.0
    %3985 = vmatprep.subr.mxu0 0.0
    %3986 = vmatpush1.msra.mxu0 0.0
    %3987 = vmatprep.subr.mxu0 0.0
    %3988 = vmatpush1.msra.mxu0 0.0
    %3989 = vmatprep.subr.mxu0 0.0
    %3990 = vmatpush1.msra.mxu0 0.0
    %3991 = vmatprep.subr.mxu0 0.0
    %3992 = vmatpush1.msra.mxu0 0.0
    %3993 = vmatprep.subr.mxu0 0.0
    %3994 = vmatpush1.msra.mxu0 0.0
    %3995 = vmatprep.subr.mxu0 0.0
    %3996 = vmatpush1.msra.mxu0 0.0
    %3997 = vmatprep.subr.mxu0 0.0
    %3998 = vmatpush1.msra.mxu0 0.0
    %3999 = vmatprep.subr.mxu0 0.0
    %4000 = vmatpush1.msra.mxu0 0.0
    %4001 = vmatprep.subr.mxu0 0.0
    %4002 = vmatpush1.msra.mxu0 0.0
    %4003 = vmatprep.mubr.f32.mxu0 0.0
    %4004 = vmatmul.mubr.f32.gmra.mrb[0].mxu0 %v3937
    %v4005 = vpop.f32.mrb[0].mxu0
    %v4006 = vadd.f32 0.0, %v4005
    %v4007 = vpop.f32.mrb[0].mxu0
    %4008 = vdwg.mxu0
    %v4009 = vadd.f32 %v1698, %v4006
    %v4010 = vxor.u32 %v4009, 2147483648
    %v4011 = vmul.f32 %v4010, 1.442695
    %v4012 = vpow.pop %v4011
    %v4013 = vadd.f32 %v4012, 1.0
    %v4014 = vrcp.pop %v4013
    %v4015 = vmul.f32 1.0, %v4014
    %v4016 = vtanh.pop %v4009
    %v4017 = vmul.f32 %v4015, %v3841
    %4019 = vrot.lane.b32.xlu0 %v4016, 88
    %v4020 = vpop.permute.xlu0 %4019
    %v4022 = vmul.f32 %v4015, %v4020
    %4024 = vrot.lane.b32.xlu0 %v4022, 20
    %v4025 = vpop.permute.xlu0 %4024
    %v4027 = vadd.f32 %v4017, %v4025
    %v4028 = vtanh.pop %v4027
    %4030 = vrot.lane.b32.xlu0 %v4028, 40
    %v4031 = vpop.permute.xlu0 %4030
    %v4033 = vmul.f32 %v4015, %v4031
    %vm4034 = vcmp.ge.f32.partialorder %v4033, 0.0
    %v4035 = vmul.f32 %v4033, 0.01
    %v4036 = vsel %vm4034, %v4033, %v4035
    %s4037 = scalar_lea.vmem %s19, 288
    %v4038 = vld [vmem:[%s4037] sm:$0xff]
    %v4039 = vld [vmem:[%s4037 + $0x8] sm:$0xff]
    %v4040 = vld [vmem:[%s4037 + $0x10] sm:$0xf]
    %4042 = vrot.lane.b32.xlu0 %v4036, 68
    %v4043 = vpop.permute.xlu0 %4042
    %v4044 = vsel %vm195, %v4043, 0
    %v4047 = vsel %vm199, %v4040, 0
    %4049 = vmatprep.subr.mxu0 0.0
    %4050 = vmatpush1.msra.mxu0 %v4038
    %4051 = vmatprep.subr.mxu0 0.0
    %4052 = vmatpush1.msra.mxu0 %v4039
    %4053 = vmatprep.subr.mxu0 0.0
    %4054 = vmatpush1.msra.mxu0 %v4047
    %4055 = vmatprep.subr.mxu0 0.0
    %4056 = vmatpush1.msra.mxu0 0.0
    %4057 = vmatprep.subr.mxu0 0.0
    %4058 = vmatpush1.msra.mxu0 0.0
    %4059 = vmatprep.subr.mxu0 0.0
    %4060 = vmatpush1.msra.mxu0 0.0
    %4061 = vmatprep.subr.mxu0 0.0
    %4062 = vmatpush1.msra.mxu0 0.0
    %4063 = vmatprep.subr.mxu0 0.0
    %4064 = vmatpush1.msra.mxu0 0.0
    %4065 = vmatprep.subr.mxu0 0.0
    %4066 = vmatpush1.msra.mxu0 0.0
    %4067 = vmatprep.subr.mxu0 0.0
    %4068 = vmatpush1.msra.mxu0 0.0
    %4069 = vmatprep.subr.mxu0 0.0
    %4070 = vmatpush1.msra.mxu0 0.0
    %4071 = vmatprep.subr.mxu0 0.0
    %4072 = vmatpush1.msra.mxu0 0.0
    %4073 = vmatprep.subr.mxu0 0.0
    %4074 = vmatpush1.msra.mxu0 0.0
    %4075 = vmatprep.subr.mxu0 0.0
    %4076 = vmatpush1.msra.mxu0 0.0
    %4077 = vmatprep.subr.mxu0 0.0
    %4078 = vmatpush1.msra.mxu0 0.0
    %4079 = vmatprep.subr.mxu0 0.0
    %4080 = vmatpush1.msra.mxu0 0.0
    %4081 = vmatprep.subr.mxu0 0.0
    %4082 = vmatpush1.msra.mxu0 0.0
    %4083 = vmatprep.subr.mxu0 0.0
    %4084 = vmatpush1.msra.mxu0 0.0
    %4085 = vmatprep.subr.mxu0 0.0
    %4086 = vmatpush1.msra.mxu0 0.0
    %4087 = vmatprep.subr.mxu0 0.0
    %4088 = vmatpush1.msra.mxu0 0.0
    %4089 = vmatprep.subr.mxu0 0.0
    %4090 = vmatpush1.msra.mxu0 0.0
    %4091 = vmatprep.subr.mxu0 0.0
    %4092 = vmatpush1.msra.mxu0 0.0
    %4093 = vmatprep.subr.mxu0 0.0
    %4094 = vmatpush1.msra.mxu0 0.0
    %4095 = vmatprep.subr.mxu0 0.0
    %4096 = vmatpush1.msra.mxu0 0.0
    %4097 = vmatprep.subr.mxu0 0.0
    %4098 = vmatpush1.msra.mxu0 0.0
    %4099 = vmatprep.subr.mxu0 0.0
    %4100 = vmatpush1.msra.mxu0 0.0
    %4101 = vmatprep.subr.mxu0 0.0
    %4102 = vmatpush1.msra.mxu0 0.0
    %4103 = vmatprep.subr.mxu0 0.0
    %4104 = vmatpush1.msra.mxu0 0.0
    %4105 = vmatprep.subr.mxu0 0.0
    %4106 = vmatpush1.msra.mxu0 0.0
    %4107 = vmatprep.subr.mxu0 0.0
    %4108 = vmatpush1.msra.mxu0 0.0
    %4109 = vmatprep.subr.mxu0 0.0
    %4110 = vmatpush1.msra.mxu0 0.0
    %4111 = vmatprep.subr.mxu0 0.0
    %4112 = vmatpush1.msra.mxu0 0.0
    %4113 = vmatprep.mubr.f32.mxu0 0.0
    %4114 = vmatmul.mubr.f32.gmra.mrb[0].mxu0 %v4044
    %v4115 = vpop.f32.mrb[0].mxu0
    %v4116 = vadd.f32 0.0, %v4115
    %v4117 = vpop.f32.mrb[0].mxu0
    %4118 = vdwg.mxu0
    %v4119 = vadd.f32 %v3933, %v4116
    %v4120 = vld [vmem:[%s20] sm:$0x1]
    %v4122 = vlaneseq
    %v4123 = vshrl.u32 %v4122, 7
    %v4124 = vsub.s32 0, %v4123
    %v4125 = vrot.slane %v4120, %v4124
    %v4127 = vadd.f32 %v4119, %v4125
    %vm4128 = vcmask 418816
    %4129 = vst.msk [vmem:[%s21] sm:$0x3] %vm4128, %v4127
    // Predicated region
    $region86: #{ssvae_forward.1} parent=1 // pred_check
      _
    $region87: #{ssvae_forward.1} parent=1 // pred_check_branch
      %4131 = sbr.rel (0) target = $region89
    $region88: #{ssvae_forward.1} parent=1 // pred_region
      _
    $region89: #{ssvae_forward.1} parent=1 // pred_fallthru
      _
    // Predicated region
    $region90: #{ssvae_forward.1} parent=1 // pred_check
      _
    $region91: #{ssvae_forward.1} parent=1 // pred_check_branch
      %4133 = sbr.rel (0) target = $region93
    $region92: #{ssvae_forward.1} parent=1 // pred_region
      %s4135 = ssub.s32 32, 32
      %4136 = vsyncadd [#allocation3], %s4135
      %s4138 = sshll.u32 [#allocation2], 4
      %s4139 = int_to_ptr.vmem [resolvable:$true] %s4138
      %4141 = dma.vmem_to_hbm [thread:$0]  %s4139, 32, %s22, [#allocation3]
    $region93: #{ssvae_forward.1} parent=1 // pred_fallthru
      _
    // Predicated region
    $region94: #{ssvae_forward.1} parent=1 // pred_check
      _
    $region95: #{ssvae_forward.1} parent=1 // pred_check_branch
      %4143 = sbr.rel (0) target = $region97
    $region96: #{ssvae_forward.1} parent=1 // pred_region
      %s4145 = ssub.s32 32, 32
      %4146 = vsyncadd [#allocation5], %s4145
      %s4148 = sshll.u32 [#allocation4], 4
      %s4149 = int_to_ptr.vmem [resolvable:$true] %s4148
      %4151 = dma.vmem_to_hbm [thread:$0]  %s4149, 32, %s23, [#allocation5]
    $region97: #{ssvae_forward.1} parent=1 // pred_fallthru
      _
    // Predicated region
    $region98: #{ssvae_forward.1} parent=1 // pred_check
      _
    $region99: #{ssvae_forward.1} parent=1 // pred_check_branch
      %4153 = sbr.rel (0) target = $region101
    $region100: #{ssvae_forward.1} parent=1 // pred_region
      %s4155 = ssub.s32 32, 32
      %4156 = vsyncadd [#allocation5], %s4155
      %s4158 = sshll.u32 [#allocation6], 4
      %s4159 = int_to_ptr.vmem [resolvable:$true] %s4158
      %4161 = dma.vmem_to_hbm [thread:$0]  %s4159, 32, %s24, [#allocation5]
    $region101: #{ssvae_forward.1} parent=1 // pred_fallthru
      _
    // Predicated region
    $region102: #{ssvae_forward.1} parent=1 // pred_check
      _
    $region103: #{ssvae_forward.1} parent=1 // pred_check_branch
      %4163 = sbr.rel (0) target = $region105
    $region104: #{ssvae_forward.1} parent=1 // pred_region
      _
    $region105: #{ssvae_forward.1} parent=1 // pred_fallthru
      _
    // Predicated region
    $region106: #{ssvae_forward.1} parent=1 // pred_check
      _
    $region107: #{ssvae_forward.1} parent=1 // pred_check_branch
      %4165 = sbr.rel (0) target = $region109
    $region108: #{ssvae_forward.1} parent=1 // pred_region
      %4166 = dma.done [#allocation3], 32
    $region109: #{ssvae_forward.1} parent=1 // pred_fallthru
      _
    // Predicated region
    $region110: #{ssvae_forward.1} parent=1 // pred_check
      _
    $region111: #{ssvae_forward.1} parent=1 // pred_check_branch
      %4168 = sbr.rel (0) target = $region113
    $region112: #{ssvae_forward.1} parent=1 // pred_region
      %4169 = dma.done [#allocation5], 32
    $region113: #{ssvae_forward.1} parent=1 // pred_fallthru
      _
    // Predicated region
    $region114: #{ssvae_forward.1} parent=1 // pred_check
      _
    $region115: #{ssvae_forward.1} parent=1 // pred_check_branch
      %4171 = sbr.rel (0) target = $region117
    $region116: #{ssvae_forward.1} parent=1 // pred_region
      %4172 = dma.done [#allocation5], 32
    $region117: #{ssvae_forward.1} parent=1 // pred_fallthru
      _
    %4173 = vsyncpa [#allocation3], 1
    %4174 = vsyncpa [#allocation5], 1

</llo_original>
